<compile_context>
chip_gen: v7x
topology: tpu7x:2x2x1
jax: 0.10.0
libtpu: 0.0.40
codegen_flags: <defaults>
</compile_context>

<pallas_src>
import math

import jax
import jax.numpy as jnp
from jax.experimental import pallas as pl
from jax.experimental.pallas import tpu as pltpu

NEG_INF = -1e30  # additive mask value; applied in f32 (never downcast)

LAYER_KEYS = (
    "sa_in_w", "sa_in_b", "sa_out_w", "sa_out_b",
    "ca_q_w", "ca_q_b", "ca_kv_w", "ca_kv_b", "ca_out_w", "ca_out_b",
    "lin1_w", "lin1_b", "lin2_w", "lin2_b",
    "norm1_g", "norm1_b", "norm2_g", "norm2_b", "norm3_g", "norm3_b",
)


class TransformerDecoderPallas:
    def __init__(self, d_in, d_model, d_context=None, nhead=1, dim_feedforward=128,
                 num_layers=1, emb_size=16, emb_dropout=0.1, max_len=3,
                 key=jax.random.PRNGKey(0)):
        if emb_size % 2 != 0:
            raise ValueError("Embedding size must be even")
        if d_model % nhead != 0:
            raise ValueError("d_model must be divisible by nhead")
        self.d_in = d_in
        self.d_model = d_model
        self.d_context = d_context
        self.nhead = nhead
        self.dim_feedforward = dim_feedforward
        self.num_layers = num_layers
        self.emb_size = emb_size
        self.max_len = max_len
        self.params = self._init_params(key)
        self._call_cache = {}

    # ---- parameter init -----------------------------------------------------
    # Linear weights are stored pre-transposed (d_in, d_out) and in bf16 (MXU
    # operand dtype); biases / norm params / positional buffer stay f32.
    def _init_params(self, key):
        keys = iter(jax.random.split(key, 1024))

        def lin(din, dout):
            kw, kb = jax.random.split(next(keys))
            bound = 1.0 / math.sqrt(din)
            w = jax.random.uniform(kw, (din, dout), jnp.float32, -bound, bound)
            b = jax.random.uniform(kb, (1, dout), jnp.float32, -bound, bound)
            return w.astype(jnp.bfloat16), b

        D, F, E = self.d_model, self.dim_feedforward, self.emb_size
        p = {}

        # PositionalEmbedding (sin/cos) buffer, shape (max_len, emb_size).
        den = jnp.exp(-jnp.arange(0, E, 2, dtype=jnp.float32)
                      * math.log(10000.0) / E)
        pos = jnp.arange(0, self.max_len, dtype=jnp.float32).reshape(self.max_len, 1)
        pe = jnp.zeros((self.max_len, E), jnp.float32)
        pe = pe.at[:, 0::2].set(jnp.sin(pos * den))
        pe = pe.at[:, 1::2].set(jnp.cos(pos * den))
        p["pos"] = pe

        # Stem: embedding + MLP (+ context MLP), ordered (name, array) list.
        # TODO(synk): MLP class not in source; assumed Linear stack + ReLU
        #             between hidden layers, no final activation.
        stem = []
        w, b = lin(self.d_in, E)
        stem += [("emb_w", w), ("emb_b", b)]
        sizes = [E, D, 4 * D, D]
        for i in range(3):
            w, b = lin(sizes[i], sizes[i + 1])
            stem += [(f"mlp{i}_w", w), (f"mlp{i}_b", b)]
        if self.d_context is not None:
            csizes = [self.d_context, D, 4 * D, D]
            for i in range(3):
                w, b = lin(csizes[i], csizes[i + 1])
                stem += [(f"cmlp{i}_w", w), (f"cmlp{i}_b", b)]
        p["stem"] = stem

        # Decoder layers, stacked along a leading num_layers axis so the grid
        # can index layer l via BlockSpec (double-buffered weight DMA).
        per_layer = {k: [] for k in LAYER_KEYS}
        ones = jnp.ones((1, D), jnp.float32)
        zeros = jnp.zeros((1, D), jnp.float32)
        for _ in range(self.num_layers):
            sa_in_w, sa_in_b = lin(D, 3 * D)      # fused QKV for self-attention
            sa_out_w, sa_out_b = lin(D, D)
            ca_in_w, ca_in_b = lin(D, 3 * D)      # split q / kv for cross-attention
            ca_out_w, ca_out_b = lin(D, D)
            lin1_w, lin1_b = lin(D, F)
            lin2_w, lin2_b = lin(F, D)
            vals = {
                "sa_in_w": sa_in_w, "sa_in_b": sa_in_b,
                "sa_out_w": sa_out_w, "sa_out_b": sa_out_b,
                "ca_q_w": ca_in_w[:, :D], "ca_q_b": ca_in_b[:, :D],
                "ca_kv_w": ca_in_w[:, D:], "ca_kv_b": ca_in_b[:, D:],
                "ca_out_w": ca_out_w, "ca_out_b": ca_out_b,
                "lin1_w": lin1_w, "lin1_b": lin1_b,
                "lin2_w": lin2_w, "lin2_b": lin2_b,
                "norm1_g": ones, "norm1_b": zeros,
                "norm2_g": ones, "norm2_b": zeros,
                "norm3_g": ones, "norm3_b": zeros,
            }
            for k in LAYER_KEYS:
                per_layer[k].append(vals[k])
        p["layers"] = {k: jnp.stack(v, axis=0) for k, v in per_layer.items()}
        return p

    # ---- fused kernel builder ----------------------------------------------
    def _build_kernel(self, BB, T, S, has_ctx, has_tpad, has_mpad, stem_names):
        D, H = self.d_model, self.nhead
        dh = D // H
        scale = 1.0 / math.sqrt(dh)
        NT = BB * T
        n_stem = len(stem_names)
        n_layer = len(LAYER_KEYS)

        def kernel(*refs):
            idx = 0
            tgt_ref = refs[idx]; idx += 1                     # (NT, d_in)
            mem_ref = refs[idx]; idx += 1                     # (BB*S, D)
            ctx_ref = tpad_ref = mpad_ref = None
            if has_ctx:
                ctx_ref = refs[idx]; idx += 1                 # (BB, d_context)
            if has_tpad:
                tpad_ref = refs[idx]; idx += 1                # (BB, T)  f32, 1 = pad
            if has_mpad:
                mpad_ref = refs[idx]; idx += 1                # (BB, S)  f32, 1 = pad
            pos_ref = refs[idx]; idx += 1                     # (NT, E)
            sr = dict(zip(stem_names, refs[idx:idx + n_stem])); idx += n_stem
            lr = dict(zip(LAYER_KEYS, refs[idx:idx + n_layer])); idx += n_layer
            out_ref = refs[idx]; idx += 1                     # (NT, D)
            x_scr = refs[idx]                                 # VMEM (NT, D) f32

            l = pl.program_id(1)

            # ---- building blocks (weights read from Refs at point of use) ----
            def linear(x, w_ref, b_ref, relu=False):
                # bf16 MXU operands, f32 accumulation; bias add in f32.
                y = jnp.dot(x.astype(jnp.bfloat16), w_ref[...],
                            preferred_element_type=jnp.float32) + b_ref[...]
                return jnp.maximum(y, 0.0) if relu else y

            def layer_norm(x, g_ref, b_ref, eps=1e-5):
                mean = jnp.mean(x, axis=-1, keepdims=True)
                var = jnp.mean(jnp.square(x - mean), axis=-1, keepdims=True)
                return (x - mean) * jax.lax.rsqrt(var + eps) * g_ref[...] + b_ref[...]

            def mha(q2, k2, v2, bias, Tk):
                # q2: (NT, D); k2/v2: (BB*Tk, D). Heads folded into the batch of
                # ONE batched contraction (no per-head lane slices / concat).
                q = q2.reshape(BB, T, H, dh).transpose(0, 2, 1, 3)
                k = k2.reshape(BB, Tk, H, dh).transpose(0, 2, 1, 3)
                v = v2.reshape(BB, Tk, H, dh).transpose(0, 2, 1, 3)
                qf = q.reshape(BB * H, T, dh).astype(jnp.bfloat16)
                kf = k.reshape(BB * H, Tk, dh).astype(jnp.bfloat16)
                vf = v.reshape(BB * H, Tk, dh).astype(jnp.bfloat16)
                s = jnp.einsum("bqd,bkd->bqk", qf, kf,
                               preferred_element_type=jnp.float32) * scale
                s = s.reshape(BB, H, T, Tk)
                if bias is not None:
                    s = s + bias                              # mask applied in f32
                m = jnp.max(s, axis=-1, keepdims=True)
                e = jnp.exp(s - m)
                denom = jnp.sum(e, axis=-1, keepdims=True)
                pr = e * pl.reciprocal(denom, approx=True)
                pr = pr.reshape(BB * H, T, Tk).astype(jnp.bfloat16)
                o = jnp.einsum("bqk,bkd->bqd", pr, vf,
                               preferred_element_type=jnp.float32)
                o = o.reshape(BB, H, T, dh).transpose(0, 2, 1, 3)
                return o.reshape(NT, D)

            # ---- stem: embedding + pos-enc + MLP (+ context); runs once per
            #      batch block on the first layer step.  Dropout = identity.
            @pl.when(l == 0)
            def _stem():
                x = linear(tgt_ref[...], sr["emb_w"], sr["emb_b"])      # (NT, E)
                x = x + pos_ref[...]
                x = linear(x, sr["mlp0_w"], sr["mlp0_b"], relu=True)
                x = linear(x, sr["mlp1_w"], sr["mlp1_b"], relu=True)
                x = linear(x, sr["mlp2_w"], sr["mlp2_b"])               # (NT, D)
                if has_ctx:
                    c = linear(ctx_ref[...], sr["cmlp0_w"], sr["cmlp0_b"], relu=True)
                    c = linear(c, sr["cmlp1_w"], sr["cmlp1_b"], relu=True)
                    c = linear(c, sr["cmlp2_w"], sr["cmlp2_b"])         # (BB, D)
                    x = (x.reshape(BB, T, D) + c[:, None, :]).reshape(NT, D)
                x_scr[...] = x

            # ---- additive attention biases, built in-register (f32) ----
            row = jax.lax.broadcasted_iota(jnp.int32, (T, T), 0)
            col = jax.lax.broadcasted_iota(jnp.int32, (T, T), 1)
            self_bias = jnp.where(col > row, NEG_INF, 0.0).astype(jnp.float32)
            self_bias = self_bias[None, None]                           # (1,1,T,T)
            if has_tpad:
                tp = tpad_ref[...]
                self_bias = self_bias + jnp.where(
                    tp > 0.5, NEG_INF, 0.0)[:, None, None, :]           # (BB,1,1,T)
            cross_bias = None
            if has_mpad:
                mp = mpad_ref[...]
                cross_bias = jnp.where(mp > 0.5, NEG_INF, 0.0)[:, None, None, :]

            # ---- one decoder layer (post-norm, nn.TransformerDecoderLayer) ----
            x2 = x_scr[...]                                             # (NT, D) f32

            # self-attention (fused QKV projection)
            qkv = linear(x2, lr["sa_in_w"], lr["sa_in_b"])              # (NT, 3D)
            att = mha(qkv[:, 0:D], qkv[:, D:2 * D], qkv[:, 2 * D:3 * D],
                      self_bias, T)
            y = linear(att, lr["sa_out_w"], lr["sa_out_b"])
            x2 = layer_norm(x2 + y, lr["norm1_g"], lr["norm1_b"])

            # cross-attention (fused KV projection of memory)
            q = linear(x2, lr["ca_q_w"], lr["ca_q_b"])                  # (NT, D)
            kv = linear(mem_ref[...], lr["ca_kv_w"], lr["ca_kv_b"])     # (BB*S, 2D)
            att = mha(q, kv[:, 0:D], kv[:, D:2 * D], cross_bias, S)
            y = linear(att, lr["ca_out_w"], lr["ca_out_b"])
            x2 = layer_norm(x2 + y, lr["norm2_g"], lr["norm2_b"])

            # feed-forward (ReLU)
            h = linear(x2, lr["lin1_w"], lr["lin1_b"], relu=True)
            h = linear(h, lr["lin2_w"], lr["lin2_b"])
            x2 = layer_norm(x2 + h, lr["norm3_g"], lr["norm3_b"])

            x_scr[...] = x2

            @pl.when(l == pl.num_programs(1) - 1)
            def _finalize():
                out_ref[...] = x2.astype(out_ref.dtype)

        return kernel

    # ---- forward -------------------------------------------------------------
    def __call__(self, tgt, memory, context=None,
                 tgt_padding_mask=None, memory_padding_mask=None):
        B, T, _ = tgt.shape
        S = memory.shape[1]
        D = self.d_model
        if T > self.max_len:
            raise ValueError("sequence length exceeds max_len")
        has_ctx = self.d_context is not None
        if has_ctx and context is None:
            raise ValueError("context is required when d_context is set")
        has_tpad = tgt_padding_mask is not None
        has_mpad = memory_padding_mask is not None

        # Split the batch into blocks for a leading "parallel" grid axis
        # (v7x: one block per TensorCore); trivial split for odd/small B.
        n_bb = 2 if (B >= 2 and B % 2 == 0) else 1
        BB = B // n_bb
        NT, NS = BB * T, BB * S

        inputs, in_specs = [], []

        def add(arr, spec):
            inputs.append(arr)
            in_specs.append(spec)

        def batch_spec(shape):   # (n_bb, ...) -> squeeze leading dim, index by b
            nd = len(shape)
            return pl.BlockSpec((None,) + shape[1:],
                                lambda b, l, _nd=nd: (b,) + (0,) * (_nd - 1))

        def full_spec(shape):    # replicated across the whole grid
            nd = len(shape)
            return pl.BlockSpec(tuple(shape), lambda b, l, _nd=nd: (0,) * _nd)

        def layer_spec(shape):   # (num_layers, ...) -> squeeze leading, index by l
            nd = len(shape)
            return pl.BlockSpec((None,) + shape[1:],
                                lambda b, l, _nd=nd: (l,) + (0,) * (_nd - 1))

        x = jnp.asarray(tgt, jnp.float32).reshape(n_bb, NT, self.d_in)
        add(x, batch_spec(x.shape))
        m = jnp.asarray(memory, jnp.float32).reshape(n_bb, NS, D)
        add(m, batch_spec(m.shape))
        if has_ctx:
            c = jnp.asarray(context, jnp.float32).reshape(n_bb, BB, self.d_context)
            add(c, batch_spec(c.shape))
        if has_tpad:
            tp = jnp.asarray(tgt_padding_mask, jnp.float32).reshape(n_bb, BB, T)
            add(tp, batch_spec(tp.shape))
        if has_mpad:
            mp = jnp.asarray(memory_padding_mask, jnp.float32).reshape(n_bb, BB, S)
            add(mp, batch_spec(mp.shape))
        pos_t = jnp.tile(self.params["pos"][:T], (BB, 1))               # (NT, E)
        add(pos_t, full_spec(pos_t.shape))

        stem_names = []
        for name, arr in self.params["stem"]:
            stem_names.append(name)
            add(arr, full_spec(arr.shape))
        for name in LAYER_KEYS:
            arr = self.params["layers"][name]
            add(arr, layer_spec(arr.shape))

        cache_key = (B, T, S, has_ctx, has_tpad, has_mpad)
        fn = self._call_cache.get(cache_key)
        if fn is None:
            kernel = self._build_kernel(BB, T, S, has_ctx, has_tpad, has_mpad,
                                        tuple(stem_names))
            fn = pl.pallas_call(
                kernel,
                grid=(n_bb, self.num_layers),
                in_specs=in_specs,
                out_specs=pl.BlockSpec((None, NT, D), lambda b, l: (b, 0, 0)),
                out_shape=jax.ShapeDtypeStruct((n_bb, NT, D), jnp.float32),
                scratch_shapes=[pltpu.VMEM((NT, D), jnp.float32)],
                compiler_params=pltpu.CompilerParams(
                    dimension_semantics=("parallel", "arbitrary"),
                    vmem_limit_bytes=32 * 1024 * 1024),
            )
            self._call_cache[cache_key] = fn
        out = fn(*inputs)
        return out.reshape(B, T, D)


# ---- pure-JAX reference (validation only; mirrors the kernel arithmetic) ----
def reference_forward(model, tgt, memory, context=None, tpad=None, mpad=None):
    p = model.params
    D, H = model.d_model, model.nhead
    dh = D // H
    B, T, _ = tgt.shape
    S = memory.shape[1]
    sd = dict(p["stem"])

    def mm(x, w):
        return jnp.dot(x.astype(jnp.bfloat16), w, preferred_element_type=jnp.float32)

    def ln(x, g, b, eps=1e-5):
        mu = jnp.mean(x, -1, keepdims=True)
        var = jnp.mean(jnp.square(x - mu), -1, keepdims=True)
        return (x - mu) * jax.lax.rsqrt(var + eps) * g + b

    def attn(q, k, v, bias):
        Tq, Tk = q.shape[1], k.shape[1]
        qh = q.reshape(B, Tq, H, dh).transpose(0, 2, 1, 3).astype(jnp.bfloat16)
        kh = k.reshape(B, Tk, H, dh).transpose(0, 2, 1, 3).astype(jnp.bfloat16)
        vh = v.reshape(B, Tk, H, dh).transpose(0, 2, 1, 3).astype(jnp.bfloat16)
        s = jnp.einsum("bhqd,bhkd->bhqk", qh, kh,
                       preferred_element_type=jnp.float32) / math.sqrt(dh)
        if bias is not None:
            s = s + bias
        pr = jax.nn.softmax(s, axis=-1).astype(jnp.bfloat16)
        o = jnp.einsum("bhqk,bhkd->bhqd", pr, vh, preferred_element_type=jnp.float32)
        return o.transpose(0, 2, 1, 3).reshape(B, Tq, D)

    x = mm(jnp.asarray(tgt, jnp.float32).reshape(B * T, -1), sd["emb_w"]) + sd["emb_b"]
    x = x + jnp.tile(p["pos"][:T], (B, 1))
    for i in range(3):
        x = mm(x, sd[f"mlp{i}_w"]) + sd[f"mlp{i}_b"]
        if i < 2:
            x = jnp.maximum(x, 0.0)
    x = x.reshape(B, T, D)
    if context is not None:
        c = jnp.asarray(context, jnp.float32)
        for i in range(3):
            c = mm(c, sd[f"cmlp{i}_w"]) + sd[f"cmlp{i}_b"]
            if i < 2:
                c = jnp.maximum(c, 0.0)
        x = x + c[:, None, :]

    row = jnp.arange(T)[:, None]
    col = jnp.arange(T)[None, :]
    self_bias = jnp.where(col > row, NEG_INF, 0.0)[None, None]
    if tpad is not None:
        self_bias = self_bias + jnp.where(jnp.asarray(tpad, jnp.float32) > 0.5,
                                          NEG_INF, 0.0)[:, None, None, :]
    cross_bias = None
    if mpad is not None:
        cross_bias = jnp.where(jnp.asarray(mpad, jnp.float32) > 0.5,
                               NEG_INF, 0.0)[:, None, None, :]

    lp = p["layers"]
    mem2 = jnp.asarray(memory, jnp.float32).reshape(B * S, D)
    for l in range(model.num_layers):
        g = lambda name, _l=l: lp[name][_l]
        x2 = x.reshape(B * T, D)
        qkv = mm(x2, g("sa_in_w")) + g("sa_in_b")
        att = attn(qkv[:, :D].reshape(B, T, D), qkv[:, D:2 * D].reshape(B, T, D),
                   qkv[:, 2 * D:].reshape(B, T, D), self_bias)
        y = mm(att.reshape(B * T, D), g("sa_out_w")) + g("sa_out_b")
        x2 = ln(x2 + y, g("norm1_g"), g("norm1_b"))

        q = mm(x2, g("ca_q_w")) + g("ca_q_b")
        kv = mm(mem2, g("ca_kv_w")) + g("ca_kv_b")
        att = attn(q.reshape(B, T, D), kv[:, :D].reshape(B, S, D),
                   kv[:, D:].reshape(B, S, D), cross_bias)
        y = mm(att.reshape(B * T, D), g("ca_out_w")) + g("ca_out_b")
        x2 = ln(x2 + y, g("norm2_g"), g("norm2_b"))

        h = jnp.maximum(mm(x2, g("lin1_w")) + g("lin1_b"), 0.0)
        h = mm(h, g("lin2_w")) + g("lin2_b")
        x2 = ln(x2 + h, g("norm3_g"), g("norm3_b"))
        x = x2.reshape(B, T, D)
    return x


# ------------------------------------------------------------------------------
if __name__ == "__main__":
    key = jax.random.PRNGKey(0)
    k_params, k_tgt, k_mem, k_ctx = jax.random.split(key, 4)

    # Small config consistent with the module defaults (max_len=3 => T<=3)
    d_in, d_model, d_context = 4, 32, 6
    nhead, dim_ff, num_layers = 2, 64, 2
    emb_size, max_len = 16, 3
    B, T, S = 2, 3, 5

    model = TransformerDecoderPallas(
        d_in=d_in, d_model=d_model, d_context=d_context, nhead=nhead,
        dim_feedforward=dim_ff, num_layers=num_layers, emb_size=emb_size,
        max_len=max_len, key=k_params)

    tgt = jax.random.normal(k_tgt, (B, T, d_in), jnp.float32)
    memory = jax.random.normal(k_mem, (B, S, d_model), jnp.float32)
    context = jax.random.normal(k_ctx, (B, d_context), jnp.float32)

    tgt_pad = jnp.array([[False, False, True], [False, False, False]])
    mem_pad = jnp.array([[False, False, False, False, True],
                         [False, False, False, False, False]])

    # 1) no padding masks
    out = jax.block_until_ready(model(tgt, memory, context))
    assert out.shape == (B, T, d_model), out.shape
    assert bool(jnp.all(jnp.isfinite(out)))
    ref = jax.block_until_ready(reference_forward(model, tgt, memory, context))
    assert bool(jnp.allclose(out, ref, atol=5e-2, rtol=5e-2)), \
        float(jnp.max(jnp.abs(out - ref)))

    # 2) with target / memory key-padding masks (True == padded)
    out2 = jax.block_until_ready(model(tgt, memory, context,
                                       tgt_padding_mask=tgt_pad,
                                       memory_padding_mask=mem_pad))
    assert out2.shape == (B, T, d_model), out2.shape
    assert bool(jnp.all(jnp.isfinite(out2)))
    ref2 = jax.block_until_ready(reference_forward(model, tgt, memory, context,
                                                   tgt_pad, mem_pad))
    assert bool(jnp.allclose(out2, ref2, atol=5e-2, rtol=5e-2)), \
        float(jnp.max(jnp.abs(out2 - ref2)))

    print("KERNEL_OK")
</pallas_src>

<mosaic_0001>
module attributes {stable_mosaic.version = 11 : i64} {
  func.func @kernel(%arg0: i32, %arg1: i32, %arg2: memref<1x3x4xf32, #tpu.memory_space<vmem>>, %arg3: memref<1x5x32xf32, #tpu.memory_space<vmem>>, %arg4: memref<1x1x6xf32, #tpu.memory_space<vmem>>, %arg5: memref<3x16xf32, #tpu.memory_space<vmem>>, %arg6: memref<4x16xbf16, #tpu.memory_space<vmem>>, %arg7: memref<1x16xf32, #tpu.memory_space<vmem>>, %arg8: memref<16x32xbf16, #tpu.memory_space<vmem>>, %arg9: memref<1x32xf32, #tpu.memory_space<vmem>>, %arg10: memref<32x128xbf16, #tpu.memory_space<vmem>>, %arg11: memref<1x128xf32, #tpu.memory_space<vmem>>, %arg12: memref<128x32xbf16, #tpu.memory_space<vmem>>, %arg13: memref<1x32xf32, #tpu.memory_space<vmem>>, %arg14: memref<6x32xbf16, #tpu.memory_space<vmem>>, %arg15: memref<1x32xf32, #tpu.memory_space<vmem>>, %arg16: memref<32x128xbf16, #tpu.memory_space<vmem>>, %arg17: memref<1x128xf32, #tpu.memory_space<vmem>>, %arg18: memref<128x32xbf16, #tpu.memory_space<vmem>>, %arg19: memref<1x32xf32, #tpu.memory_space<vmem>>, %arg20: memref<1x32x96xbf16, #tpu.memory_space<vmem>>, %arg21: memref<1x1x96xf32, #tpu.memory_space<vmem>>, %arg22: memref<1x32x32xbf16, #tpu.memory_space<vmem>>, %arg23: memref<1x1x32xf32, #tpu.memory_space<vmem>>, %arg24: memref<1x32x32xbf16, #tpu.memory_space<vmem>>, %arg25: memref<1x1x32xf32, #tpu.memory_space<vmem>>, %arg26: memref<1x32x64xbf16, #tpu.memory_space<vmem>>, %arg27: memref<1x1x64xf32, #tpu.memory_space<vmem>>, %arg28: memref<1x32x32xbf16, #tpu.memory_space<vmem>>, %arg29: memref<1x1x32xf32, #tpu.memory_space<vmem>>, %arg30: memref<1x32x64xbf16, #tpu.memory_space<vmem>>, %arg31: memref<1x1x64xf32, #tpu.memory_space<vmem>>, %arg32: memref<1x64x32xbf16, #tpu.memory_space<vmem>>, %arg33: memref<1x1x32xf32, #tpu.memory_space<vmem>>, %arg34: memref<1x1x32xf32, #tpu.memory_space<vmem>>, %arg35: memref<1x1x32xf32, #tpu.memory_space<vmem>>, %arg36: memref<1x1x32xf32, #tpu.memory_space<vmem>>, %arg37: memref<1x1x32xf32, #tpu.memory_space<vmem>>, %arg38: memref<1x1x32xf32, #tpu.memory_space<vmem>>, %arg39: memref<1x1x32xf32, #tpu.memory_space<vmem>>, %arg40: memref<1x3x32xf32, #tpu.memory_space<vmem>>, %arg41: memref<3x32xf32, #tpu.memory_space<vmem>>) attributes {dimension_semantics = [#tpu.dimension_semantics<parallel>, #tpu.dimension_semantics<arbitrary>], iteration_bounds = array<i64: 2, 2>, scalar_prefetch = 0 : i64, scratch_operands = 1 : i64, tpu.core_type = #tpu.core_type<tc>, window_params = [{transform_indices = @transform_0, window_bounds = array<i64: 1, 3, 4>}, {transform_indices = @transform_1, window_bounds = array<i64: 1, 5, 32>}, {transform_indices = @transform_2, window_bounds = array<i64: 1, 1, 6>}, {pipeline_mode = #tpu.pipeline_mode<synchronous>, transform_indices = @transform_3, window_bounds = array<i64: 3, 16>}, {pipeline_mode = #tpu.pipeline_mode<synchronous>, transform_indices = @transform_4, window_bounds = array<i64: 4, 16>}, {pipeline_mode = #tpu.pipeline_mode<synchronous>, transform_indices = @transform_5, window_bounds = array<i64: 1, 16>}, {pipeline_mode = #tpu.pipeline_mode<synchronous>, transform_indices = @transform_6, window_bounds = array<i64: 16, 32>}, {pipeline_mode = #tpu.pipeline_mode<synchronous>, transform_indices = @transform_7, window_bounds = array<i64: 1, 32>}, {pipeline_mode = #tpu.pipeline_mode<synchronous>, transform_indices = @transform_8, window_bounds = array<i64: 32, 128>}, {pipeline_mode = #tpu.pipeline_mode<synchronous>, transform_indices = @transform_9, window_bounds = array<i64: 1, 128>}, {pipeline_mode = #tpu.pipeline_mode<synchronous>, transform_indices = @transform_10, window_bounds = array<i64: 128, 32>}, {pipeline_mode = #tpu.pipeline_mode<synchronous>, transform_indices = @transform_11, window_bounds = array<i64: 1, 32>}, {pipeline_mode = #tpu.pipeline_mode<synchronous>, transform_indices = @transform_12, window_bounds = array<i64: 6, 32>}, {pipeline_mode = #tpu.pipeline_mode<synchronous>, transform_indices = @transform_13, window_bounds = array<i64: 1, 32>}, {pipeline_mode = #tpu.pipeline_mode<synchronous>, transform_indices = @transform_14, window_bounds = array<i64: 32, 128>}, {pipeline_mode = #tpu.pipeline_mode<synchronous>, transform_indices = @transform_15, window_bounds = array<i64: 1, 128>}, {pipeline_mode = #tpu.pipeline_mode<synchronous>, transform_indices = @transform_16, window_bounds = array<i64: 128, 32>}, {pipeline_mode = #tpu.pipeline_mode<synchronous>, transform_indices = @transform_17, window_bounds = array<i64: 1, 32>}, {transform_indices = @transform_18, window_bounds = array<i64: 1, 32, 96>}, {transform_indices = @transform_19, window_bounds = array<i64: 1, 1, 96>}, {transform_indices = @transform_20, window_bounds = array<i64: 1, 32, 32>}, {transform_indices = @transform_21, window_bounds = array<i64: 1, 1, 32>}, {transform_indices = @transform_22, window_bounds = array<i64: 1, 32, 32>}, {transform_indices = @transform_23, window_bounds = array<i64: 1, 1, 32>}, {transform_indices = @transform_24, window_bounds = array<i64: 1, 32, 64>}, {transform_indices = @transform_25, window_bounds = array<i64: 1, 1, 64>}, {transform_indices = @transform_26, window_bounds = array<i64: 1, 32, 32>}, {transform_indices = @transform_27, window_bounds = array<i64: 1, 1, 32>}, {transform_indices = @transform_28, window_bounds = array<i64: 1, 32, 64>}, {transform_indices = @transform_29, window_bounds = array<i64: 1, 1, 64>}, {transform_indices = @transform_30, window_bounds = array<i64: 1, 64, 32>}, {transform_indices = @transform_31, window_bounds = array<i64: 1, 1, 32>}, {transform_indices = @transform_32, window_bounds = array<i64: 1, 1, 32>}, {transform_indices = @transform_33, window_bounds = array<i64: 1, 1, 32>}, {transform_indices = @transform_34, window_bounds = array<i64: 1, 1, 32>}, {transform_indices = @transform_35, window_bounds = array<i64: 1, 1, 32>}, {transform_indices = @transform_36, window_bounds = array<i64: 1, 1, 32>}, {transform_indices = @transform_37, window_bounds = array<i64: 1, 1, 32>}, {transform_indices = @transform_38, window_bounds = array<i64: 1, 3, 32>}]} {
    %c0_i32 = arith.constant 0 : i32
    %0 = arith.cmpi eq, %arg1, %c0_i32 : i32
    %1 = arith.extui %0 : i1 to i32
    %c0_i32_0 = arith.constant 0 : i32
    %2 = arith.cmpi ne, %1, %c0_i32_0 : i32
    scf.if %2 {
      %c0_102 = arith.constant 0 : index
      %c0_103 = arith.constant 0 : index
      %c0_104 = arith.constant 0 : index
      %227 = vector.load %arg2[%c0_102, %c0_103, %c0_104] : memref<1x3x4xf32, #tpu.memory_space<vmem>>, vector<1x3x4xf32>
      %228 = vector.shape_cast %227 : vector<1x3x4xf32> to vector<3x4xf32>
      %229 = arith.truncf %228 : vector<3x4xf32> to vector<3x4xbf16>
      %c0_105 = arith.constant 0 : index
      %c0_106 = arith.constant 0 : index
      %230 = vector.load %arg6[%c0_105, %c0_106] : memref<4x16xbf16, #tpu.memory_space<vmem>>, vector<4x16xbf16>
      %cst_107 = arith.constant dense<0.000000e+00> : vector<3x16xf32>
      %231 = tpu.matmul %229, %230, %cst_107 {dimension_numbers = #tpu.dot_dimension_numbers<[1], [0], [0], [1], [0, 0, 1, 1], [], []>} : vector<3x4xbf16>, vector<4x16xbf16>, vector<3x16xf32> -> vector<3x16xf32>
      %c0_108 = arith.constant 0 : index
      %c0_109 = arith.constant 0 : index
      %232 = vector.load %arg7[%c0_108, %c0_109] : memref<1x16xf32, #tpu.memory_space<vmem>>, vector<1x16xf32>
      %233 = vector.broadcast %232 : vector<1x16xf32> to vector<3x16xf32>
      %234 = arith.addf %231, %233 : vector<3x16xf32>
      %c0_110 = arith.constant 0 : index
      %c0_111 = arith.constant 0 : index
      %235 = vector.load %arg5[%c0_110, %c0_111] : memref<3x16xf32, #tpu.memory_space<vmem>>, vector<3x16xf32>
      %236 = arith.addf %234, %235 : vector<3x16xf32>
      %237 = arith.truncf %236 : vector<3x16xf32> to vector<3x16xbf16>
      %c0_112 = arith.constant 0 : index
      %c0_113 = arith.constant 0 : index
      %238 = vector.load %arg8[%c0_112, %c0_113] : memref<16x32xbf16, #tpu.memory_space<vmem>>, vector<16x32xbf16>
      %cst_114 = arith.constant dense<0.000000e+00> : vector<3x32xf32>
      %239 = tpu.matmul %237, %238, %cst_114 {dimension_numbers = #tpu.dot_dimension_numbers<[1], [0], [0], [1], [0, 0, 1, 1], [], []>} : vector<3x16xbf16>, vector<16x32xbf16>, vector<3x32xf32> -> vector<3x32xf32>
      %c0_115 = arith.constant 0 : index
      %c0_116 = arith.constant 0 : index
      %240 = vector.load %arg9[%c0_115, %c0_116] : memref<1x32xf32, #tpu.memory_space<vmem>>, vector<1x32xf32>
      %241 = vector.broadcast %240 : vector<1x32xf32> to vector<3x32xf32>
      %242 = arith.addf %239, %241 : vector<3x32xf32>
      %cst_117 = arith.constant 0.000000e+00 : f32
      %243 = vector.broadcast %cst_117 : f32 to vector<3x32xf32>
      %244 = arith.maximumf %242, %243 : vector<3x32xf32>
      %245 = arith.truncf %244 : vector<3x32xf32> to vector<3x32xbf16>
      %c0_118 = arith.constant 0 : index
      %c0_119 = arith.constant 0 : index
      %246 = vector.load %arg10[%c0_118, %c0_119] : memref<32x128xbf16, #tpu.memory_space<vmem>>, vector<32x128xbf16>
      %cst_120 = arith.constant dense<0.000000e+00> : vector<3x128xf32>
      %247 = tpu.matmul %245, %246, %cst_120 {dimension_numbers = #tpu.dot_dimension_numbers<[1], [0], [0], [1], [0, 0, 1, 1], [], []>} : vector<3x32xbf16>, vector<32x128xbf16>, vector<3x128xf32> -> vector<3x128xf32>
      %c0_121 = arith.constant 0 : index
      %c0_122 = arith.constant 0 : index
      %248 = vector.load %arg11[%c0_121, %c0_122] : memref<1x128xf32, #tpu.memory_space<vmem>>, vector<1x128xf32>
      %249 = vector.broadcast %248 : vector<1x128xf32> to vector<3x128xf32>
      %250 = arith.addf %247, %249 : vector<3x128xf32>
      %cst_123 = arith.constant 0.000000e+00 : f32
      %251 = vector.broadcast %cst_123 : f32 to vector<3x128xf32>
      %252 = arith.maximumf %250, %251 : vector<3x128xf32>
      %253 = arith.truncf %252 : vector<3x128xf32> to vector<3x128xbf16>
      %c0_124 = arith.constant 0 : index
      %c0_125 = arith.constant 0 : index
      %254 = vector.load %arg12[%c0_124, %c0_125] : memref<128x32xbf16, #tpu.memory_space<vmem>>, vector<128x32xbf16>
      %cst_126 = arith.constant dense<0.000000e+00> : vector<3x32xf32>
      %255 = tpu.matmul %253, %254, %cst_126 {dimension_numbers = #tpu.dot_dimension_numbers<[1], [0], [0], [1], [0, 0, 1, 1], [], []>} : vector<3x128xbf16>, vector<128x32xbf16>, vector<3x32xf32> -> vector<3x32xf32>
      %c0_127 = arith.constant 0 : index
      %c0_128 = arith.constant 0 : index
      %256 = vector.load %arg13[%c0_127, %c0_128] : memref<1x32xf32, #tpu.memory_space<vmem>>, vector<1x32xf32>
      %257 = vector.broadcast %256 : vector<1x32xf32> to vector<3x32xf32>
      %258 = arith.addf %255, %257 : vector<3x32xf32>
      %c0_129 = arith.constant 0 : index
      %c0_130 = arith.constant 0 : index
      %c0_131 = arith.constant 0 : index
      %259 = vector.load %arg4[%c0_129, %c0_130, %c0_131] : memref<1x1x6xf32, #tpu.memory_space<vmem>>, vector<1x1x6xf32>
      %260 = vector.shape_cast %259 : vector<1x1x6xf32> to vector<1x6xf32>
      %261 = arith.truncf %260 : vector<1x6xf32> to vector<1x6xbf16>
      %c0_132 = arith.constant 0 : index
      %c0_133 = arith.constant 0 : index
      %262 = vector.load %arg14[%c0_132, %c0_133] : memref<6x32xbf16, #tpu.memory_space<vmem>>, vector<6x32xbf16>
      %cst_134 = arith.constant dense<0.000000e+00> : vector<1x32xf32>
      %263 = tpu.matmul %261, %262, %cst_134 {dimension_numbers = #tpu.dot_dimension_numbers<[1], [0], [0], [1], [0, 0, 1, 1], [], []>} : vector<1x6xbf16>, vector<6x32xbf16>, vector<1x32xf32> -> vector<1x32xf32>
      %c0_135 = arith.constant 0 : index
      %c0_136 = arith.constant 0 : index
      %264 = vector.load %arg15[%c0_135, %c0_136] : memref<1x32xf32, #tpu.memory_space<vmem>>, vector<1x32xf32>
      %265 = arith.addf %263, %264 : vector<1x32xf32>
      %cst_137 = arith.constant 0.000000e+00 : f32
      %266 = vector.broadcast %cst_137 : f32 to vector<1x32xf32>
      %267 = arith.maximumf %265, %266 : vector<1x32xf32>
      %268 = arith.truncf %267 : vector<1x32xf32> to vector<1x32xbf16>
      %c0_138 = arith.constant 0 : index
      %c0_139 = arith.constant 0 : index
      %269 = vector.load %arg16[%c0_138, %c0_139] : memref<32x128xbf16, #tpu.memory_space<vmem>>, vector<32x128xbf16>
      %cst_140 = arith.constant dense<0.000000e+00> : vector<1x128xf32>
      %270 = tpu.matmul %268, %269, %cst_140 {dimension_numbers = #tpu.dot_dimension_numbers<[1], [0], [0], [1], [0, 0, 1, 1], [], []>} : vector<1x32xbf16>, vector<32x128xbf16>, vector<1x128xf32> -> vector<1x128xf32>
      %c0_141 = arith.constant 0 : index
      %c0_142 = arith.constant 0 : index
      %271 = vector.load %arg17[%c0_141, %c0_142] : memref<1x128xf32, #tpu.memory_space<vmem>>, vector<1x128xf32>
      %272 = arith.addf %270, %271 : vector<1x128xf32>
      %cst_143 = arith.constant 0.000000e+00 : f32
      %273 = vector.broadcast %cst_143 : f32 to vector<1x128xf32>
      %274 = arith.maximumf %272, %273 : vector<1x128xf32>
      %275 = arith.truncf %274 : vector<1x128xf32> to vector<1x128xbf16>
      %c0_144 = arith.constant 0 : index
      %c0_145 = arith.constant 0 : index
      %276 = vector.load %arg18[%c0_144, %c0_145] : memref<128x32xbf16, #tpu.memory_space<vmem>>, vector<128x32xbf16>
      %cst_146 = arith.constant dense<0.000000e+00> : vector<1x32xf32>
      %277 = tpu.matmul %275, %276, %cst_146 {dimension_numbers = #tpu.dot_dimension_numbers<[1], [0], [0], [1], [0, 0, 1, 1], [], []>} : vector<1x128xbf16>, vector<128x32xbf16>, vector<1x32xf32> -> vector<1x32xf32>
      %c0_147 = arith.constant 0 : index
      %c0_148 = arith.constant 0 : index
      %278 = vector.load %arg19[%c0_147, %c0_148] : memref<1x32xf32, #tpu.memory_space<vmem>>, vector<1x32xf32>
      %279 = arith.addf %277, %278 : vector<1x32xf32>
      %280 = vector.shape_cast %258 : vector<3x32xf32> to vector<1x3x32xf32>
      %281 = vector.shape_cast %279 : vector<1x32xf32> to vector<1x1x32xf32>
      %282 = vector.broadcast %281 : vector<1x1x32xf32> to vector<1x3x32xf32>
      %283 = arith.addf %280, %282 : vector<1x3x32xf32>
      %284 = vector.shape_cast %283 : vector<1x3x32xf32> to vector<3x32xf32>
      %c0_149 = arith.constant 0 : index
      %c0_150 = arith.constant 0 : index
      %285 = vector.load %arg41[%c0_149, %c0_150] : memref<3x32xf32, #tpu.memory_space<vmem>>, vector<3x32xf32>
      tpu.vector_store %arg41[%c0_149, %c0_150], %284 {strides = array<i32>} : memref<3x32xf32, #tpu.memory_space<vmem>>, vector<3x32xf32>,
    } else {
    }
    %3 = tpu.iota {dimensions = array<i32: 0>} : vector<3x3xi32>
    %4 = tpu.iota {dimensions = array<i32: 1>} : vector<3x3xi32>
    %5 = arith.cmpi sgt, %4, %3 : vector<3x3xi32>
    %cst = arith.constant -1.000000e+30 : f32
    %cst_1 = arith.constant 0.000000e+00 : f32
    %6 = vector.broadcast %cst : f32 to vector<3x3xf32>
    %7 = vector.broadcast %cst_1 : f32 to vector<3x3xf32>
    %8 = arith.select %5, %6, %7 : vector<3x3xi1>, vector<3x3xf32>
    %9 = vector.shape_cast %8 : vector<3x3xf32> to vector<1x1x3x3xf32>
    %c0 = arith.constant 0 : index
    %c0_2 = arith.constant 0 : index
    %10 = vector.load %arg41[%c0, %c0_2] : memref<3x32xf32, #tpu.memory_space<vmem>>, vector<3x32xf32>
    %11 = arith.truncf %10 : vector<3x32xf32> to vector<3x32xbf16>
    %c0_3 = arith.constant 0 : index
    %c0_4 = arith.constant 0 : index
    %c0_5 = arith.constant 0 : index
    %12 = vector.load %arg20[%c0_3, %c0_4, %c0_5] : memref<1x32x96xbf16, #tpu.memory_space<vmem>>, vector<1x32x96xbf16>
    %13 = vector.shape_cast %12 : vector<1x32x96xbf16> to vector<32x96xbf16>
    %cst_6 = arith.constant dense<0.000000e+00> : vector<3x96xf32>
    %14 = tpu.matmul %11, %13, %cst_6 {dimension_numbers = #tpu.dot_dimension_numbers<[1], [0], [0], [1], [0, 0, 1, 1], [], []>} : vector<3x32xbf16>, vector<32x96xbf16>, vector<3x96xf32> -> vector<3x96xf32>
    %c0_7 = arith.constant 0 : index
    %c0_8 = arith.constant 0 : index
    %c0_9 = arith.constant 0 : index
    %15 = vector.load %arg21[%c0_7, %c0_8, %c0_9] : memref<1x1x96xf32, #tpu.memory_space<vmem>>, vector<1x1x96xf32>
    %16 = vector.shape_cast %15 : vector<1x1x96xf32> to vector<1x96xf32>
    %17 = vector.broadcast %16 : vector<1x96xf32> to vector<3x96xf32>
    %18 = arith.addf %14, %17 : vector<3x96xf32>
    %19 = vector.extract_strided_slice %18 {offsets = [0, 0], sizes = [3, 32], strides = [1, 1]} : vector<3x96xf32> to vector<3x32xf32>
    %20 = vector.extract_strided_slice %18 {offsets = [0, 32], sizes = [3, 32], strides = [1, 1]} : vector<3x96xf32> to vector<3x32xf32>
    %21 = vector.extract_strided_slice %18 {offsets = [0, 64], sizes = [3, 32], strides = [1, 1]} : vector<3x96xf32> to vector<3x32xf32>
    %22 = vector.shape_cast %19 : vector<3x32xf32> to vector<1x3x2x16xf32>
    %23 = tpu.transpose %22, [0, 2, 1, 3] : vector<1x3x2x16xf32> -> vector<1x2x3x16xf32>
    %24 = vector.shape_cast %20 : vector<3x32xf32> to vector<1x3x2x16xf32>
    %25 = tpu.transpose %24, [0, 2, 1, 3] : vector<1x3x2x16xf32> -> vector<1x2x3x16xf32>
    %26 = vector.shape_cast %21 : vector<3x32xf32> to vector<1x3x2x16xf32>
    %27 = tpu.transpose %26, [0, 2, 1, 3] : vector<1x3x2x16xf32> -> vector<1x2x3x16xf32>
    %28 = vector.shape_cast %23 : vector<1x2x3x16xf32> to vector<2x3x16xf32>
    %29 = arith.truncf %28 : vector<2x3x16xf32> to vector<2x3x16xbf16>
    %30 = vector.shape_cast %25 : vector<1x2x3x16xf32> to vector<2x3x16xf32>
    %31 = arith.truncf %30 : vector<2x3x16xf32> to vector<2x3x16xbf16>
    %32 = vector.shape_cast %27 : vector<1x2x3x16xf32> to vector<2x3x16xf32>
    %33 = arith.truncf %32 : vector<2x3x16xf32> to vector<2x3x16xbf16>
    "tpu.trace_start"() <{level = 10 : i32, message = "bqd,bkd->bqk"}> : () -> ()
    %cst_10 = arith.constant dense<0.000000e+00> : vector<2x3x3xf32>
    %34 = tpu.matmul %29, %31, %cst_10 {dimension_numbers = #tpu.dot_dimension_numbers<[2], [2], [1], [1], [0, 0, 0, 1, 1, 1], [0], [0]>} : vector<2x3x16xbf16>, vector<2x3x16xbf16>, vector<2x3x3xf32> -> vector<2x3x3xf32>
    "tpu.trace_stop"() : () -> ()
    %cst_11 = arith.constant 2.500000e-01 : f32
    %35 = vector.broadcast %cst_11 : f32 to vector<2x3x3xf32>
    %36 = arith.mulf %34, %35 : vector<2x3x3xf32>
    %37 = vector.shape_cast %36 : vector<2x3x3xf32> to vector<1x2x3x3xf32>
    %38 = vector.broadcast %9 : vector<1x1x3x3xf32> to vector<1x2x3x3xf32>
    %39 = arith.addf %37, %38 : vector<1x2x3x3xf32>
    %cst_12 = arith.constant dense<0xFF800000> : vector<1x2x3xf32>
    %40 = vector.multi_reduction <maximumf>, %39, %cst_12 [3] : vector<1x2x3x3xf32> to vector<1x2x3xf32>
    %41 = vector.shape_cast %40 : vector<1x2x3xf32> to vector<1x2x3x1xf32>
    %42 = vector.broadcast %41 : vector<1x2x3x1xf32> to vector<1x2x3x3xf32>
    %43 = arith.subf %39, %42 : vector<1x2x3x3xf32>
    %44 = math.exp %43 : vector<1x2x3x3xf32>
    %cst_13 = arith.constant dense<0.000000e+00> : vector<1x2x3xf32>
    %45 = vector.multi_reduction <add>, %44, %cst_13 [3] : vector<1x2x3x3xf32> to vector<1x2x3xf32>
    %46 = vector.shape_cast %45 : vector<1x2x3xf32> to vector<1x2x3x1xf32>
    %47 = tpu.reciprocal %46 {approx = true} : vector<1x2x3x1xf32> -> vector<1x2x3x1xf32>
    %48 = vector.broadcast %47 : vector<1x2x3x1xf32> to vector<1x2x3x3xf32>
    %49 = arith.mulf %44, %48 : vector<1x2x3x3xf32>
    %50 = vector.shape_cast %49 : vector<1x2x3x3xf32> to vector<2x3x3xf32>
    %51 = arith.truncf %50 : vector<2x3x3xf32> to vector<2x3x3xbf16>
    "tpu.trace_start"() <{level = 10 : i32, message = "bqk,bkd->bqd"}> : () -> ()
    %cst_14 = arith.constant dense<0.000000e+00> : vector<2x3x16xf32>
    %52 = tpu.matmul %51, %33, %cst_14 {dimension_numbers = #tpu.dot_dimension_numbers<[2], [1], [1], [2], [0, 0, 0, 1, 1, 2], [0], [0]>} : vector<2x3x3xbf16>, vector<2x3x16xbf16>, vector<2x3x16xf32> -> vector<2x3x16xf32>
    "tpu.trace_stop"() : () -> ()
    %53 = vector.shape_cast %52 : vector<2x3x16xf32> to vector<1x2x3x16xf32>
    %54 = tpu.transpose %53, [0, 2, 1, 3] : vector<1x2x3x16xf32> -> vector<1x3x2x16xf32>
    %55 = vector.shape_cast %54 : vector<1x3x2x16xf32> to vector<3x32xf32>
    %56 = arith.truncf %55 : vector<3x32xf32> to vector<3x32xbf16>
    %c0_15 = arith.constant 0 : index
    %c0_16 = arith.constant 0 : index
    %c0_17 = arith.constant 0 : index
    %57 = vector.load %arg22[%c0_15, %c0_16, %c0_17] : memref<1x32x32xbf16, #tpu.memory_space<vmem>>, vector<1x32x32xbf16>
    %58 = vector.shape_cast %57 : vector<1x32x32xbf16> to vector<32x32xbf16>
    %cst_18 = arith.constant dense<0.000000e+00> : vector<3x32xf32>
    %59 = tpu.matmul %56, %58, %cst_18 {dimension_numbers = #tpu.dot_dimension_numbers<[1], [0], [0], [1], [0, 0, 1, 1], [], []>} : vector<3x32xbf16>, vector<32x32xbf16>, vector<3x32xf32> -> vector<3x32xf32>
    %c0_19 = arith.constant 0 : index
    %c0_20 = arith.constant 0 : index
    %c0_21 = arith.constant 0 : index
    %60 = vector.load %arg23[%c0_19, %c0_20, %c0_21] : memref<1x1x32xf32, #tpu.memory_space<vmem>>, vector<1x1x32xf32>
    %61 = vector.shape_cast %60 : vector<1x1x32xf32> to vector<1x32xf32>
    %62 = vector.broadcast %61 : vector<1x32xf32> to vector<3x32xf32>
    %63 = arith.addf %59, %62 : vector<3x32xf32>
    %64 = arith.addf %10, %63 : vector<3x32xf32>
    %cst_22 = arith.constant dense<0.000000e+00> : vector<3xf32>
    %65 = vector.multi_reduction <add>, %64, %cst_22 [1] : vector<3x32xf32> to vector<3xf32>
    %66 = vector.shape_cast %65 : vector<3xf32> to vector<3x1xf32>
    %cst_23 = arith.constant 3.200000e+01 : f32
    %67 = vector.broadcast %cst_23 : f32 to vector<3x1xf32>
    %68 = arith.divf %66, %67 : vector<3x1xf32>
    %69 = vector.broadcast %68 : vector<3x1xf32> to vector<3x32xf32>
    %70 = arith.subf %64, %69 : vector<3x32xf32>
    %71 = arith.mulf %70, %70 : vector<3x32xf32>
    %cst_24 = arith.constant dense<0.000000e+00> : vector<3xf32>
    %72 = vector.multi_reduction <add>, %71, %cst_24 [1] : vector<3x32xf32> to vector<3xf32>
    %73 = vector.shape_cast %72 : vector<3xf32> to vector<3x1xf32>
    %cst_25 = arith.constant 3.200000e+01 : f32
    %74 = vector.broadcast %cst_25 : f32 to vector<3x1xf32>
    %75 = arith.divf %73, %74 : vector<3x1xf32>
    %76 = vector.broadcast %68 : vector<3x1xf32> to vector<3x32xf32>
    %77 = arith.subf %64, %76 : vector<3x32xf32>
    %cst_26 = arith.constant 9.99999974E-6 : f32
    %78 = vector.broadcast %cst_26 : f32 to vector<3x1xf32>
    %79 = arith.addf %75, %78 : vector<3x1xf32>
    %80 = math.rsqrt %79 : vector<3x1xf32>
    %81 = vector.broadcast %80 : vector<3x1xf32> to vector<3x32xf32>
    %82 = arith.mulf %77, %81 : vector<3x32xf32>
    %c0_27 = arith.constant 0 : index
    %c0_28 = arith.constant 0 : index
    %c0_29 = arith.constant 0 : index
    %83 = vector.load %arg34[%c0_27, %c0_28, %c0_29] : memref<1x1x32xf32, #tpu.memory_space<vmem>>, vector<1x1x32xf32>
    %84 = vector.shape_cast %83 : vector<1x1x32xf32> to vector<1x32xf32>
    %85 = vector.broadcast %84 : vector<1x32xf32> to vector<3x32xf32>
    %86 = arith.mulf %82, %85 : vector<3x32xf32>
    %c0_30 = arith.constant 0 : index
    %c0_31 = arith.constant 0 : index
    %c0_32 = arith.constant 0 : index
    %87 = vector.load %arg35[%c0_30, %c0_31, %c0_32] : memref<1x1x32xf32, #tpu.memory_space<vmem>>, vector<1x1x32xf32>
    %88 = vector.shape_cast %87 : vector<1x1x32xf32> to vector<1x32xf32>
    %89 = vector.broadcast %88 : vector<1x32xf32> to vector<3x32xf32>
    %90 = arith.addf %86, %89 : vector<3x32xf32>
    %91 = arith.truncf %90 : vector<3x32xf32> to vector<3x32xbf16>
    %c0_33 = arith.constant 0 : index
    %c0_34 = arith.constant 0 : index
    %c0_35 = arith.constant 0 : index
    %92 = vector.load %arg24[%c0_33, %c0_34, %c0_35] : memref<1x32x32xbf16, #tpu.memory_space<vmem>>, vector<1x32x32xbf16>
    %93 = vector.shape_cast %92 : vector<1x32x32xbf16> to vector<32x32xbf16>
    %cst_36 = arith.constant dense<0.000000e+00> : vector<3x32xf32>
    %94 = tpu.matmul %91, %93, %cst_36 {dimension_numbers = #tpu.dot_dimension_numbers<[1], [0], [0], [1], [0, 0, 1, 1], [], []>} : vector<3x32xbf16>, vector<32x32xbf16>, vector<3x32xf32> -> vector<3x32xf32>
    %c0_37 = arith.constant 0 : index
    %c0_38 = arith.constant 0 : index
    %c0_39 = arith.constant 0 : index
    %95 = vector.load %arg25[%c0_37, %c0_38, %c0_39] : memref<1x1x32xf32, #tpu.memory_space<vmem>>, vector<1x1x32xf32>
    %96 = vector.shape_cast %95 : vector<1x1x32xf32> to vector<1x32xf32>
    %97 = vector.broadcast %96 : vector<1x32xf32> to vector<3x32xf32>
    %98 = arith.addf %94, %97 : vector<3x32xf32>
    %c0_40 = arith.constant 0 : index
    %c0_41 = arith.constant 0 : index
    %c0_42 = arith.constant 0 : index
    %99 = vector.load %arg3[%c0_40, %c0_41, %c0_42] : memref<1x5x32xf32, #tpu.memory_space<vmem>>, vector<1x5x32xf32>
    %100 = vector.shape_cast %99 : vector<1x5x32xf32> to vector<5x32xf32>
    %101 = arith.truncf %100 : vector<5x32xf32> to vector<5x32xbf16>
    %c0_43 = arith.constant 0 : index
    %c0_44 = arith.constant 0 : index
    %c0_45 = arith.constant 0 : index
    %102 = vector.load %arg26[%c0_43, %c0_44, %c0_45] : memref<1x32x64xbf16, #tpu.memory_space<vmem>>, vector<1x32x64xbf16>
    %103 = vector.shape_cast %102 : vector<1x32x64xbf16> to vector<32x64xbf16>
    %cst_46 = arith.constant dense<0.000000e+00> : vector<5x64xf32>
    %104 = tpu.matmul %101, %103, %cst_46 {dimension_numbers = #tpu.dot_dimension_numbers<[1], [0], [0], [1], [0, 0, 1, 1], [], []>} : vector<5x32xbf16>, vector<32x64xbf16>, vector<5x64xf32> -> vector<5x64xf32>
    %c0_47 = arith.constant 0 : index
    %c0_48 = arith.constant 0 : index
    %c0_49 = arith.constant 0 : index
    %105 = vector.load %arg27[%c0_47, %c0_48, %c0_49] : memref<1x1x64xf32, #tpu.memory_space<vmem>>, vector<1x1x64xf32>
    %106 = vector.shape_cast %105 : vector<1x1x64xf32> to vector<1x64xf32>
    %107 = vector.broadcast %106 : vector<1x64xf32> to vector<5x64xf32>
    %108 = arith.addf %104, %107 : vector<5x64xf32>
    %109 = vector.extract_strided_slice %108 {offsets = [0, 0], sizes = [5, 32], strides = [1, 1]} : vector<5x64xf32> to vector<5x32xf32>
    %110 = vector.extract_strided_slice %108 {offsets = [0, 32], sizes = [5, 32], strides = [1, 1]} : vector<5x64xf32> to vector<5x32xf32>
    %111 = vector.shape_cast %98 : vector<3x32xf32> to vector<1x3x2x16xf32>
    %112 = tpu.transpose %111, [0, 2, 1, 3] : vector<1x3x2x16xf32> -> vector<1x2x3x16xf32>
    %113 = vector.shape_cast %109 : vector<5x32xf32> to vector<1x5x2x16xf32>
    %114 = tpu.transpose %113, [0, 2, 1, 3] : vector<1x5x2x16xf32> -> vector<1x2x5x16xf32>
    %115 = vector.shape_cast %110 : vector<5x32xf32> to vector<1x5x2x16xf32>
    %116 = tpu.transpose %115, [0, 2, 1, 3] : vector<1x5x2x16xf32> -> vector<1x2x5x16xf32>
    %117 = vector.shape_cast %112 : vector<1x2x3x16xf32> to vector<2x3x16xf32>
    %118 = arith.truncf %117 : vector<2x3x16xf32> to vector<2x3x16xbf16>
    %119 = vector.shape_cast %114 : vector<1x2x5x16xf32> to vector<2x5x16xf32>
    %120 = arith.truncf %119 : vector<2x5x16xf32> to vector<2x5x16xbf16>
    %121 = vector.shape_cast %116 : vector<1x2x5x16xf32> to vector<2x5x16xf32>
    %122 = arith.truncf %121 : vector<2x5x16xf32> to vector<2x5x16xbf16>
    "tpu.trace_start"() <{level = 10 : i32, message = "bqd,bkd->bqk"}> : () -> ()
    %cst_50 = arith.constant dense<0.000000e+00> : vector<2x3x5xf32>
    %123 = tpu.matmul %118, %120, %cst_50 {dimension_numbers = #tpu.dot_dimension_numbers<[2], [2], [1], [1], [0, 0, 0, 1, 1, 1], [0], [0]>} : vector<2x3x16xbf16>, vector<2x5x16xbf16>, vector<2x3x5xf32> -> vector<2x3x5xf32>
    "tpu.trace_stop"() : () -> ()
    %cst_51 = arith.constant 2.500000e-01 : f32
    %124 = vector.broadcast %cst_51 : f32 to vector<2x3x5xf32>
    %125 = arith.mulf %123, %124 : vector<2x3x5xf32>
    %126 = vector.shape_cast %125 : vector<2x3x5xf32> to vector<1x2x3x5xf32>
    %cst_52 = arith.constant dense<0xFF800000> : vector<1x2x3xf32>
    %127 = vector.multi_reduction <maximumf>, %126, %cst_52 [3] : vector<1x2x3x5xf32> to vector<1x2x3xf32>
    %128 = vector.shape_cast %127 : vector<1x2x3xf32> to vector<1x2x3x1xf32>
    %129 = vector.broadcast %128 : vector<1x2x3x1xf32> to vector<1x2x3x5xf32>
    %130 = arith.subf %126, %129 : vector<1x2x3x5xf32>
    %131 = math.exp %130 : vector<1x2x3x5xf32>
    %cst_53 = arith.constant dense<0.000000e+00> : vector<1x2x3xf32>
    %132 = vector.multi_reduction <add>, %131, %cst_53 [3] : vector<1x2x3x5xf32> to vector<1x2x3xf32>
    %133 = vector.shape_cast %132 : vector<1x2x3xf32> to vector<1x2x3x1xf32>
    %134 = tpu.reciprocal %133 {approx = true} : vector<1x2x3x1xf32> -> vector<1x2x3x1xf32>
    %135 = vector.broadcast %134 : vector<1x2x3x1xf32> to vector<1x2x3x5xf32>
    %136 = arith.mulf %131, %135 : vector<1x2x3x5xf32>
    %137 = vector.shape_cast %136 : vector<1x2x3x5xf32> to vector<2x3x5xf32>
    %138 = arith.truncf %137 : vector<2x3x5xf32> to vector<2x3x5xbf16>
    "tpu.trace_start"() <{level = 10 : i32, message = "bqk,bkd->bqd"}> : () -> ()
    %cst_54 = arith.constant dense<0.000000e+00> : vector<2x3x16xf32>
    %139 = tpu.matmul %138, %122, %cst_54 {dimension_numbers = #tpu.dot_dimension_numbers<[2], [1], [1], [2], [0, 0, 0, 1, 1, 2], [0], [0]>} : vector<2x3x5xbf16>, vector<2x5x16xbf16>, vector<2x3x16xf32> -> vector<2x3x16xf32>
    "tpu.trace_stop"() : () -> ()
    %140 = vector.shape_cast %139 : vector<2x3x16xf32> to vector<1x2x3x16xf32>
    %141 = tpu.transpose %140, [0, 2, 1, 3] : vector<1x2x3x16xf32> -> vector<1x3x2x16xf32>
    %142 = vector.shape_cast %141 : vector<1x3x2x16xf32> to vector<3x32xf32>
    %143 = arith.truncf %142 : vector<3x32xf32> to vector<3x32xbf16>
    %c0_55 = arith.constant 0 : index
    %c0_56 = arith.constant 0 : index
    %c0_57 = arith.constant 0 : index
    %144 = vector.load %arg28[%c0_55, %c0_56, %c0_57] : memref<1x32x32xbf16, #tpu.memory_space<vmem>>, vector<1x32x32xbf16>
    %145 = vector.shape_cast %144 : vector<1x32x32xbf16> to vector<32x32xbf16>
    %cst_58 = arith.constant dense<0.000000e+00> : vector<3x32xf32>
    %146 = tpu.matmul %143, %145, %cst_58 {dimension_numbers = #tpu.dot_dimension_numbers<[1], [0], [0], [1], [0, 0, 1, 1], [], []>} : vector<3x32xbf16>, vector<32x32xbf16>, vector<3x32xf32> -> vector<3x32xf32>
    %c0_59 = arith.constant 0 : index
    %c0_60 = arith.constant 0 : index
    %c0_61 = arith.constant 0 : index
    %147 = vector.load %arg29[%c0_59, %c0_60, %c0_61] : memref<1x1x32xf32, #tpu.memory_space<vmem>>, vector<1x1x32xf32>
    %148 = vector.shape_cast %147 : vector<1x1x32xf32> to vector<1x32xf32>
    %149 = vector.broadcast %148 : vector<1x32xf32> to vector<3x32xf32>
    %150 = arith.addf %146, %149 : vector<3x32xf32>
    %151 = arith.addf %90, %150 : vector<3x32xf32>
    %cst_62 = arith.constant dense<0.000000e+00> : vector<3xf32>
    %152 = vector.multi_reduction <add>, %151, %cst_62 [1] : vector<3x32xf32> to vector<3xf32>
    %153 = vector.shape_cast %152 : vector<3xf32> to vector<3x1xf32>
    %cst_63 = arith.constant 3.200000e+01 : f32
    %154 = vector.broadcast %cst_63 : f32 to vector<3x1xf32>
    %155 = arith.divf %153, %154 : vector<3x1xf32>
    %156 = vector.broadcast %155 : vector<3x1xf32> to vector<3x32xf32>
    %157 = arith.subf %151, %156 : vector<3x32xf32>
    %158 = arith.mulf %157, %157 : vector<3x32xf32>
    %cst_64 = arith.constant dense<0.000000e+00> : vector<3xf32>
    %159 = vector.multi_reduction <add>, %158, %cst_64 [1] : vector<3x32xf32> to vector<3xf32>
    %160 = vector.shape_cast %159 : vector<3xf32> to vector<3x1xf32>
    %cst_65 = arith.constant 3.200000e+01 : f32
    %161 = vector.broadcast %cst_65 : f32 to vector<3x1xf32>
    %162 = arith.divf %160, %161 : vector<3x1xf32>
    %163 = vector.broadcast %155 : vector<3x1xf32> to vector<3x32xf32>
    %164 = arith.subf %151, %163 : vector<3x32xf32>
    %cst_66 = arith.constant 9.99999974E-6 : f32
    %165 = vector.broadcast %cst_66 : f32 to vector<3x1xf32>
    %166 = arith.addf %162, %165 : vector<3x1xf32>
    %167 = math.rsqrt %166 : vector<3x1xf32>
    %168 = vector.broadcast %167 : vector<3x1xf32> to vector<3x32xf32>
    %169 = arith.mulf %164, %168 : vector<3x32xf32>
    %c0_67 = arith.constant 0 : index
    %c0_68 = arith.constant 0 : index
    %c0_69 = arith.constant 0 : index
    %170 = vector.load %arg36[%c0_67, %c0_68, %c0_69] : memref<1x1x32xf32, #tpu.memory_space<vmem>>, vector<1x1x32xf32>
    %171 = vector.shape_cast %170 : vector<1x1x32xf32> to vector<1x32xf32>
    %172 = vector.broadcast %171 : vector<1x32xf32> to vector<3x32xf32>
    %173 = arith.mulf %169, %172 : vector<3x32xf32>
    %c0_70 = arith.constant 0 : index
    %c0_71 = arith.constant 0 : index
    %c0_72 = arith.constant 0 : index
    %174 = vector.load %arg37[%c0_70, %c0_71, %c0_72] : memref<1x1x32xf32, #tpu.memory_space<vmem>>, vector<1x1x32xf32>
    %175 = vector.shape_cast %174 : vector<1x1x32xf32> to vector<1x32xf32>
    %176 = vector.broadcast %175 : vector<1x32xf32> to vector<3x32xf32>
    %177 = arith.addf %173, %176 : vector<3x32xf32>
    %178 = arith.truncf %177 : vector<3x32xf32> to vector<3x32xbf16>
    %c0_73 = arith.constant 0 : index
    %c0_74 = arith.constant 0 : index
    %c0_75 = arith.constant 0 : index
    %179 = vector.load %arg30[%c0_73, %c0_74, %c0_75] : memref<1x32x64xbf16, #tpu.memory_space<vmem>>, vector<1x32x64xbf16>
    %180 = vector.shape_cast %179 : vector<1x32x64xbf16> to vector<32x64xbf16>
    %cst_76 = arith.constant dense<0.000000e+00> : vector<3x64xf32>
    %181 = tpu.matmul %178, %180, %cst_76 {dimension_numbers = #tpu.dot_dimension_numbers<[1], [0], [0], [1], [0, 0, 1, 1], [], []>} : vector<3x32xbf16>, vector<32x64xbf16>, vector<3x64xf32> -> vector<3x64xf32>
    %c0_77 = arith.constant 0 : index
    %c0_78 = arith.constant 0 : index
    %c0_79 = arith.constant 0 : index
    %182 = vector.load %arg31[%c0_77, %c0_78, %c0_79] : memref<1x1x64xf32, #tpu.memory_space<vmem>>, vector<1x1x64xf32>
    %183 = vector.shape_cast %182 : vector<1x1x64xf32> to vector<1x64xf32>
    %184 = vector.broadcast %183 : vector<1x64xf32> to vector<3x64xf32>
    %185 = arith.addf %181, %184 : vector<3x64xf32>
    %cst_80 = arith.constant 0.000000e+00 : f32
    %186 = vector.broadcast %cst_80 : f32 to vector<3x64xf32>
    %187 = arith.maximumf %185, %186 : vector<3x64xf32>
    %188 = arith.truncf %187 : vector<3x64xf32> to vector<3x64xbf16>
    %c0_81 = arith.constant 0 : index
    %c0_82 = arith.constant 0 : index
    %c0_83 = arith.constant 0 : index
    %189 = vector.load %arg32[%c0_81, %c0_82, %c0_83] : memref<1x64x32xbf16, #tpu.memory_space<vmem>>, vector<1x64x32xbf16>
    %190 = vector.shape_cast %189 : vector<1x64x32xbf16> to vector<64x32xbf16>
    %cst_84 = arith.constant dense<0.000000e+00> : vector<3x32xf32>
    %191 = tpu.matmul %188, %190, %cst_84 {dimension_numbers = #tpu.dot_dimension_numbers<[1], [0], [0], [1], [0, 0, 1, 1], [], []>} : vector<3x64xbf16>, vector<64x32xbf16>, vector<3x32xf32> -> vector<3x32xf32>
    %c0_85 = arith.constant 0 : index
    %c0_86 = arith.constant 0 : index
    %c0_87 = arith.constant 0 : index
    %192 = vector.load %arg33[%c0_85, %c0_86, %c0_87] : memref<1x1x32xf32, #tpu.memory_space<vmem>>, vector<1x1x32xf32>
    %193 = vector.shape_cast %192 : vector<1x1x32xf32> to vector<1x32xf32>
    %194 = vector.broadcast %193 : vector<1x32xf32> to vector<3x32xf32>
    %195 = arith.addf %191, %194 : vector<3x32xf32>
    %196 = arith.addf %177, %195 : vector<3x32xf32>
    %cst_88 = arith.constant dense<0.000000e+00> : vector<3xf32>
    %197 = vector.multi_reduction <add>, %196, %cst_88 [1] : vector<3x32xf32> to vector<3xf32>
    %198 = vector.shape_cast %197 : vector<3xf32> to vector<3x1xf32>
    %cst_89 = arith.constant 3.200000e+01 : f32
    %199 = vector.broadcast %cst_89 : f32 to vector<3x1xf32>
    %200 = arith.divf %198, %199 : vector<3x1xf32>
    %201 = vector.broadcast %200 : vector<3x1xf32> to vector<3x32xf32>
    %202 = arith.subf %196, %201 : vector<3x32xf32>
    %203 = arith.mulf %202, %202 : vector<3x32xf32>
    %cst_90 = arith.constant dense<0.000000e+00> : vector<3xf32>
    %204 = vector.multi_reduction <add>, %203, %cst_90 [1] : vector<3x32xf32> to vector<3xf32>
    %205 = vector.shape_cast %204 : vector<3xf32> to vector<3x1xf32>
    %cst_91 = arith.constant 3.200000e+01 : f32
    %206 = vector.broadcast %cst_91 : f32 to vector<3x1xf32>
    %207 = arith.divf %205, %206 : vector<3x1xf32>
    %208 = vector.broadcast %200 : vector<3x1xf32> to vector<3x32xf32>
    %209 = arith.subf %196, %208 : vector<3x32xf32>
    %cst_92 = arith.constant 9.99999974E-6 : f32
    %210 = vector.broadcast %cst_92 : f32 to vector<3x1xf32>
    %211 = arith.addf %207, %210 : vector<3x1xf32>
    %212 = math.rsqrt %211 : vector<3x1xf32>
    %213 = vector.broadcast %212 : vector<3x1xf32> to vector<3x32xf32>
    %214 = arith.mulf %209, %213 : vector<3x32xf32>
    %c0_93 = arith.constant 0 : index
    %c0_94 = arith.constant 0 : index
    %c0_95 = arith.constant 0 : index
    %215 = vector.load %arg38[%c0_93, %c0_94, %c0_95] : memref<1x1x32xf32, #tpu.memory_space<vmem>>, vector<1x1x32xf32>
    %216 = vector.shape_cast %215 : vector<1x1x32xf32> to vector<1x32xf32>
    %217 = vector.broadcast %216 : vector<1x32xf32> to vector<3x32xf32>
    %218 = arith.mulf %214, %217 : vector<3x32xf32>
    %c0_96 = arith.constant 0 : index
    %c0_97 = arith.constant 0 : index
    %c0_98 = arith.constant 0 : index
    %219 = vector.load %arg39[%c0_96, %c0_97, %c0_98] : memref<1x1x32xf32, #tpu.memory_space<vmem>>, vector<1x1x32xf32>
    %220 = vector.shape_cast %219 : vector<1x1x32xf32> to vector<1x32xf32>
    %221 = vector.broadcast %220 : vector<1x32xf32> to vector<3x32xf32>
    %222 = arith.addf %218, %221 : vector<3x32xf32>
    %c0_99 = arith.constant 0 : index
    %c0_100 = arith.constant 0 : index
    %223 = vector.load %arg41[%c0_99, %c0_100] : memref<3x32xf32, #tpu.memory_space<vmem>>, vector<3x32xf32>
    tpu.vector_store %arg41[%c0_99, %c0_100], %222 {strides = array<i32>} : memref<3x32xf32, #tpu.memory_space<vmem>>, vector<3x32xf32>,
    %c1_i32 = arith.constant 1 : i32
    %224 = arith.cmpi eq, %arg1, %c1_i32 : i32
    %225 = arith.extui %224 : i1 to i32
    %c0_i32_101 = arith.constant 0 : i32
    %226 = arith.cmpi ne, %225, %c0_i32_101 : i32
    scf.if %226 {
      %c0_102 = arith.constant 0 : index
      %c0_103 = arith.constant 0 : index
      %c0_104 = arith.constant 0 : index
      %227 = vector.load %arg40[%c0_102, %c0_103, %c0_104] : memref<1x3x32xf32, #tpu.memory_space<vmem>>, vector<1x3x32xf32>
      %228 = vector.shape_cast %227 : vector<1x3x32xf32> to vector<3x32xf32>
      %229 = vector.shape_cast %222 : vector<3x32xf32> to vector<1x3x32xf32>
      tpu.vector_store %arg40[%c0_102, %c0_103, %c0_104], %229 {strides = array<i32>} : memref<1x3x32xf32, #tpu.memory_space<vmem>>, vector<1x3x32xf32>,
    } else {
    }
    return
  }
  func.func @transform_0(%arg0: i32, %arg1: i32) -> (i32, i32, i32) {
    %c0_i32 = arith.constant 0 : i32
    %c0_i32_0 = arith.constant 0 : i32
    %c0_i32_1 = arith.constant 0 : i32
    return %arg0, %c0_i32, %c0_i32_0 : i32, i32, i32
  }
  func.func @transform_1(%arg0: i32, %arg1: i32) -> (i32, i32, i32) {
    %c0_i32 = arith.constant 0 : i32
    %c0_i32_0 = arith.constant 0 : i32
    %c0_i32_1 = arith.constant 0 : i32
    return %arg0, %c0_i32, %c0_i32_0 : i32, i32, i32
  }
  func.func @transform_2(%arg0: i32, %arg1: i32) -> (i32, i32, i32) {
    %c0_i32 = arith.constant 0 : i32
    %c0_i32_0 = arith.constant 0 : i32
    %c0_i32_1 = arith.constant 0 : i32
    return %arg0, %c0_i32, %c0_i32_0 : i32, i32, i32
  }
  func.func @transform_3(%arg0: i32, %arg1: i32) -> (i32, i32) {
    %c0_i32 = arith.constant 0 : i32
    %c0_i32_0 = arith.constant 0 : i32
    %c0_i32_1 = arith.constant 0 : i32
    return %c0_i32, %c0_i32_0 : i32, i32
  }
  func.func @transform_4(%arg0: i32, %arg1: i32) -> (i32, i32) {
    %c0_i32 = arith.constant 0 : i32
    %c0_i32_0 = arith.constant 0 : i32
    %c0_i32_1 = arith.constant 0 : i32
    return %c0_i32, %c0_i32_0 : i32, i32
  }
  func.func @transform_5(%arg0: i32, %arg1: i32) -> (i32, i32) {
    %c0_i32 = arith.constant 0 : i32
    %c0_i32_0 = arith.constant 0 : i32
    %c0_i32_1 = arith.constant 0 : i32
    return %c0_i32, %c0_i32_0 : i32, i32
  }
  func.func @transform_6(%arg0: i32, %arg1: i32) -> (i32, i32) {
    %c0_i32 = arith.constant 0 : i32
    %c0_i32_0 = arith.constant 0 : i32
    %c0_i32_1 = arith.constant 0 : i32
    return %c0_i32, %c0_i32_0 : i32, i32
  }
  func.func @transform_7(%arg0: i32, %arg1: i32) -> (i32, i32) {
    %c0_i32 = arith.constant 0 : i32
    %c0_i32_0 = arith.constant 0 : i32
    %c0_i32_1 = arith.constant 0 : i32
    return %c0_i32, %c0_i32_0 : i32, i32
  }
  func.func @transform_8(%arg0: i32, %arg1: i32) -> (i32, i32) {
    %c0_i32 = arith.constant 0 : i32
    %c0_i32_0 = arith.constant 0 : i32
    %c0_i32_1 = arith.constant 0 : i32
    return %c0_i32, %c0_i32_0 : i32, i32
  }
  func.func @transform_9(%arg0: i32, %arg1: i32) -> (i32, i32) {
    %c0_i32 = arith.constant 0 : i32
    %c0_i32_0 = arith.constant 0 : i32
    %c0_i32_1 = arith.constant 0 : i32
    return %c0_i32, %c0_i32_0 : i32, i32
  }
  func.func @transform_10(%arg0: i32, %arg1: i32) -> (i32, i32) {
    %c0_i32 = arith.constant 0 : i32
    %c0_i32_0 = arith.constant 0 : i32
    %c0_i32_1 = arith.constant 0 : i32
    return %c0_i32, %c0_i32_0 : i32, i32
  }
  func.func @transform_11(%arg0: i32, %arg1: i32) -> (i32, i32) {
    %c0_i32 = arith.constant 0 : i32
    %c0_i32_0 = arith.constant 0 : i32
    %c0_i32_1 = arith.constant 0 : i32
    return %c0_i32, %c0_i32_0 : i32, i32
  }
  func.func @transform_12(%arg0: i32, %arg1: i32) -> (i32, i32) {
    %c0_i32 = arith.constant 0 : i32
    %c0_i32_0 = arith.constant 0 : i32
    %c0_i32_1 = arith.constant 0 : i32
    return %c0_i32, %c0_i32_0 : i32, i32
  }
  func.func @transform_13(%arg0: i32, %arg1: i32) -> (i32, i32) {
    %c0_i32 = arith.constant 0 : i32
    %c0_i32_0 = arith.constant 0 : i32
    %c0_i32_1 = arith.constant 0 : i32
    return %c0_i32, %c0_i32_0 : i32, i32
  }
  func.func @transform_14(%arg0: i32, %arg1: i32) -> (i32, i32) {
    %c0_i32 = arith.constant 0 : i32
    %c0_i32_0 = arith.constant 0 : i32
    %c0_i32_1 = arith.constant 0 : i32
    return %c0_i32, %c0_i32_0 : i32, i32
  }
  func.func @transform_15(%arg0: i32, %arg1: i32) -> (i32, i32) {
    %c0_i32 = arith.constant 0 : i32
    %c0_i32_0 = arith.constant 0 : i32
    %c0_i32_1 = arith.constant 0 : i32
    return %c0_i32, %c0_i32_0 : i32, i32
  }
  func.func @transform_16(%arg0: i32, %arg1: i32) -> (i32, i32) {
    %c0_i32 = arith.constant 0 : i32
    %c0_i32_0 = arith.constant 0 : i32
    %c0_i32_1 = arith.constant 0 : i32
    return %c0_i32, %c0_i32_0 : i32, i32
  }
  func.func @transform_17(%arg0: i32, %arg1: i32) -> (i32, i32) {
    %c0_i32 = arith.constant 0 : i32
    %c0_i32_0 = arith.constant 0 : i32
    %c0_i32_1 = arith.constant 0 : i32
    return %c0_i32, %c0_i32_0 : i32, i32
  }
  func.func @transform_18(%arg0: i32, %arg1: i32) -> (i32, i32, i32) {
    %c0_i32 = arith.constant 0 : i32
    %c0_i32_0 = arith.constant 0 : i32
    %c0_i32_1 = arith.constant 0 : i32
    return %arg1, %c0_i32, %c0_i32_0 : i32, i32, i32
  }
  func.func @transform_19(%arg0: i32, %arg1: i32) -> (i32, i32, i32) {
    %c0_i32 = arith.constant 0 : i32
    %c0_i32_0 = arith.constant 0 : i32
    %c0_i32_1 = arith.constant 0 : i32
    return %arg1, %c0_i32, %c0_i32_0 : i32, i32, i32
  }
  func.func @transform_20(%arg0: i32, %arg1: i32) -> (i32, i32, i32) {
    %c0_i32 = arith.constant 0 : i32
    %c0_i32_0 = arith.constant 0 : i32
    %c0_i32_1 = arith.constant 0 : i32
    return %arg1, %c0_i32, %c0_i32_0 : i32, i32, i32
  }
  func.func @transform_21(%arg0: i32, %arg1: i32) -> (i32, i32, i32) {
    %c0_i32 = arith.constant 0 : i32
    %c0_i32_0 = arith.constant 0 : i32
    %c0_i32_1 = arith.constant 0 : i32
    return %arg1, %c0_i32, %c0_i32_0 : i32, i32, i32
  }
  func.func @transform_22(%arg0: i32, %arg1: i32) -> (i32, i32, i32) {
    %c0_i32 = arith.constant 0 : i32
    %c0_i32_0 = arith.constant 0 : i32
    %c0_i32_1 = arith.constant 0 : i32
    return %arg1, %c0_i32, %c0_i32_0 : i32, i32, i32
  }
  func.func @transform_23(%arg0: i32, %arg1: i32) -> (i32, i32, i32) {
    %c0_i32 = arith.constant 0 : i32
    %c0_i32_0 = arith.constant 0 : i32
    %c0_i32_1 = arith.constant 0 : i32
    return %arg1, %c0_i32, %c0_i32_0 : i32, i32, i32
  }
  func.func @transform_24(%arg0: i32, %arg1: i32) -> (i32, i32, i32) {
    %c0_i32 = arith.constant 0 : i32
    %c0_i32_0 = arith.constant 0 : i32
    %c0_i32_1 = arith.constant 0 : i32
    return %arg1, %c0_i32, %c0_i32_0 : i32, i32, i32
  }
  func.func @transform_25(%arg0: i32, %arg1: i32) -> (i32, i32, i32) {
    %c0_i32 = arith.constant 0 : i32
    %c0_i32_0 = arith.constant 0 : i32
    %c0_i32_1 = arith.constant 0 : i32
    return %arg1, %c0_i32, %c0_i32_0 : i32, i32, i32
  }
  func.func @transform_26(%arg0: i32, %arg1: i32) -> (i32, i32, i32) {
    %c0_i32 = arith.constant 0 : i32
    %c0_i32_0 = arith.constant 0 : i32
    %c0_i32_1 = arith.constant 0 : i32
    return %arg1, %c0_i32, %c0_i32_0 : i32, i32, i32
  }
  func.func @transform_27(%arg0: i32, %arg1: i32) -> (i32, i32, i32) {
    %c0_i32 = arith.constant 0 : i32
    %c0_i32_0 = arith.constant 0 : i32
    %c0_i32_1 = arith.constant 0 : i32
    return %arg1, %c0_i32, %c0_i32_0 : i32, i32, i32
  }
  func.func @transform_28(%arg0: i32, %arg1: i32) -> (i32, i32, i32) {
    %c0_i32 = arith.constant 0 : i32
    %c0_i32_0 = arith.constant 0 : i32
    %c0_i32_1 = arith.constant 0 : i32
    return %arg1, %c0_i32, %c0_i32_0 : i32, i32, i32
  }
  func.func @transform_29(%arg0: i32, %arg1: i32) -> (i32, i32, i32) {
    %c0_i32 = arith.constant 0 : i32
    %c0_i32_0 = arith.constant 0 : i32
    %c0_i32_1 = arith.constant 0 : i32
    return %arg1, %c0_i32, %c0_i32_0 : i32, i32, i32
  }
  func.func @transform_30(%arg0: i32, %arg1: i32) -> (i32, i32, i32) {
    %c0_i32 = arith.constant 0 : i32
    %c0_i32_0 = arith.constant 0 : i32
    %c0_i32_1 = arith.constant 0 : i32
    return %arg1, %c0_i32, %c0_i32_0 : i32, i32, i32
  }
  func.func @transform_31(%arg0: i32, %arg1: i32) -> (i32, i32, i32) {
    %c0_i32 = arith.constant 0 : i32
    %c0_i32_0 = arith.constant 0 : i32
    %c0_i32_1 = arith.constant 0 : i32
    return %arg1, %c0_i32, %c0_i32_0 : i32, i32, i32
  }
  func.func @transform_32(%arg0: i32, %arg1: i32) -> (i32, i32, i32) {
    %c0_i32 = arith.constant 0 : i32
    %c0_i32_0 = arith.constant 0 : i32
    %c0_i32_1 = arith.constant 0 : i32
    return %arg1, %c0_i32, %c0_i32_0 : i32, i32, i32
  }
  func.func @transform_33(%arg0: i32, %arg1: i32) -> (i32, i32, i32) {
    %c0_i32 = arith.constant 0 : i32
    %c0_i32_0 = arith.constant 0 : i32
    %c0_i32_1 = arith.constant 0 : i32
    return %arg1, %c0_i32, %c0_i32_0 : i32, i32, i32
  }
  func.func @transform_34(%arg0: i32, %arg1: i32) -> (i32, i32, i32) {
    %c0_i32 = arith.constant 0 : i32
    %c0_i32_0 = arith.constant 0 : i32
    %c0_i32_1 = arith.constant 0 : i32
    return %arg1, %c0_i32, %c0_i32_0 : i32, i32, i32
  }
  func.func @transform_35(%arg0: i32, %arg1: i32) -> (i32, i32, i32) {
    %c0_i32 = arith.constant 0 : i32
    %c0_i32_0 = arith.constant 0 : i32
    %c0_i32_1 = arith.constant 0 : i32
    return %arg1, %c0_i32, %c0_i32_0 : i32, i32, i32
  }
  func.func @transform_36(%arg0: i32, %arg1: i32) -> (i32, i32, i32) {
    %c0_i32 = arith.constant 0 : i32
    %c0_i32_0 = arith.constant 0 : i32
    %c0_i32_1 = arith.constant 0 : i32
    return %arg1, %c0_i32, %c0_i32_0 : i32, i32, i32
  }
  func.func @transform_37(%arg0: i32, %arg1: i32) -> (i32, i32, i32) {
    %c0_i32 = arith.constant 0 : i32
    %c0_i32_0 = arith.constant 0 : i32
    %c0_i32_1 = arith.constant 0 : i32
    return %arg1, %c0_i32, %c0_i32_0 : i32, i32, i32
  }
  func.func @transform_38(%arg0: i32, %arg1: i32) -> (i32, i32, i32) {
    %c0_i32 = arith.constant 0 : i32
    %c0_i32_0 = arith.constant 0 : i32
    %c0_i32_1 = arith.constant 0 : i32
    return %arg0, %c0_i32, %c0_i32_0 : i32, i32, i32
  }
}

</mosaic_0001>

<llo_original>
// kernel: tpu_custom_call.1
$region0: #{tpu_custom_call.1}
  #allocation0 [shape = 'u32[]', space=smem, size = 0x4, offset = 0x4, fixed_abs, tag = 'smem constant byte address 0x4 - core index']
  #allocation1 [shape = 'u32[144,128]{1,0:T(1,128)}', space=vmem, size = 0x12000, scoped, tag = 'internal scratch']
  #allocation2 [shape = 'f32[3,32]{1,0:T(4,128)}', space=vmem, size = 0x800, scoped, tag = 'scratch operand']
  %s0 = inlined_call_operand.smem [shape: u32[39], index: -1, kind: input, shape index: {}]
  %s1 = sld [smem:[%s0]]
  %s2 = scalar_lea.smem %s0, 1
  %s3 = sld [smem:[%s2]]
  %s4 = scalar_lea.smem %s0, 2
  %s5 = sld [smem:[%s4]]
  %s6 = scalar_lea.smem %s0, 3
  %s7 = sld [smem:[%s6]]
  %s8 = scalar_lea.smem %s0, 4
  %s9 = sld [smem:[%s8]]
  %s10 = scalar_lea.smem %s0, 5
  %s11 = sld [smem:[%s10]]
  %s12 = scalar_lea.smem %s0, 6
  %s13 = sld [smem:[%s12]]
  %s14 = scalar_lea.smem %s0, 7
  %s15 = sld [smem:[%s14]]
  %s16 = scalar_lea.smem %s0, 8
  %s17 = sld [smem:[%s16]]
  %s18 = scalar_lea.smem %s0, 9
  %s19 = sld [smem:[%s18]]
  %s20 = scalar_lea.smem %s0, 10
  %s21 = sld [smem:[%s20]]
  %s22 = scalar_lea.smem %s0, 11
  %s23 = sld [smem:[%s22]]
  %s24 = scalar_lea.smem %s0, 12
  %s25 = sld [smem:[%s24]]
  %s26 = scalar_lea.smem %s0, 13
  %s27 = sld [smem:[%s26]]
  %s28 = scalar_lea.smem %s0, 14
  %s29 = sld [smem:[%s28]]
  %s30 = scalar_lea.smem %s0, 15
  %s31 = sld [smem:[%s30]]
  %s32 = scalar_lea.smem %s0, 16
  %s33 = sld [smem:[%s32]]
  %s34 = scalar_lea.smem %s0, 17
  %s35 = sld [smem:[%s34]]
  %s36 = scalar_lea.smem %s0, 18
  %s37 = sld [smem:[%s36]]
  %s38 = scalar_lea.smem %s0, 19
  %s39 = sld [smem:[%s38]]
  %s40 = scalar_lea.smem %s0, 20
  %s41 = sld [smem:[%s40]]
  %s42 = scalar_lea.smem %s0, 21
  %s43 = sld [smem:[%s42]]
  %s44 = scalar_lea.smem %s0, 22
  %s45 = sld [smem:[%s44]]
  %s46 = scalar_lea.smem %s0, 23
  %s47 = sld [smem:[%s46]]
  %s48 = scalar_lea.smem %s0, 24
  %s49 = sld [smem:[%s48]]
  %s50 = scalar_lea.smem %s0, 25
  %s51 = sld [smem:[%s50]]
  %s52 = scalar_lea.smem %s0, 26
  %s53 = sld [smem:[%s52]]
  %s54 = scalar_lea.smem %s0, 27
  %s55 = sld [smem:[%s54]]
  %s56 = scalar_lea.smem %s0, 28
  %s57 = sld [smem:[%s56]]
  %s58 = scalar_lea.smem %s0, 29
  %s59 = sld [smem:[%s58]]
  %s60 = scalar_lea.smem %s0, 30
  %s61 = sld [smem:[%s60]]
  %s62 = scalar_lea.smem %s0, 31
  %s63 = sld [smem:[%s62]]
  %s64 = scalar_lea.smem %s0, 32
  %s65 = sld [smem:[%s64]]
  %s66 = scalar_lea.smem %s0, 33
  %s67 = sld [smem:[%s66]]
  %s68 = scalar_lea.smem %s0, 34
  %s69 = sld [smem:[%s68]]
  %s70 = scalar_lea.smem %s0, 35
  %s71 = sld [smem:[%s70]]
  %s72 = scalar_lea.smem %s0, 36
  %s73 = sld [smem:[%s72]]
  %s74 = scalar_lea.smem %s0, 37
  %s75 = sld [smem:[%s74]]
  %s76 = scalar_lea.smem %s0, 38
  %s77 = sld [smem:[%s76]]
  %s78 = sld [smem:[#allocation0]]
  $region213: #{tpu_custom_call.1} parent=0
    _
  %s80 = ssub.s32 1, %s78
  %s81 = scalar_select 0, %s80, %s78
  $region1: #{tpu_custom_call.1} parent=0
    #allocation3 [shape = 'u8[1024]{0}', space=vmem, size = 0x400, scoped, tag = 'input window, operand 2']
    #allocation4 [shape = 's32[2]{0}', space=sflag, size = 0x8, scoped, tag = 'scoped memory for tpu_custom_call.1']
    #allocation5 [shape = 'u8[2048]{0}', space=vmem, size = 0x800, scoped, tag = 'input window, operand 3, single buffered']
    #allocation6 [shape = 's32[1]{0}', space=sflag, size = 0x4, scoped, tag = 'scoped memory for tpu_custom_call.1']
    #allocation7 [shape = 'u8[1024]{0}', space=vmem, size = 0x400, scoped, tag = 'input window, operand 4, single buffered']
    #allocation8 [shape = 'u8[512]{0}', space=vmem, size = 0x400, scoped, tag = 'input window, operand 5, single buffered']
    #allocation9 [shape = 's32[1]{0}', space=sflag, size = 0x4, scoped, tag = 'scoped memory for tpu_custom_call.1']
    #allocation10 [shape = 'u8[512]{0}', space=vmem, size = 0x400, scoped, tag = 'input window, operand 7, single buffered']
    %82 = vsyncpa [#allocation4], 0
    %s83 = scalar_lea.sflag [#allocation4], 1
    %84 = vsyncpa %s83, 0
    %85 = vsyncpa [#allocation6], 0
    %86 = vsyncpa [#allocation9], 0
    loop: start=0, step=1, limit=6
    $region2: #{tpu_custom_call.1} parent=1 // loop_pre_header
      _
    $region3: #{tpu_custom_call.1} parent=1 // loop_header
      %s88 = sphi 0, %s92
      %p89 = scmp.ge.s32.totalorder %s88, 6
      %s95 = sphi 0, %s107
      %s96 = sphi 0, %s103
      %s97 = sphi 0, %s95
      %s98 = sphi 0, %s96
      %s99 = sphi 0, %s97
      %s100 = sphi 0, %s98
      %s110 = sphi 0, %s112
      %s113 = sphi 0, %s110
      %s114 = sphi 0, %s113
      %s130 = sphi 0, %s114
      %s136 = sphi 0, %s138
      %s139 = sphi 0, %s136
      %s140 = sphi 0, %s139
      %s156 = sphi 0, %s140
      %s162 = sphi 0, %s164
      %s165 = sphi 0, %s162
      %s166 = sphi 0, %s165
      %s182 = sphi 0, %s166
      %s186 = sphi 0, %s186
      %s188 = sphi 0, %s186
      %s189 = sphi 0, %s188
      %s203 = sphi 0, %s189
      %s207 = sphi 0, %s207
      %s209 = sphi 0, %s207
      %s210 = sphi 0, %s209
      %s224 = sphi 0, %s210
      %s228 = sphi 0, %s228
      %s230 = sphi 0, %s228
      %s231 = sphi 0, %s230
      %s245 = sphi 0, %s231
      %s249 = sphi 0, %s249
      %s251 = sphi 0, %s249
      %s252 = sphi 0, %s251
      %s266 = sphi 0, %s252
      %s270 = sphi 0, %s270
      %s272 = sphi 0, %s270
      %s273 = sphi 0, %s272
      %s287 = sphi 0, %s273
      %s291 = sphi 0, %s291
      %s293 = sphi 0, %s291
      %s294 = sphi 0, %s293
      %s308 = sphi 0, %s294
      %s312 = sphi 0, %s312
      %s314 = sphi 0, %s312
      %s315 = sphi 0, %s314
      %s329 = sphi 0, %s315
      %s333 = sphi 0, %s333
      %s335 = sphi 0, %s333
      %s336 = sphi 0, %s335
      %s350 = sphi 0, %s336
      %s354 = sphi 0, %s354
      %s356 = sphi 0, %s354
      %s357 = sphi 0, %s356
      %s371 = sphi 0, %s357
      %s375 = sphi 0, %s375
      %s377 = sphi 0, %s375
      %s378 = sphi 0, %s377
      %s392 = sphi 0, %s378
      %s396 = sphi 0, %s396
      %s398 = sphi 0, %s396
      %s399 = sphi 0, %s398
      %s413 = sphi 0, %s399
      %s417 = sphi 0, %s417
      %s419 = sphi 0, %s417
      %s420 = sphi 0, %s419
      %s434 = sphi 0, %s420
      %s438 = sphi 0, %s438
      %s440 = sphi 0, %s438
      %s441 = sphi 0, %s440
      %s455 = sphi 0, %s441
      %s459 = sphi 0, %s459
      %s461 = sphi 0, %s459
      %s462 = sphi 0, %s461
      %s476 = sphi 0, %s462
      %s480 = sphi 0, %s480
      %s482 = sphi 0, %s480
      %s483 = sphi 0, %s482
      %s497 = sphi 0, %s483
      %s503 = sphi 0, %s505
      %s506 = sphi 0, %s503
      %s507 = sphi 0, %s506
      %s523 = sphi 0, %s507
      %s529 = sphi 0, %s531
      %s532 = sphi 0, %s529
      %s533 = sphi 0, %s532
      %s549 = sphi 0, %s533
      %s555 = sphi 0, %s557
      %s558 = sphi 0, %s555
      %s559 = sphi 0, %s558
      %s575 = sphi 0, %s559
      %s581 = sphi 0, %s583
      %s584 = sphi 0, %s581
      %s585 = sphi 0, %s584
      %s601 = sphi 0, %s585
      %s607 = sphi 0, %s609
      %s610 = sphi 0, %s607
      %s611 = sphi 0, %s610
      %s627 = sphi 0, %s611
      %s633 = sphi 0, %s635
      %s636 = sphi 0, %s633
      %s637 = sphi 0, %s636
      %s653 = sphi 0, %s637
      %s659 = sphi 0, %s661
      %s662 = sphi 0, %s659
      %s663 = sphi 0, %s662
      %s679 = sphi 0, %s663
      %s685 = sphi 0, %s687
      %s688 = sphi 0, %s685
      %s689 = sphi 0, %s688
      %s705 = sphi 0, %s689
      %s711 = sphi 0, %s713
      %s714 = sphi 0, %s711
      %s715 = sphi 0, %s714
      %s731 = sphi 0, %s715
      %s737 = sphi 0, %s739
      %s740 = sphi 0, %s737
      %s741 = sphi 0, %s740
      %s757 = sphi 0, %s741
      %s763 = sphi 0, %s765
      %s766 = sphi 0, %s763
      %s767 = sphi 0, %s766
      %s783 = sphi 0, %s767
      %s789 = sphi 0, %s791
      %s792 = sphi 0, %s789
      %s793 = sphi 0, %s792
      %s809 = sphi 0, %s793
      %s815 = sphi 0, %s817
      %s818 = sphi 0, %s815
      %s819 = sphi 0, %s818
      %s835 = sphi 0, %s819
      %s841 = sphi 0, %s843
      %s844 = sphi 0, %s841
      %s845 = sphi 0, %s844
      %s861 = sphi 0, %s845
      %s867 = sphi 0, %s869
      %s870 = sphi 0, %s867
      %s871 = sphi 0, %s870
      %s887 = sphi 0, %s871
      %s893 = sphi 0, %s895
      %s896 = sphi 0, %s893
      %s897 = sphi 0, %s896
      %s913 = sphi 0, %s897
      %s919 = sphi 0, %s921
      %s922 = sphi 0, %s919
      %s923 = sphi 0, %s922
      %s939 = sphi 0, %s923
      %s945 = sphi 0, %s947
      %s948 = sphi 0, %s945
      %s949 = sphi 0, %s948
      %s965 = sphi 0, %s949
      %s971 = sphi 0, %s973
      %s974 = sphi 0, %s971
      %s975 = sphi 0, %s974
      %s991 = sphi 0, %s975
      %s997 = sphi 0, %s999
      %s1000 = sphi 0, %s997
      %s1001 = sphi 0, %s1000
      %s1017 = sphi 0, %s1001
      %s1023 = sphi 0, %s1025
      %s1026 = sphi 0, %s1023
      %s1027 = sphi 0, %s1026
      %s1043 = sphi 0, %s1027
    $region4: #{tpu_custom_call.1} parent=1 // loop_header_branch
      %91 = sbr.rel (%p89) target = $region8
    $region5: #{tpu_custom_call.1} parent=1 // loop_body
      %s93 = ssub.s32 %s88, 1
      %s94 = ssub.s32 %s88, 2
      %s101 = sadd.s32 1, %s96
      %p102 = scmp.ge.s32.totalorder %s101, 2
      %s103 = scalar_select %p102, 0, %s101
      %s104 = sadd.s32 1, %s95
      %s105 = scalar_select %p102, %s104, %s95
      %p106 = scmp.ge.s32.totalorder %s105, 2
      %s107 = scalar_select %p106, 0, %s105
      %s108 = ssub.s32 %s95, %s107
      %p109 = scmp.eq.s32.totalorder %s108, 0
      %s111 = sadd.s32 %s110, 1
      %s112 = scalar_select %p109, %s110, %s111
      %p115 = pneg %p109
      %p116 = scmp.eq.s32.totalorder %s88, 3
      %p117 = por %p115, %p116
      %p118 = scmp.ne.s32.totalorder %s110, %s113
      %p119 = scmp.eq.s32.totalorder %s88, 0
      %p120 = por %p118, %p119
      %p121 = scmp.ne.s32.totalorder %s110, %s113
      %p122 = scmp.eq.s32.totalorder %s93, 3
      %p123 = por %p121, %p122
      %p124 = scmp.ne.s32.totalorder %s113, %s114
      %p125 = scmp.eq.s32.totalorder %s93, 0
      %p126 = por %p124, %p125
      %p127 = scmp.ne.s32.totalorder %s113, %s114
      %p128 = scmp.eq.s32.totalorder %s94, 3
      %p129 = por %p127, %p128
      %p131 = scmp.ne.s32.totalorder %s114, %s130
      %p132 = scmp.eq.s32.totalorder %s94, 0
      %p133 = por %p131, %p132
      %s134 = ssub.s32 %s95, %s107
      %p135 = scmp.eq.s32.totalorder %s134, 0
      %s137 = sadd.s32 %s136, 1
      %s138 = scalar_select %p135, %s136, %s137
      %p141 = pneg %p135
      %p142 = scmp.eq.s32.totalorder %s88, 3
      %p143 = por %p141, %p142
      %p144 = scmp.ne.s32.totalorder %s136, %s139
      %p145 = scmp.eq.s32.totalorder %s88, 0
      %p146 = por %p144, %p145
      %p147 = scmp.ne.s32.totalorder %s136, %s139
      %p148 = scmp.eq.s32.totalorder %s93, 3
      %p149 = por %p147, %p148
      %p150 = scmp.ne.s32.totalorder %s139, %s140
      %p151 = scmp.eq.s32.totalorder %s93, 0
      %p152 = por %p150, %p151
      %p153 = scmp.ne.s32.totalorder %s139, %s140
      %p154 = scmp.eq.s32.totalorder %s94, 3
      %p155 = por %p153, %p154
      %p157 = scmp.ne.s32.totalorder %s140, %s156
      %p158 = scmp.eq.s32.totalorder %s94, 0
      %p159 = por %p157, %p158
      %s160 = ssub.s32 %s95, %s107
      %p161 = scmp.eq.s32.totalorder %s160, 0
      %s163 = sadd.s32 %s162, 1
      %s164 = scalar_select %p161, %s162, %s163
      %p167 = pneg %p161
      %p168 = scmp.eq.s32.totalorder %s88, 3
      %p169 = por %p167, %p168
      %p170 = scmp.ne.s32.totalorder %s162, %s165
      %p171 = scmp.eq.s32.totalorder %s88, 0
      %p172 = por %p170, %p171
      %p173 = scmp.ne.s32.totalorder %s162, %s165
      %p174 = scmp.eq.s32.totalorder %s93, 3
      %p175 = por %p173, %p174
      %p176 = scmp.ne.s32.totalorder %s165, %s166
      %p177 = scmp.eq.s32.totalorder %s93, 0
      %p178 = por %p176, %p177
      %p179 = scmp.ne.s32.totalorder %s165, %s166
      %p180 = scmp.eq.s32.totalorder %s94, 3
      %p181 = por %p179, %p180
      %p183 = scmp.ne.s32.totalorder %s166, %s182
      %p184 = scmp.eq.s32.totalorder %s94, 0
      %p185 = por %p183, %p184
      %s187 = sadd.s32 %s186, 1
      %p190 = scmp.eq.s32.totalorder %s88, 3
      %p191 = scmp.ne.s32.totalorder %s186, %s188
      %p192 = scmp.eq.s32.totalorder %s88, 0
      %p193 = por %p191, %p192
      %p194 = scmp.ne.s32.totalorder %s186, %s188
      %p195 = scmp.eq.s32.totalorder %s93, 3
      %p196 = por %p194, %p195
      %p197 = scmp.ne.s32.totalorder %s188, %s189
      %p198 = scmp.eq.s32.totalorder %s93, 0
      %p199 = por %p197, %p198
      %p200 = scmp.ne.s32.totalorder %s188, %s189
      %p201 = scmp.eq.s32.totalorder %s94, 3
      %p202 = por %p200, %p201
      %p204 = scmp.ne.s32.totalorder %s189, %s203
      %p205 = scmp.eq.s32.totalorder %s94, 0
      %p206 = por %p204, %p205
      %s208 = sadd.s32 %s207, 1
      %p211 = scmp.eq.s32.totalorder %s88, 3
      %p212 = scmp.ne.s32.totalorder %s207, %s209
      %p213 = scmp.eq.s32.totalorder %s88, 0
      %p214 = por %p212, %p213
      %p215 = scmp.ne.s32.totalorder %s207, %s209
      %p216 = scmp.eq.s32.totalorder %s93, 3
      %p217 = por %p215, %p216
      %p218 = scmp.ne.s32.totalorder %s209, %s210
      %p219 = scmp.eq.s32.totalorder %s93, 0
      %p220 = por %p218, %p219
      %p221 = scmp.ne.s32.totalorder %s209, %s210
      %p222 = scmp.eq.s32.totalorder %s94, 3
      %p223 = por %p221, %p222
      %p225 = scmp.ne.s32.totalorder %s210, %s224
      %p226 = scmp.eq.s32.totalorder %s94, 0
      %p227 = por %p225, %p226
      %s229 = sadd.s32 %s228, 1
      %p232 = scmp.eq.s32.totalorder %s88, 3
      %p233 = scmp.ne.s32.totalorder %s228, %s230
      %p234 = scmp.eq.s32.totalorder %s88, 0
      %p235 = por %p233, %p234
      %p236 = scmp.ne.s32.totalorder %s228, %s230
      %p237 = scmp.eq.s32.totalorder %s93, 3
      %p238 = por %p236, %p237
      %p239 = scmp.ne.s32.totalorder %s230, %s231
      %p240 = scmp.eq.s32.totalorder %s93, 0
      %p241 = por %p239, %p240
      %p242 = scmp.ne.s32.totalorder %s230, %s231
      %p243 = scmp.eq.s32.totalorder %s94, 3
      %p244 = por %p242, %p243
      %p246 = scmp.ne.s32.totalorder %s231, %s245
      %p247 = scmp.eq.s32.totalorder %s94, 0
      %p248 = por %p246, %p247
      %s250 = sadd.s32 %s249, 1
      %p253 = scmp.eq.s32.totalorder %s88, 3
      %p254 = scmp.ne.s32.totalorder %s249, %s251
      %p255 = scmp.eq.s32.totalorder %s88, 0
      %p256 = por %p254, %p255
      %p257 = scmp.ne.s32.totalorder %s249, %s251
      %p258 = scmp.eq.s32.totalorder %s93, 3
      %p259 = por %p257, %p258
      %p260 = scmp.ne.s32.totalorder %s251, %s252
      %p261 = scmp.eq.s32.totalorder %s93, 0
      %p262 = por %p260, %p261
      %p263 = scmp.ne.s32.totalorder %s251, %s252
      %p264 = scmp.eq.s32.totalorder %s94, 3
      %p265 = por %p263, %p264
      %p267 = scmp.ne.s32.totalorder %s252, %s266
      %p268 = scmp.eq.s32.totalorder %s94, 0
      %p269 = por %p267, %p268
      %s271 = sadd.s32 %s270, 1
      %p274 = scmp.eq.s32.totalorder %s88, 3
      %p275 = scmp.ne.s32.totalorder %s270, %s272
      %p276 = scmp.eq.s32.totalorder %s88, 0
      %p277 = por %p275, %p276
      %p278 = scmp.ne.s32.totalorder %s270, %s272
      %p279 = scmp.eq.s32.totalorder %s93, 3
      %p280 = por %p278, %p279
      %p281 = scmp.ne.s32.totalorder %s272, %s273
      %p282 = scmp.eq.s32.totalorder %s93, 0
      %p283 = por %p281, %p282
      %p284 = scmp.ne.s32.totalorder %s272, %s273
      %p285 = scmp.eq.s32.totalorder %s94, 3
      %p286 = por %p284, %p285
      %p288 = scmp.ne.s32.totalorder %s273, %s287
      %p289 = scmp.eq.s32.totalorder %s94, 0
      %p290 = por %p288, %p289
      %s292 = sadd.s32 %s291, 1
      %p295 = scmp.eq.s32.totalorder %s88, 3
      %p296 = scmp.ne.s32.totalorder %s291, %s293
      %p297 = scmp.eq.s32.totalorder %s88, 0
      %p298 = por %p296, %p297
      %p299 = scmp.ne.s32.totalorder %s291, %s293
      %p300 = scmp.eq.s32.totalorder %s93, 3
      %p301 = por %p299, %p300
      %p302 = scmp.ne.s32.totalorder %s293, %s294
      %p303 = scmp.eq.s32.totalorder %s93, 0
      %p304 = por %p302, %p303
      %p305 = scmp.ne.s32.totalorder %s293, %s294
      %p306 = scmp.eq.s32.totalorder %s94, 3
      %p307 = por %p305, %p306
      %p309 = scmp.ne.s32.totalorder %s294, %s308
      %p310 = scmp.eq.s32.totalorder %s94, 0
      %p311 = por %p309, %p310
      %s313 = sadd.s32 %s312, 1
      %p316 = scmp.eq.s32.totalorder %s88, 3
      %p317 = scmp.ne.s32.totalorder %s312, %s314
      %p318 = scmp.eq.s32.totalorder %s88, 0
      %p319 = por %p317, %p318
      %p320 = scmp.ne.s32.totalorder %s312, %s314
      %p321 = scmp.eq.s32.totalorder %s93, 3
      %p322 = por %p320, %p321
      %p323 = scmp.ne.s32.totalorder %s314, %s315
      %p324 = scmp.eq.s32.totalorder %s93, 0
      %p325 = por %p323, %p324
      %p326 = scmp.ne.s32.totalorder %s314, %s315
      %p327 = scmp.eq.s32.totalorder %s94, 3
      %p328 = por %p326, %p327
      %p330 = scmp.ne.s32.totalorder %s315, %s329
      %p331 = scmp.eq.s32.totalorder %s94, 0
      %p332 = por %p330, %p331
      %s334 = sadd.s32 %s333, 1
      %p337 = scmp.eq.s32.totalorder %s88, 3
      %p338 = scmp.ne.s32.totalorder %s333, %s335
      %p339 = scmp.eq.s32.totalorder %s88, 0
      %p340 = por %p338, %p339
      %p341 = scmp.ne.s32.totalorder %s333, %s335
      %p342 = scmp.eq.s32.totalorder %s93, 3
      %p343 = por %p341, %p342
      %p344 = scmp.ne.s32.totalorder %s335, %s336
      %p345 = scmp.eq.s32.totalorder %s93, 0
      %p346 = por %p344, %p345
      %p347 = scmp.ne.s32.totalorder %s335, %s336
      %p348 = scmp.eq.s32.totalorder %s94, 3
      %p349 = por %p347, %p348
      %p351 = scmp.ne.s32.totalorder %s336, %s350
      %p352 = scmp.eq.s32.totalorder %s94, 0
      %p353 = por %p351, %p352
      %s355 = sadd.s32 %s354, 1
      %p358 = scmp.eq.s32.totalorder %s88, 3
      %p359 = scmp.ne.s32.totalorder %s354, %s356
      %p360 = scmp.eq.s32.totalorder %s88, 0
      %p361 = por %p359, %p360
      %p362 = scmp.ne.s32.totalorder %s354, %s356
      %p363 = scmp.eq.s32.totalorder %s93, 3
      %p364 = por %p362, %p363
      %p365 = scmp.ne.s32.totalorder %s356, %s357
      %p366 = scmp.eq.s32.totalorder %s93, 0
      %p367 = por %p365, %p366
      %p368 = scmp.ne.s32.totalorder %s356, %s357
      %p369 = scmp.eq.s32.totalorder %s94, 3
      %p370 = por %p368, %p369
      %p372 = scmp.ne.s32.totalorder %s357, %s371
      %p373 = scmp.eq.s32.totalorder %s94, 0
      %p374 = por %p372, %p373
      %s376 = sadd.s32 %s375, 1
      %p379 = scmp.eq.s32.totalorder %s88, 3
      %p380 = scmp.ne.s32.totalorder %s375, %s377
      %p381 = scmp.eq.s32.totalorder %s88, 0
      %p382 = por %p380, %p381
      %p383 = scmp.ne.s32.totalorder %s375, %s377
      %p384 = scmp.eq.s32.totalorder %s93, 3
      %p385 = por %p383, %p384
      %p386 = scmp.ne.s32.totalorder %s377, %s378
      %p387 = scmp.eq.s32.totalorder %s93, 0
      %p388 = por %p386, %p387
      %p389 = scmp.ne.s32.totalorder %s377, %s378
      %p390 = scmp.eq.s32.totalorder %s94, 3
      %p391 = por %p389, %p390
      %p393 = scmp.ne.s32.totalorder %s378, %s392
      %p394 = scmp.eq.s32.totalorder %s94, 0
      %p395 = por %p393, %p394
      %s397 = sadd.s32 %s396, 1
      %p400 = scmp.eq.s32.totalorder %s88, 3
      %p401 = scmp.ne.s32.totalorder %s396, %s398
      %p402 = scmp.eq.s32.totalorder %s88, 0
      %p403 = por %p401, %p402
      %p404 = scmp.ne.s32.totalorder %s396, %s398
      %p405 = scmp.eq.s32.totalorder %s93, 3
      %p406 = por %p404, %p405
      %p407 = scmp.ne.s32.totalorder %s398, %s399
      %p408 = scmp.eq.s32.totalorder %s93, 0
      %p409 = por %p407, %p408
      %p410 = scmp.ne.s32.totalorder %s398, %s399
      %p411 = scmp.eq.s32.totalorder %s94, 3
      %p412 = por %p410, %p411
      %p414 = scmp.ne.s32.totalorder %s399, %s413
      %p415 = scmp.eq.s32.totalorder %s94, 0
      %p416 = por %p414, %p415
      %s418 = sadd.s32 %s417, 1
      %p421 = scmp.eq.s32.totalorder %s88, 3
      %p422 = scmp.ne.s32.totalorder %s417, %s419
      %p423 = scmp.eq.s32.totalorder %s88, 0
      %p424 = por %p422, %p423
      %p425 = scmp.ne.s32.totalorder %s417, %s419
      %p426 = scmp.eq.s32.totalorder %s93, 3
      %p427 = por %p425, %p426
      %p428 = scmp.ne.s32.totalorder %s419, %s420
      %p429 = scmp.eq.s32.totalorder %s93, 0
      %p430 = por %p428, %p429
      %p431 = scmp.ne.s32.totalorder %s419, %s420
      %p432 = scmp.eq.s32.totalorder %s94, 3
      %p433 = por %p431, %p432
      %p435 = scmp.ne.s32.totalorder %s420, %s434
      %p436 = scmp.eq.s32.totalorder %s94, 0
      %p437 = por %p435, %p436
      %s439 = sadd.s32 %s438, 1
      %p442 = scmp.eq.s32.totalorder %s88, 3
      %p443 = scmp.ne.s32.totalorder %s438, %s440
      %p444 = scmp.eq.s32.totalorder %s88, 0
      %p445 = por %p443, %p444
      %p446 = scmp.ne.s32.totalorder %s438, %s440
      %p447 = scmp.eq.s32.totalorder %s93, 3
      %p448 = por %p446, %p447
      %p449 = scmp.ne.s32.totalorder %s440, %s441
      %p450 = scmp.eq.s32.totalorder %s93, 0
      %p451 = por %p449, %p450
      %p452 = scmp.ne.s32.totalorder %s440, %s441
      %p453 = scmp.eq.s32.totalorder %s94, 3
      %p454 = por %p452, %p453
      %p456 = scmp.ne.s32.totalorder %s441, %s455
      %p457 = scmp.eq.s32.totalorder %s94, 0
      %p458 = por %p456, %p457
      %s460 = sadd.s32 %s459, 1
      %p463 = scmp.eq.s32.totalorder %s88, 3
      %p464 = scmp.ne.s32.totalorder %s459, %s461
      %p465 = scmp.eq.s32.totalorder %s88, 0
      %p466 = por %p464, %p465
      %p467 = scmp.ne.s32.totalorder %s459, %s461
      %p468 = scmp.eq.s32.totalorder %s93, 3
      %p469 = por %p467, %p468
      %p470 = scmp.ne.s32.totalorder %s461, %s462
      %p471 = scmp.eq.s32.totalorder %s93, 0
      %p472 = por %p470, %p471
      %p473 = scmp.ne.s32.totalorder %s461, %s462
      %p474 = scmp.eq.s32.totalorder %s94, 3
      %p475 = por %p473, %p474
      %p477 = scmp.ne.s32.totalorder %s462, %s476
      %p478 = scmp.eq.s32.totalorder %s94, 0
      %p479 = por %p477, %p478
      %s481 = sadd.s32 %s480, 1
      %p484 = scmp.eq.s32.totalorder %s88, 3
      %p485 = scmp.ne.s32.totalorder %s480, %s482
      %p486 = scmp.eq.s32.totalorder %s88, 0
      %p487 = por %p485, %p486
      %p488 = scmp.ne.s32.totalorder %s480, %s482
      %p489 = scmp.eq.s32.totalorder %s93, 3
      %p490 = por %p488, %p489
      %p491 = scmp.ne.s32.totalorder %s482, %s483
      %p492 = scmp.eq.s32.totalorder %s93, 0
      %p493 = por %p491, %p492
      %p494 = scmp.ne.s32.totalorder %s482, %s483
      %p495 = scmp.eq.s32.totalorder %s94, 3
      %p496 = por %p494, %p495
      %p498 = scmp.ne.s32.totalorder %s483, %s497
      %p499 = scmp.eq.s32.totalorder %s94, 0
      %p500 = por %p498, %p499
      %s501 = ssub.s32 %s96, %s103
      %p502 = scmp.eq.s32.totalorder %s501, 0
      %s504 = sadd.s32 %s503, 1
      %s505 = scalar_select %p502, %s503, %s504
      %p508 = pneg %p502
      %p509 = scmp.eq.s32.totalorder %s88, 3
      %p510 = por %p508, %p509
      %p511 = scmp.ne.s32.totalorder %s503, %s506
      %p512 = scmp.eq.s32.totalorder %s88, 0
      %p513 = por %p511, %p512
      %p514 = scmp.ne.s32.totalorder %s503, %s506
      %p515 = scmp.eq.s32.totalorder %s93, 3
      %p516 = por %p514, %p515
      %p517 = scmp.ne.s32.totalorder %s506, %s507
      %p518 = scmp.eq.s32.totalorder %s93, 0
      %p519 = por %p517, %p518
      %p520 = scmp.ne.s32.totalorder %s506, %s507
      %p521 = scmp.eq.s32.totalorder %s94, 3
      %p522 = por %p520, %p521
      %p524 = scmp.ne.s32.totalorder %s507, %s523
      %p525 = scmp.eq.s32.totalorder %s94, 0
      %p526 = por %p524, %p525
      %s527 = ssub.s32 %s96, %s103
      %p528 = scmp.eq.s32.totalorder %s527, 0
      %s530 = sadd.s32 %s529, 1
      %s531 = scalar_select %p528, %s529, %s530
      %p534 = pneg %p528
      %p535 = scmp.eq.s32.totalorder %s88, 3
      %p536 = por %p534, %p535
      %p537 = scmp.ne.s32.totalorder %s529, %s532
      %p538 = scmp.eq.s32.totalorder %s88, 0
      %p539 = por %p537, %p538
      %p540 = scmp.ne.s32.totalorder %s529, %s532
      %p541 = scmp.eq.s32.totalorder %s93, 3
      %p542 = por %p540, %p541
      %p543 = scmp.ne.s32.totalorder %s532, %s533
      %p544 = scmp.eq.s32.totalorder %s93, 0
      %p545 = por %p543, %p544
      %p546 = scmp.ne.s32.totalorder %s532, %s533
      %p547 = scmp.eq.s32.totalorder %s94, 3
      %p548 = por %p546, %p547
      %p550 = scmp.ne.s32.totalorder %s533, %s549
      %p551 = scmp.eq.s32.totalorder %s94, 0
      %p552 = por %p550, %p551
      %s553 = ssub.s32 %s96, %s103
      %p554 = scmp.eq.s32.totalorder %s553, 0
      %s556 = sadd.s32 %s555, 1
      %s557 = scalar_select %p554, %s555, %s556
      %p560 = pneg %p554
      %p561 = scmp.eq.s32.totalorder %s88, 3
      %p562 = por %p560, %p561
      %p563 = scmp.ne.s32.totalorder %s555, %s558
      %p564 = scmp.eq.s32.totalorder %s88, 0
      %p565 = por %p563, %p564
      %p566 = scmp.ne.s32.totalorder %s555, %s558
      %p567 = scmp.eq.s32.totalorder %s93, 3
      %p568 = por %p566, %p567
      %p569 = scmp.ne.s32.totalorder %s558, %s559
      %p570 = scmp.eq.s32.totalorder %s93, 0
      %p571 = por %p569, %p570
      %p572 = scmp.ne.s32.totalorder %s558, %s559
      %p573 = scmp.eq.s32.totalorder %s94, 3
      %p574 = por %p572, %p573
      %p576 = scmp.ne.s32.totalorder %s559, %s575
      %p577 = scmp.eq.s32.totalorder %s94, 0
      %p578 = por %p576, %p577
      %s579 = ssub.s32 %s96, %s103
      %p580 = scmp.eq.s32.totalorder %s579, 0
      %s582 = sadd.s32 %s581, 1
      %s583 = scalar_select %p580, %s581, %s582
      %p586 = pneg %p580
      %p587 = scmp.eq.s32.totalorder %s88, 3
      %p588 = por %p586, %p587
      %p589 = scmp.ne.s32.totalorder %s581, %s584
      %p590 = scmp.eq.s32.totalorder %s88, 0
      %p591 = por %p589, %p590
      %p592 = scmp.ne.s32.totalorder %s581, %s584
      %p593 = scmp.eq.s32.totalorder %s93, 3
      %p594 = por %p592, %p593
      %p595 = scmp.ne.s32.totalorder %s584, %s585
      %p596 = scmp.eq.s32.totalorder %s93, 0
      %p597 = por %p595, %p596
      %p598 = scmp.ne.s32.totalorder %s584, %s585
      %p599 = scmp.eq.s32.totalorder %s94, 3
      %p600 = por %p598, %p599
      %p602 = scmp.ne.s32.totalorder %s585, %s601
      %p603 = scmp.eq.s32.totalorder %s94, 0
      %p604 = por %p602, %p603
      %s605 = ssub.s32 %s96, %s103
      %p606 = scmp.eq.s32.totalorder %s605, 0
      %s608 = sadd.s32 %s607, 1
      %s609 = scalar_select %p606, %s607, %s608
      %p612 = pneg %p606
      %p613 = scmp.eq.s32.totalorder %s88, 3
      %p614 = por %p612, %p613
      %p615 = scmp.ne.s32.totalorder %s607, %s610
      %p616 = scmp.eq.s32.totalorder %s88, 0
      %p617 = por %p615, %p616
      %p618 = scmp.ne.s32.totalorder %s607, %s610
      %p619 = scmp.eq.s32.totalorder %s93, 3
      %p620 = por %p618, %p619
      %p621 = scmp.ne.s32.totalorder %s610, %s611
      %p622 = scmp.eq.s32.totalorder %s93, 0
      %p623 = por %p621, %p622
      %p624 = scmp.ne.s32.totalorder %s610, %s611
      %p625 = scmp.eq.s32.totalorder %s94, 3
      %p626 = por %p624, %p625
      %p628 = scmp.ne.s32.totalorder %s611, %s627
      %p629 = scmp.eq.s32.totalorder %s94, 0
      %p630 = por %p628, %p629
      %s631 = ssub.s32 %s96, %s103
      %p632 = scmp.eq.s32.totalorder %s631, 0
      %s634 = sadd.s32 %s633, 1
      %s635 = scalar_select %p632, %s633, %s634
      %p638 = pneg %p632
      %p639 = scmp.eq.s32.totalorder %s88, 3
      %p640 = por %p638, %p639
      %p641 = scmp.ne.s32.totalorder %s633, %s636
      %p642 = scmp.eq.s32.totalorder %s88, 0
      %p643 = por %p641, %p642
      %p644 = scmp.ne.s32.totalorder %s633, %s636
      %p645 = scmp.eq.s32.totalorder %s93, 3
      %p646 = por %p644, %p645
      %p647 = scmp.ne.s32.totalorder %s636, %s637
      %p648 = scmp.eq.s32.totalorder %s93, 0
      %p649 = por %p647, %p648
      %p650 = scmp.ne.s32.totalorder %s636, %s637
      %p651 = scmp.eq.s32.totalorder %s94, 3
      %p652 = por %p650, %p651
      %p654 = scmp.ne.s32.totalorder %s637, %s653
      %p655 = scmp.eq.s32.totalorder %s94, 0
      %p656 = por %p654, %p655
      %s657 = ssub.s32 %s96, %s103
      %p658 = scmp.eq.s32.totalorder %s657, 0
      %s660 = sadd.s32 %s659, 1
      %s661 = scalar_select %p658, %s659, %s660
      %p664 = pneg %p658
      %p665 = scmp.eq.s32.totalorder %s88, 3
      %p666 = por %p664, %p665
      %p667 = scmp.ne.s32.totalorder %s659, %s662
      %p668 = scmp.eq.s32.totalorder %s88, 0
      %p669 = por %p667, %p668
      %p670 = scmp.ne.s32.totalorder %s659, %s662
      %p671 = scmp.eq.s32.totalorder %s93, 3
      %p672 = por %p670, %p671
      %p673 = scmp.ne.s32.totalorder %s662, %s663
      %p674 = scmp.eq.s32.totalorder %s93, 0
      %p675 = por %p673, %p674
      %p676 = scmp.ne.s32.totalorder %s662, %s663
      %p677 = scmp.eq.s32.totalorder %s94, 3
      %p678 = por %p676, %p677
      %p680 = scmp.ne.s32.totalorder %s663, %s679
      %p681 = scmp.eq.s32.totalorder %s94, 0
      %p682 = por %p680, %p681
      %s683 = ssub.s32 %s96, %s103
      %p684 = scmp.eq.s32.totalorder %s683, 0
      %s686 = sadd.s32 %s685, 1
      %s687 = scalar_select %p684, %s685, %s686
      %p690 = pneg %p684
      %p691 = scmp.eq.s32.totalorder %s88, 3
      %p692 = por %p690, %p691
      %p693 = scmp.ne.s32.totalorder %s685, %s688
      %p694 = scmp.eq.s32.totalorder %s88, 0
      %p695 = por %p693, %p694
      %p696 = scmp.ne.s32.totalorder %s685, %s688
      %p697 = scmp.eq.s32.totalorder %s93, 3
      %p698 = por %p696, %p697
      %p699 = scmp.ne.s32.totalorder %s688, %s689
      %p700 = scmp.eq.s32.totalorder %s93, 0
      %p701 = por %p699, %p700
      %p702 = scmp.ne.s32.totalorder %s688, %s689
      %p703 = scmp.eq.s32.totalorder %s94, 3
      %p704 = por %p702, %p703
      %p706 = scmp.ne.s32.totalorder %s689, %s705
      %p707 = scmp.eq.s32.totalorder %s94, 0
      %p708 = por %p706, %p707
      %s709 = ssub.s32 %s96, %s103
      %p710 = scmp.eq.s32.totalorder %s709, 0
      %s712 = sadd.s32 %s711, 1
      %s713 = scalar_select %p710, %s711, %s712
      %p716 = pneg %p710
      %p717 = scmp.eq.s32.totalorder %s88, 3
      %p718 = por %p716, %p717
      %p719 = scmp.ne.s32.totalorder %s711, %s714
      %p720 = scmp.eq.s32.totalorder %s88, 0
      %p721 = por %p719, %p720
      %p722 = scmp.ne.s32.totalorder %s711, %s714
      %p723 = scmp.eq.s32.totalorder %s93, 3
      %p724 = por %p722, %p723
      %p725 = scmp.ne.s32.totalorder %s714, %s715
      %p726 = scmp.eq.s32.totalorder %s93, 0
      %p727 = por %p725, %p726
      %p728 = scmp.ne.s32.totalorder %s714, %s715
      %p729 = scmp.eq.s32.totalorder %s94, 3
      %p730 = por %p728, %p729
      %p732 = scmp.ne.s32.totalorder %s715, %s731
      %p733 = scmp.eq.s32.totalorder %s94, 0
      %p734 = por %p732, %p733
      %s735 = ssub.s32 %s96, %s103
      %p736 = scmp.eq.s32.totalorder %s735, 0
      %s738 = sadd.s32 %s737, 1
      %s739 = scalar_select %p736, %s737, %s738
      %p742 = pneg %p736
      %p743 = scmp.eq.s32.totalorder %s88, 3
      %p744 = por %p742, %p743
      %p745 = scmp.ne.s32.totalorder %s737, %s740
      %p746 = scmp.eq.s32.totalorder %s88, 0
      %p747 = por %p745, %p746
      %p748 = scmp.ne.s32.totalorder %s737, %s740
      %p749 = scmp.eq.s32.totalorder %s93, 3
      %p750 = por %p748, %p749
      %p751 = scmp.ne.s32.totalorder %s740, %s741
      %p752 = scmp.eq.s32.totalorder %s93, 0
      %p753 = por %p751, %p752
      %p754 = scmp.ne.s32.totalorder %s740, %s741
      %p755 = scmp.eq.s32.totalorder %s94, 3
      %p756 = por %p754, %p755
      %p758 = scmp.ne.s32.totalorder %s741, %s757
      %p759 = scmp.eq.s32.totalorder %s94, 0
      %p760 = por %p758, %p759
      %s761 = ssub.s32 %s96, %s103
      %p762 = scmp.eq.s32.totalorder %s761, 0
      %s764 = sadd.s32 %s763, 1
      %s765 = scalar_select %p762, %s763, %s764
      %p768 = pneg %p762
      %p769 = scmp.eq.s32.totalorder %s88, 3
      %p770 = por %p768, %p769
      %p771 = scmp.ne.s32.totalorder %s763, %s766
      %p772 = scmp.eq.s32.totalorder %s88, 0
      %p773 = por %p771, %p772
      %p774 = scmp.ne.s32.totalorder %s763, %s766
      %p775 = scmp.eq.s32.totalorder %s93, 3
      %p776 = por %p774, %p775
      %p777 = scmp.ne.s32.totalorder %s766, %s767
      %p778 = scmp.eq.s32.totalorder %s93, 0
      %p779 = por %p777, %p778
      %p780 = scmp.ne.s32.totalorder %s766, %s767
      %p781 = scmp.eq.s32.totalorder %s94, 3
      %p782 = por %p780, %p781
      %p784 = scmp.ne.s32.totalorder %s767, %s783
      %p785 = scmp.eq.s32.totalorder %s94, 0
      %p786 = por %p784, %p785
      %s787 = ssub.s32 %s96, %s103
      %p788 = scmp.eq.s32.totalorder %s787, 0
      %s790 = sadd.s32 %s789, 1
      %s791 = scalar_select %p788, %s789, %s790
      %p794 = pneg %p788
      %p795 = scmp.eq.s32.totalorder %s88, 3
      %p796 = por %p794, %p795
      %p797 = scmp.ne.s32.totalorder %s789, %s792
      %p798 = scmp.eq.s32.totalorder %s88, 0
      %p799 = por %p797, %p798
      %p800 = scmp.ne.s32.totalorder %s789, %s792
      %p801 = scmp.eq.s32.totalorder %s93, 3
      %p802 = por %p800, %p801
      %p803 = scmp.ne.s32.totalorder %s792, %s793
      %p804 = scmp.eq.s32.totalorder %s93, 0
      %p805 = por %p803, %p804
      %p806 = scmp.ne.s32.totalorder %s792, %s793
      %p807 = scmp.eq.s32.totalorder %s94, 3
      %p808 = por %p806, %p807
      %p810 = scmp.ne.s32.totalorder %s793, %s809
      %p811 = scmp.eq.s32.totalorder %s94, 0
      %p812 = por %p810, %p811
      %s813 = ssub.s32 %s96, %s103
      %p814 = scmp.eq.s32.totalorder %s813, 0
      %s816 = sadd.s32 %s815, 1
      %s817 = scalar_select %p814, %s815, %s816
      %p820 = pneg %p814
      %p821 = scmp.eq.s32.totalorder %s88, 3
      %p822 = por %p820, %p821
      %p823 = scmp.ne.s32.totalorder %s815, %s818
      %p824 = scmp.eq.s32.totalorder %s88, 0
      %p825 = por %p823, %p824
      %p826 = scmp.ne.s32.totalorder %s815, %s818
      %p827 = scmp.eq.s32.totalorder %s93, 3
      %p828 = por %p826, %p827
      %p829 = scmp.ne.s32.totalorder %s818, %s819
      %p830 = scmp.eq.s32.totalorder %s93, 0
      %p831 = por %p829, %p830
      %p832 = scmp.ne.s32.totalorder %s818, %s819
      %p833 = scmp.eq.s32.totalorder %s94, 3
      %p834 = por %p832, %p833
      %p836 = scmp.ne.s32.totalorder %s819, %s835
      %p837 = scmp.eq.s32.totalorder %s94, 0
      %p838 = por %p836, %p837
      %s839 = ssub.s32 %s96, %s103
      %p840 = scmp.eq.s32.totalorder %s839, 0
      %s842 = sadd.s32 %s841, 1
      %s843 = scalar_select %p840, %s841, %s842
      %p846 = pneg %p840
      %p847 = scmp.eq.s32.totalorder %s88, 3
      %p848 = por %p846, %p847
      %p849 = scmp.ne.s32.totalorder %s841, %s844
      %p850 = scmp.eq.s32.totalorder %s88, 0
      %p851 = por %p849, %p850
      %p852 = scmp.ne.s32.totalorder %s841, %s844
      %p853 = scmp.eq.s32.totalorder %s93, 3
      %p854 = por %p852, %p853
      %p855 = scmp.ne.s32.totalorder %s844, %s845
      %p856 = scmp.eq.s32.totalorder %s93, 0
      %p857 = por %p855, %p856
      %p858 = scmp.ne.s32.totalorder %s844, %s845
      %p859 = scmp.eq.s32.totalorder %s94, 3
      %p860 = por %p858, %p859
      %p862 = scmp.ne.s32.totalorder %s845, %s861
      %p863 = scmp.eq.s32.totalorder %s94, 0
      %p864 = por %p862, %p863
      %s865 = ssub.s32 %s96, %s103
      %p866 = scmp.eq.s32.totalorder %s865, 0
      %s868 = sadd.s32 %s867, 1
      %s869 = scalar_select %p866, %s867, %s868
      %p872 = pneg %p866
      %p873 = scmp.eq.s32.totalorder %s88, 3
      %p874 = por %p872, %p873
      %p875 = scmp.ne.s32.totalorder %s867, %s870
      %p876 = scmp.eq.s32.totalorder %s88, 0
      %p877 = por %p875, %p876
      %p878 = scmp.ne.s32.totalorder %s867, %s870
      %p879 = scmp.eq.s32.totalorder %s93, 3
      %p880 = por %p878, %p879
      %p881 = scmp.ne.s32.totalorder %s870, %s871
      %p882 = scmp.eq.s32.totalorder %s93, 0
      %p883 = por %p881, %p882
      %p884 = scmp.ne.s32.totalorder %s870, %s871
      %p885 = scmp.eq.s32.totalorder %s94, 3
      %p886 = por %p884, %p885
      %p888 = scmp.ne.s32.totalorder %s871, %s887
      %p889 = scmp.eq.s32.totalorder %s94, 0
      %p890 = por %p888, %p889
      %s891 = ssub.s32 %s96, %s103
      %p892 = scmp.eq.s32.totalorder %s891, 0
      %s894 = sadd.s32 %s893, 1
      %s895 = scalar_select %p892, %s893, %s894
      %p898 = pneg %p892
      %p899 = scmp.eq.s32.totalorder %s88, 3
      %p900 = por %p898, %p899
      %p901 = scmp.ne.s32.totalorder %s893, %s896
      %p902 = scmp.eq.s32.totalorder %s88, 0
      %p903 = por %p901, %p902
      %p904 = scmp.ne.s32.totalorder %s893, %s896
      %p905 = scmp.eq.s32.totalorder %s93, 3
      %p906 = por %p904, %p905
      %p907 = scmp.ne.s32.totalorder %s896, %s897
      %p908 = scmp.eq.s32.totalorder %s93, 0
      %p909 = por %p907, %p908
      %p910 = scmp.ne.s32.totalorder %s896, %s897
      %p911 = scmp.eq.s32.totalorder %s94, 3
      %p912 = por %p910, %p911
      %p914 = scmp.ne.s32.totalorder %s897, %s913
      %p915 = scmp.eq.s32.totalorder %s94, 0
      %p916 = por %p914, %p915
      %s917 = ssub.s32 %s96, %s103
      %p918 = scmp.eq.s32.totalorder %s917, 0
      %s920 = sadd.s32 %s919, 1
      %s921 = scalar_select %p918, %s919, %s920
      %p924 = pneg %p918
      %p925 = scmp.eq.s32.totalorder %s88, 3
      %p926 = por %p924, %p925
      %p927 = scmp.ne.s32.totalorder %s919, %s922
      %p928 = scmp.eq.s32.totalorder %s88, 0
      %p929 = por %p927, %p928
      %p930 = scmp.ne.s32.totalorder %s919, %s922
      %p931 = scmp.eq.s32.totalorder %s93, 3
      %p932 = por %p930, %p931
      %p933 = scmp.ne.s32.totalorder %s922, %s923
      %p934 = scmp.eq.s32.totalorder %s93, 0
      %p935 = por %p933, %p934
      %p936 = scmp.ne.s32.totalorder %s922, %s923
      %p937 = scmp.eq.s32.totalorder %s94, 3
      %p938 = por %p936, %p937
      %p940 = scmp.ne.s32.totalorder %s923, %s939
      %p941 = scmp.eq.s32.totalorder %s94, 0
      %p942 = por %p940, %p941
      %s943 = ssub.s32 %s96, %s103
      %p944 = scmp.eq.s32.totalorder %s943, 0
      %s946 = sadd.s32 %s945, 1
      %s947 = scalar_select %p944, %s945, %s946
      %p950 = pneg %p944
      %p951 = scmp.eq.s32.totalorder %s88, 3
      %p952 = por %p950, %p951
      %p953 = scmp.ne.s32.totalorder %s945, %s948
      %p954 = scmp.eq.s32.totalorder %s88, 0
      %p955 = por %p953, %p954
      %p956 = scmp.ne.s32.totalorder %s945, %s948
      %p957 = scmp.eq.s32.totalorder %s93, 3
      %p958 = por %p956, %p957
      %p959 = scmp.ne.s32.totalorder %s948, %s949
      %p960 = scmp.eq.s32.totalorder %s93, 0
      %p961 = por %p959, %p960
      %p962 = scmp.ne.s32.totalorder %s948, %s949
      %p963 = scmp.eq.s32.totalorder %s94, 3
      %p964 = por %p962, %p963
      %p966 = scmp.ne.s32.totalorder %s949, %s965
      %p967 = scmp.eq.s32.totalorder %s94, 0
      %p968 = por %p966, %p967
      %s969 = ssub.s32 %s96, %s103
      %p970 = scmp.eq.s32.totalorder %s969, 0
      %s972 = sadd.s32 %s971, 1
      %s973 = scalar_select %p970, %s971, %s972
      %p976 = pneg %p970
      %p977 = scmp.eq.s32.totalorder %s88, 3
      %p978 = por %p976, %p977
      %p979 = scmp.ne.s32.totalorder %s971, %s974
      %p980 = scmp.eq.s32.totalorder %s88, 0
      %p981 = por %p979, %p980
      %p982 = scmp.ne.s32.totalorder %s971, %s974
      %p983 = scmp.eq.s32.totalorder %s93, 3
      %p984 = por %p982, %p983
      %p985 = scmp.ne.s32.totalorder %s974, %s975
      %p986 = scmp.eq.s32.totalorder %s93, 0
      %p987 = por %p985, %p986
      %p988 = scmp.ne.s32.totalorder %s974, %s975
      %p989 = scmp.eq.s32.totalorder %s94, 3
      %p990 = por %p988, %p989
      %p992 = scmp.ne.s32.totalorder %s975, %s991
      %p993 = scmp.eq.s32.totalorder %s94, 0
      %p994 = por %p992, %p993
      %s995 = ssub.s32 %s96, %s103
      %p996 = scmp.eq.s32.totalorder %s995, 0
      %s998 = sadd.s32 %s997, 1
      %s999 = scalar_select %p996, %s997, %s998
      %p1002 = pneg %p996
      %p1003 = scmp.eq.s32.totalorder %s88, 3
      %p1004 = por %p1002, %p1003
      %p1005 = scmp.ne.s32.totalorder %s997, %s1000
      %p1006 = scmp.eq.s32.totalorder %s88, 0
      %p1007 = por %p1005, %p1006
      %p1008 = scmp.ne.s32.totalorder %s997, %s1000
      %p1009 = scmp.eq.s32.totalorder %s93, 3
      %p1010 = por %p1008, %p1009
      %p1011 = scmp.ne.s32.totalorder %s1000, %s1001
      %p1012 = scmp.eq.s32.totalorder %s93, 0
      %p1013 = por %p1011, %p1012
      %p1014 = scmp.ne.s32.totalorder %s1000, %s1001
      %p1015 = scmp.eq.s32.totalorder %s94, 3
      %p1016 = por %p1014, %p1015
      %p1018 = scmp.ne.s32.totalorder %s1001, %s1017
      %p1019 = scmp.eq.s32.totalorder %s94, 0
      %p1020 = por %p1018, %p1019
      %s1021 = ssub.s32 %s95, %s107
      %p1022 = scmp.eq.s32.totalorder %s1021, 0
      %s1024 = sadd.s32 %s1023, 1
      %s1025 = scalar_select %p1022, %s1023, %s1024
      %p1028 = pneg %p1022
      %p1029 = scmp.eq.s32.totalorder %s88, 3
      %p1030 = por %p1028, %p1029
      %p1031 = scmp.ne.s32.totalorder %s1023, %s1026
      %p1032 = scmp.eq.s32.totalorder %s88, 0
      %p1033 = por %p1031, %p1032
      %p1034 = scmp.ne.s32.totalorder %s1023, %s1026
      %p1035 = scmp.eq.s32.totalorder %s93, 3
      %p1036 = por %p1034, %p1035
      %p1037 = scmp.ne.s32.totalorder %s1026, %s1027
      %p1038 = scmp.eq.s32.totalorder %s93, 0
      %p1039 = por %p1037, %p1038
      %p1040 = scmp.ne.s32.totalorder %s1026, %s1027
      %p1041 = scmp.eq.s32.totalorder %s94, 3
      %p1042 = por %p1040, %p1041
      %p1044 = scmp.ne.s32.totalorder %s1027, %s1043
      %p1045 = scmp.eq.s32.totalorder %s94, 0
      %p1046 = por %p1044, %p1045
      %p1047 = scmp.le.s32.totalorder 1, %s88
      %p1048 = scmp.lt.s32.totalorder %s88, 5
      %p1049 = pnand %p1047, %p1048
      %p1050 = pneg %p1049
      // Predicated region
      $region9: #{tpu_custom_call.1} parent=5 // pred_check
        _
      $region10: #{tpu_custom_call.1} parent=5 // pred_check_branch
        %1052 = sbr.rel (%p1049) target = $region12
      $region11: #{tpu_custom_call.1} parent=5 // pred_region
        %s1053 = ssub.s32 %s88, 1
        // Predicated region
        $region13: #{tpu_custom_call.1} parent=11 // pred_check
          %p1054 = pneg %p199
        $region14: #{tpu_custom_call.1} parent=11 // pred_check_branch
          %1056 = sbr.rel (%p1054) target = $region16
        $region15: #{tpu_custom_call.1} parent=11 // pred_region
          %s1058 = ssub.s32 64, 64
          %1059 = vsyncadd [#allocation6], %s1058
          %s1061 = sshll.u32 [#allocation5], 4
          %s1062 = int_to_ptr.vmem [resolvable:$true] %s1061
          %1064 = dma.hbm_to_vmem [thread:$0]  %s7, 64, %s1062, [#allocation6]
        $region16: #{tpu_custom_call.1} parent=11 // pred_fallthru
          _
        // Predicated region
        $region17: #{tpu_custom_call.1} parent=11 // pred_check
          %p1065 = pneg %p220
        $region18: #{tpu_custom_call.1} parent=11 // pred_check_branch
          %1067 = sbr.rel (%p1065) target = $region20
        $region19: #{tpu_custom_call.1} parent=11 // pred_region
          %s1069 = ssub.s32 32, 32
          %1070 = vsyncadd [#allocation6], %s1069
          %s1072 = sshll.u32 [#allocation7], 4
          %s1073 = int_to_ptr.vmem [resolvable:$true] %s1072
          %1075 = dma.hbm_to_vmem [thread:$0]  %s9, 32, %s1073, [#allocation6]
        $region20: #{tpu_custom_call.1} parent=11 // pred_fallthru
          _
        // Predicated region
        $region21: #{tpu_custom_call.1} parent=11 // pred_check
          %p1076 = pneg %p241
        $region22: #{tpu_custom_call.1} parent=11 // pred_check_branch
          %1078 = sbr.rel (%p1076) target = $region24
        $region23: #{tpu_custom_call.1} parent=11 // pred_region
          %s1080 = ssub.s32 16, 16
          %1081 = vsyncadd [#allocation9], %s1080
          %s1083 = sshll.u32 [#allocation8], 4
          %s1084 = int_to_ptr.vmem [resolvable:$true] %s1083
          %1086 = dma.hbm_to_vmem [thread:$0]  %s11, 16, %s1084, [#allocation9]
        $region24: #{tpu_custom_call.1} parent=11 // pred_fallthru
          _
        // Predicated region
        $region25: #{tpu_custom_call.1} parent=11 // pred_check
          %p1087 = pneg %p262
        $region26: #{tpu_custom_call.1} parent=11 // pred_check_branch
          %1089 = sbr.rel (%p1087) target = $region28
        $region27: #{tpu_custom_call.1} parent=11 // pred_region
          _
        $region28: #{tpu_custom_call.1} parent=11 // pred_fallthru
          _
        // Predicated region
        $region29: #{tpu_custom_call.1} parent=11 // pred_check
          %p1090 = pneg %p283
        $region30: #{tpu_custom_call.1} parent=11 // pred_check_branch
          %1092 = sbr.rel (%p1090) target = $region32
        $region31: #{tpu_custom_call.1} parent=11 // pred_region
          %s1094 = ssub.s32 16, 16
          %1095 = vsyncadd [#allocation9], %s1094
          %s1097 = sshll.u32 [#allocation10], 4
          %s1098 = int_to_ptr.vmem [resolvable:$true] %s1097
          %1100 = dma.hbm_to_vmem [thread:$0]  %s15, 16, %s1098, [#allocation9]
        $region32: #{tpu_custom_call.1} parent=11 // pred_fallthru
          _
        // Predicated region
        $region33: #{tpu_custom_call.1} parent=11 // pred_check
          %p1101 = pneg %p304
        $region34: #{tpu_custom_call.1} parent=11 // pred_check_branch
          %1103 = sbr.rel (%p1101) target = $region36
        $region35: #{tpu_custom_call.1} parent=11 // pred_region
          _
        $region36: #{tpu_custom_call.1} parent=11 // pred_fallthru
          _
        // Predicated region
        $region37: #{tpu_custom_call.1} parent=11 // pred_check
          %p1104 = pneg %p325
        $region38: #{tpu_custom_call.1} parent=11 // pred_check_branch
          %1106 = sbr.rel (%p1104) target = $region40
        $region39: #{tpu_custom_call.1} parent=11 // pred_region
          _
        $region40: #{tpu_custom_call.1} parent=11 // pred_fallthru
          _
        // Predicated region
        $region41: #{tpu_custom_call.1} parent=11 // pred_check
          %p1107 = pneg %p346
        $region42: #{tpu_custom_call.1} parent=11 // pred_check_branch
          %1109 = sbr.rel (%p1107) target = $region44
        $region43: #{tpu_custom_call.1} parent=11 // pred_region
          _
        $region44: #{tpu_custom_call.1} parent=11 // pred_fallthru
          _
        // Predicated region
        $region45: #{tpu_custom_call.1} parent=11 // pred_check
          %p1110 = pneg %p367
        $region46: #{tpu_custom_call.1} parent=11 // pred_check_branch
          %1112 = sbr.rel (%p1110) target = $region48
        $region47: #{tpu_custom_call.1} parent=11 // pred_region
          _
        $region48: #{tpu_custom_call.1} parent=11 // pred_fallthru
          _
        // Predicated region
        $region49: #{tpu_custom_call.1} parent=11 // pred_check
          %p1113 = pneg %p388
        $region50: #{tpu_custom_call.1} parent=11 // pred_check_branch
          %1115 = sbr.rel (%p1113) target = $region52
        $region51: #{tpu_custom_call.1} parent=11 // pred_region
          _
        $region52: #{tpu_custom_call.1} parent=11 // pred_fallthru
          _
        // Predicated region
        $region53: #{tpu_custom_call.1} parent=11 // pred_check
          %p1116 = pneg %p409
        $region54: #{tpu_custom_call.1} parent=11 // pred_check_branch
          %1118 = sbr.rel (%p1116) target = $region56
        $region55: #{tpu_custom_call.1} parent=11 // pred_region
          _
        $region56: #{tpu_custom_call.1} parent=11 // pred_fallthru
          _
        // Predicated region
        $region57: #{tpu_custom_call.1} parent=11 // pred_check
          %p1119 = pneg %p430
        $region58: #{tpu_custom_call.1} parent=11 // pred_check_branch
          %1121 = sbr.rel (%p1119) target = $region60
        $region59: #{tpu_custom_call.1} parent=11 // pred_region
          _
        $region60: #{tpu_custom_call.1} parent=11 // pred_fallthru
          _
        // Predicated region
        $region61: #{tpu_custom_call.1} parent=11 // pred_check
          %p1122 = pneg %p451
        $region62: #{tpu_custom_call.1} parent=11 // pred_check_branch
          %1124 = sbr.rel (%p1122) target = $region64
        $region63: #{tpu_custom_call.1} parent=11 // pred_region
          _
        $region64: #{tpu_custom_call.1} parent=11 // pred_fallthru
          _
        // Predicated region
        $region65: #{tpu_custom_call.1} parent=11 // pred_check
          %p1125 = pneg %p472
        $region66: #{tpu_custom_call.1} parent=11 // pred_check_branch
          %1127 = sbr.rel (%p1125) target = $region68
        $region67: #{tpu_custom_call.1} parent=11 // pred_region
          _
        $region68: #{tpu_custom_call.1} parent=11 // pred_fallthru
          _
        // Predicated region
        $region69: #{tpu_custom_call.1} parent=11 // pred_check
          %p1128 = pneg %p493
        $region70: #{tpu_custom_call.1} parent=11 // pred_check_branch
          %1130 = sbr.rel (%p1128) target = $region72
        $region71: #{tpu_custom_call.1} parent=11 // pred_region
          _
        $region72: #{tpu_custom_call.1} parent=11 // pred_fallthru
          _
      $region12: #{tpu_custom_call.1} parent=5 // pred_fallthru
        _
      %p1131 = scmp.lt.s32.totalorder %s88, 4
      // Predicated region
      $region73: #{tpu_custom_call.1} parent=5 // pred_check
        %p1132 = pneg %p1131
      $region74: #{tpu_custom_call.1} parent=5 // pred_check_branch
        %1134 = sbr.rel (%p1132) target = $region76
      $region75: #{tpu_custom_call.1} parent=5 // pred_region
        // Predicated region
        $region77: #{tpu_custom_call.1} parent=75 // pred_check
          %p1135 = pneg %p120
        $region78: #{tpu_custom_call.1} parent=75 // pred_check_branch
          %1137 = sbr.rel (%p1135) target = $region80
        $region79: #{tpu_custom_call.1} parent=75 // pred_region
          %p1138 = scmp.lt.s32.totalorder %s95, 1
          %s1139 = scalar_select %p1138, %s95, 1
          %s1140 = smul.addr %s1139, 4
          %s1141 = scalar_lea.vmem %s1, %s1140
        $region80: #{tpu_custom_call.1} parent=75 // pred_fallthru
          _
        // Predicated region
        $region81: #{tpu_custom_call.1} parent=75 // pred_check
          %p1142 = pneg %p146
        $region82: #{tpu_custom_call.1} parent=75 // pred_check_branch
          %1144 = sbr.rel (%p1142) target = $region84
        $region83: #{tpu_custom_call.1} parent=75 // pred_region
          %p1145 = scmp.lt.s32.totalorder %s95, 1
          %s1146 = scalar_select %p1145, %s95, 1
          %s1147 = smul.addr %s1146, 8
          %s1148 = scalar_lea.vmem %s3, %s1147
        $region84: #{tpu_custom_call.1} parent=75 // pred_fallthru
          _
        // Predicated region
        $region85: #{tpu_custom_call.1} parent=75 // pred_check
          %p1149 = pneg %p172
        $region86: #{tpu_custom_call.1} parent=75 // pred_check_branch
          %1151 = sbr.rel (%p1149) target = $region88
        $region87: #{tpu_custom_call.1} parent=75 // pred_region
          %s1152 = sand.u32 %s162, 1
          %s1153 = scalar_lea.sflag [#allocation4], %s1152
          %s1154 = sand.u32 %s162, 1
          %s1155 = scalar_lea.vmem [#allocation3], %s1154
          %s1157 = ssub.s32 16, 16
          %1158 = vsyncadd %s1153, %s1157
          %s1159 = smul.addr %s95, 16
          %s1160 = scalar_lea.hbm %s5, %s1159
          %s1162 = sshll.u32 %s1155, 4
          %s1163 = int_to_ptr.vmem [resolvable:$true] %s1162
          %1165 = dma.hbm_to_vmem [thread:$0]  %s1160, 16, %s1163, %s1153
        $region88: #{tpu_custom_call.1} parent=75 // pred_fallthru
          _
        // Predicated region
        $region89: #{tpu_custom_call.1} parent=75 // pred_check
          %p1166 = pneg %p513
        $region90: #{tpu_custom_call.1} parent=75 // pred_check_branch
          %1168 = sbr.rel (%p1166) target = $region92
        $region91: #{tpu_custom_call.1} parent=75 // pred_region
          %p1169 = scmp.lt.s32.totalorder %s96, 1
          %s1170 = scalar_select %p1169, %s96, 1
          %s1171 = smul.addr %s1170, 4
          %s1172 = smul.addr %s1171, 4
          %s1173 = scalar_lea.vmem %s37, %s1172
        $region92: #{tpu_custom_call.1} parent=75 // pred_fallthru
          _
        // Predicated region
        $region93: #{tpu_custom_call.1} parent=75 // pred_check
          %p1174 = pneg %p539
        $region94: #{tpu_custom_call.1} parent=75 // pred_check_branch
          %1176 = sbr.rel (%p1174) target = $region96
        $region95: #{tpu_custom_call.1} parent=75 // pred_region
          %p1177 = scmp.lt.s32.totalorder %s96, 1
          %s1178 = scalar_select %p1177, %s96, 1
          %s1179 = scalar_lea.vmem %s39, %s1178
        $region96: #{tpu_custom_call.1} parent=75 // pred_fallthru
          _
        // Predicated region
        $region97: #{tpu_custom_call.1} parent=75 // pred_check
          %p1180 = pneg %p565
        $region98: #{tpu_custom_call.1} parent=75 // pred_check_branch
          %1182 = sbr.rel (%p1180) target = $region100
        $region99: #{tpu_custom_call.1} parent=75 // pred_region
          %p1183 = scmp.lt.s32.totalorder %s96, 1
          %s1184 = scalar_select %p1183, %s96, 1
          %s1185 = smul.addr %s1184, 4
          %s1186 = smul.addr %s1185, 4
          %s1187 = scalar_lea.vmem %s41, %s1186
        $region100: #{tpu_custom_call.1} parent=75 // pred_fallthru
          _
        // Predicated region
        $region101: #{tpu_custom_call.1} parent=75 // pred_check
          %p1188 = pneg %p591
        $region102: #{tpu_custom_call.1} parent=75 // pred_check_branch
          %1190 = sbr.rel (%p1188) target = $region104
        $region103: #{tpu_custom_call.1} parent=75 // pred_region
          %p1191 = scmp.lt.s32.totalorder %s96, 1
          %s1192 = scalar_select %p1191, %s96, 1
          %s1193 = scalar_lea.vmem %s43, %s1192
        $region104: #{tpu_custom_call.1} parent=75 // pred_fallthru
          _
        // Predicated region
        $region105: #{tpu_custom_call.1} parent=75 // pred_check
          %p1194 = pneg %p617
        $region106: #{tpu_custom_call.1} parent=75 // pred_check_branch
          %1196 = sbr.rel (%p1194) target = $region108
        $region107: #{tpu_custom_call.1} parent=75 // pred_region
          %p1197 = scmp.lt.s32.totalorder %s96, 1
          %s1198 = scalar_select %p1197, %s96, 1
          %s1199 = smul.addr %s1198, 4
          %s1200 = smul.addr %s1199, 4
          %s1201 = scalar_lea.vmem %s45, %s1200
        $region108: #{tpu_custom_call.1} parent=75 // pred_fallthru
          _
        // Predicated region
        $region109: #{tpu_custom_call.1} parent=75 // pred_check
          %p1202 = pneg %p643
        $region110: #{tpu_custom_call.1} parent=75 // pred_check_branch
          %1204 = sbr.rel (%p1202) target = $region112
        $region111: #{tpu_custom_call.1} parent=75 // pred_region
          %p1205 = scmp.lt.s32.totalorder %s96, 1
          %s1206 = scalar_select %p1205, %s96, 1
          %s1207 = scalar_lea.vmem %s47, %s1206
        $region112: #{tpu_custom_call.1} parent=75 // pred_fallthru
          _
        // Predicated region
        $region113: #{tpu_custom_call.1} parent=75 // pred_check
          %p1208 = pneg %p669
        $region114: #{tpu_custom_call.1} parent=75 // pred_check_branch
          %1210 = sbr.rel (%p1208) target = $region116
        $region115: #{tpu_custom_call.1} parent=75 // pred_region
          %p1211 = scmp.lt.s32.totalorder %s96, 1
          %s1212 = scalar_select %p1211, %s96, 1
          %s1213 = smul.addr %s1212, 4
          %s1214 = smul.addr %s1213, 4
          %s1215 = scalar_lea.vmem %s49, %s1214
        $region116: #{tpu_custom_call.1} parent=75 // pred_fallthru
          _
        // Predicated region
        $region117: #{tpu_custom_call.1} parent=75 // pred_check
          %p1216 = pneg %p695
        $region118: #{tpu_custom_call.1} parent=75 // pred_check_branch
          %1218 = sbr.rel (%p1216) target = $region120
        $region119: #{tpu_custom_call.1} parent=75 // pred_region
          %p1219 = scmp.lt.s32.totalorder %s96, 1
          %s1220 = scalar_select %p1219, %s96, 1
          %s1221 = scalar_lea.vmem %s51, %s1220
        $region120: #{tpu_custom_call.1} parent=75 // pred_fallthru
          _
        // Predicated region
        $region121: #{tpu_custom_call.1} parent=75 // pred_check
          %p1222 = pneg %p721
        $region122: #{tpu_custom_call.1} parent=75 // pred_check_branch
          %1224 = sbr.rel (%p1222) target = $region124
        $region123: #{tpu_custom_call.1} parent=75 // pred_region
          %p1225 = scmp.lt.s32.totalorder %s96, 1
          %s1226 = scalar_select %p1225, %s96, 1
          %s1227 = smul.addr %s1226, 4
          %s1228 = smul.addr %s1227, 4
          %s1229 = scalar_lea.vmem %s53, %s1228
        $region124: #{tpu_custom_call.1} parent=75 // pred_fallthru
          _
        // Predicated region
        $region125: #{tpu_custom_call.1} parent=75 // pred_check
          %p1230 = pneg %p747
        $region126: #{tpu_custom_call.1} parent=75 // pred_check_branch
          %1232 = sbr.rel (%p1230) target = $region128
        $region127: #{tpu_custom_call.1} parent=75 // pred_region
          %p1233 = scmp.lt.s32.totalorder %s96, 1
          %s1234 = scalar_select %p1233, %s96, 1
          %s1235 = scalar_lea.vmem %s55, %s1234
        $region128: #{tpu_custom_call.1} parent=75 // pred_fallthru
          _
        // Predicated region
        $region129: #{tpu_custom_call.1} parent=75 // pred_check
          %p1236 = pneg %p773
        $region130: #{tpu_custom_call.1} parent=75 // pred_check_branch
          %1238 = sbr.rel (%p1236) target = $region132
        $region131: #{tpu_custom_call.1} parent=75 // pred_region
          %p1239 = scmp.lt.s32.totalorder %s96, 1
          %s1240 = scalar_select %p1239, %s96, 1
          %s1241 = smul.addr %s1240, 4
          %s1242 = smul.addr %s1241, 4
          %s1243 = scalar_lea.vmem %s57, %s1242
        $region132: #{tpu_custom_call.1} parent=75 // pred_fallthru
          _
        // Predicated region
        $region133: #{tpu_custom_call.1} parent=75 // pred_check
          %p1244 = pneg %p799
        $region134: #{tpu_custom_call.1} parent=75 // pred_check_branch
          %1246 = sbr.rel (%p1244) target = $region136
        $region135: #{tpu_custom_call.1} parent=75 // pred_region
          %p1247 = scmp.lt.s32.totalorder %s96, 1
          %s1248 = scalar_select %p1247, %s96, 1
          %s1249 = scalar_lea.vmem %s59, %s1248
        $region136: #{tpu_custom_call.1} parent=75 // pred_fallthru
          _
        // Predicated region
        $region137: #{tpu_custom_call.1} parent=75 // pred_check
          %p1250 = pneg %p825
        $region138: #{tpu_custom_call.1} parent=75 // pred_check_branch
          %1252 = sbr.rel (%p1250) target = $region140
        $region139: #{tpu_custom_call.1} parent=75 // pred_region
          %p1253 = scmp.lt.s32.totalorder %s96, 1
          %s1254 = scalar_select %p1253, %s96, 1
          %s1255 = smul.addr %s1254, 8
          %s1256 = smul.addr %s1255, 4
          %s1257 = scalar_lea.vmem %s61, %s1256
        $region140: #{tpu_custom_call.1} parent=75 // pred_fallthru
          _
        // Predicated region
        $region141: #{tpu_custom_call.1} parent=75 // pred_check
          %p1258 = pneg %p851
        $region142: #{tpu_custom_call.1} parent=75 // pred_check_branch
          %1260 = sbr.rel (%p1258) target = $region144
        $region143: #{tpu_custom_call.1} parent=75 // pred_region
          %p1261 = scmp.lt.s32.totalorder %s96, 1
          %s1262 = scalar_select %p1261, %s96, 1
          %s1263 = scalar_lea.vmem %s63, %s1262
        $region144: #{tpu_custom_call.1} parent=75 // pred_fallthru
          _
        // Predicated region
        $region145: #{tpu_custom_call.1} parent=75 // pred_check
          %p1264 = pneg %p877
        $region146: #{tpu_custom_call.1} parent=75 // pred_check_branch
          %1266 = sbr.rel (%p1264) target = $region148
        $region147: #{tpu_custom_call.1} parent=75 // pred_region
          %p1267 = scmp.lt.s32.totalorder %s96, 1
          %s1268 = scalar_select %p1267, %s96, 1
          %s1269 = scalar_lea.vmem %s65, %s1268
        $region148: #{tpu_custom_call.1} parent=75 // pred_fallthru
          _
        // Predicated region
        $region149: #{tpu_custom_call.1} parent=75 // pred_check
          %p1270 = pneg %p903
        $region150: #{tpu_custom_call.1} parent=75 // pred_check_branch
          %1272 = sbr.rel (%p1270) target = $region152
        $region151: #{tpu_custom_call.1} parent=75 // pred_region
          %p1273 = scmp.lt.s32.totalorder %s96, 1
          %s1274 = scalar_select %p1273, %s96, 1
          %s1275 = scalar_lea.vmem %s67, %s1274
        $region152: #{tpu_custom_call.1} parent=75 // pred_fallthru
          _
        // Predicated region
        $region153: #{tpu_custom_call.1} parent=75 // pred_check
          %p1276 = pneg %p929
        $region154: #{tpu_custom_call.1} parent=75 // pred_check_branch
          %1278 = sbr.rel (%p1276) target = $region156
        $region155: #{tpu_custom_call.1} parent=75 // pred_region
          %p1279 = scmp.lt.s32.totalorder %s96, 1
          %s1280 = scalar_select %p1279, %s96, 1
          %s1281 = scalar_lea.vmem %s69, %s1280
        $region156: #{tpu_custom_call.1} parent=75 // pred_fallthru
          _
        // Predicated region
        $region157: #{tpu_custom_call.1} parent=75 // pred_check
          %p1282 = pneg %p955
        $region158: #{tpu_custom_call.1} parent=75 // pred_check_branch
          %1284 = sbr.rel (%p1282) target = $region160
        $region159: #{tpu_custom_call.1} parent=75 // pred_region
          %p1285 = scmp.lt.s32.totalorder %s96, 1
          %s1286 = scalar_select %p1285, %s96, 1
          %s1287 = scalar_lea.vmem %s71, %s1286
        $region160: #{tpu_custom_call.1} parent=75 // pred_fallthru
          _
        // Predicated region
        $region161: #{tpu_custom_call.1} parent=75 // pred_check
          %p1288 = pneg %p981
        $region162: #{tpu_custom_call.1} parent=75 // pred_check_branch
          %1290 = sbr.rel (%p1288) target = $region164
        $region163: #{tpu_custom_call.1} parent=75 // pred_region
          %p1291 = scmp.lt.s32.totalorder %s96, 1
          %s1292 = scalar_select %p1291, %s96, 1
          %s1293 = scalar_lea.vmem %s73, %s1292
        $region164: #{tpu_custom_call.1} parent=75 // pred_fallthru
          _
        // Predicated region
        $region165: #{tpu_custom_call.1} parent=75 // pred_check
          %p1294 = pneg %p1007
        $region166: #{tpu_custom_call.1} parent=75 // pred_check_branch
          %1296 = sbr.rel (%p1294) target = $region168
        $region167: #{tpu_custom_call.1} parent=75 // pred_region
          %p1297 = scmp.lt.s32.totalorder %s96, 1
          %s1298 = scalar_select %p1297, %s96, 1
          %s1299 = scalar_lea.vmem %s75, %s1298
        $region168: #{tpu_custom_call.1} parent=75 // pred_fallthru
          _
      $region76: #{tpu_custom_call.1} parent=5 // pred_fallthru
        _
      %p1300 = scmp.le.s32.totalorder 1, %s88
      %p1301 = scmp.lt.s32.totalorder %s88, 5
      %p1302 = pnand %p1300, %p1301
      %p1303 = pneg %p1302
      // Predicated region
      $region169: #{tpu_custom_call.1} parent=5 // pred_check
        _
      $region170: #{tpu_custom_call.1} parent=5 // pred_check_branch
        %1305 = sbr.rel (%p1302) target = $region172
      $region171: #{tpu_custom_call.1} parent=5 // pred_region
        %s1306 = ssub.s32 %s88, 1
        %s1307 = sand.u32 %s165, 1
        %s1308 = scalar_lea.sflag [#allocation4], %s1307
        %s1309 = sand.u32 %s165, 1
        %s1310 = scalar_lea.vmem [#allocation3], %s1309
        // Predicated region
        $region173: #{tpu_custom_call.1} parent=171 // pred_check
          %p1311 = pneg %p178
        $region174: #{tpu_custom_call.1} parent=171 // pred_check_branch
          %1313 = sbr.rel (%p1311) target = $region176
        $region175: #{tpu_custom_call.1} parent=171 // pred_region
          %1314 = dma.done %s1308, 16
        $region176: #{tpu_custom_call.1} parent=171 // pred_fallthru
          _
        // Predicated region
        $region177: #{tpu_custom_call.1} parent=171 // pred_check
          %p1315 = pneg %p199
        $region178: #{tpu_custom_call.1} parent=171 // pred_check_branch
          %1317 = sbr.rel (%p1315) target = $region180
        $region179: #{tpu_custom_call.1} parent=171 // pred_region
          %1318 = dma.done [#allocation6], 64
        $region180: #{tpu_custom_call.1} parent=171 // pred_fallthru
          _
        // Predicated region
        $region181: #{tpu_custom_call.1} parent=171 // pred_check
          %p1319 = pneg %p220
        $region182: #{tpu_custom_call.1} parent=171 // pred_check_branch
          %1321 = sbr.rel (%p1319) target = $region184
        $region183: #{tpu_custom_call.1} parent=171 // pred_region
          %1322 = dma.done [#allocation6], 32
        $region184: #{tpu_custom_call.1} parent=171 // pred_fallthru
          _
        // Predicated region
        $region185: #{tpu_custom_call.1} parent=171 // pred_check
          %p1323 = pneg %p241
        $region186: #{tpu_custom_call.1} parent=171 // pred_check_branch
          %1325 = sbr.rel (%p1323) target = $region188
        $region187: #{tpu_custom_call.1} parent=171 // pred_region
          %1326 = dma.done [#allocation9], 16
        $region188: #{tpu_custom_call.1} parent=171 // pred_fallthru
          _
        // Predicated region
        $region189: #{tpu_custom_call.1} parent=171 // pred_check
          %p1327 = pneg %p283
        $region190: #{tpu_custom_call.1} parent=171 // pred_check_branch
          %1329 = sbr.rel (%p1327) target = $region192
        $region191: #{tpu_custom_call.1} parent=171 // pred_region
          %1330 = dma.done [#allocation9], 16
        $region192: #{tpu_custom_call.1} parent=171 // pred_fallthru
          _
        %p1331 = scmp.lt.s32.totalorder %s97, 1
        %s1332 = scalar_select %p1331, %s97, 1
        %s1333 = smul.addr %s1332, 4
        %s1334 = scalar_lea.vmem %s1, %s1333
        %p1335 = pneg %p126
        %p1336 = pneg %p123
        %p1337 = scmp.lt.s32.totalorder %s97, 1
        %s1338 = scalar_select %p1337, %s97, 1
        %s1339 = smul.addr %s1338, 8
        %s1340 = scalar_lea.vmem %s3, %s1339
        %p1341 = pneg %p152
        %p1342 = pneg %p149
        %s1343 = sand.u32 %s165, 1
        %s1344 = scalar_lea.sflag [#allocation4], %s1343
        %s1345 = sand.u32 %s165, 1
        %s1346 = scalar_lea.vmem [#allocation3], %s1345
        %p1347 = pneg %p178
        %p1348 = pneg %p175
        %p1349 = pneg %p199
        %p1350 = pneg %p196
        %p1351 = pneg %p220
        %p1352 = pneg %p217
        %p1353 = pneg %p241
        %p1354 = pneg %p238
        %p1355 = pneg %p262
        %p1356 = pneg %p259
        %p1357 = pneg %p283
        %p1358 = pneg %p280
        %p1359 = pneg %p304
        %p1360 = pneg %p301
        %p1361 = pneg %p325
        %p1362 = pneg %p322
        %p1363 = pneg %p346
        %p1364 = pneg %p343
        %p1365 = pneg %p367
        %p1366 = pneg %p364
        %p1367 = pneg %p388
        %p1368 = pneg %p385
        %p1369 = pneg %p409
        %p1370 = pneg %p406
        %p1371 = pneg %p430
        %p1372 = pneg %p427
        %p1373 = pneg %p451
        %p1374 = pneg %p448
        %p1375 = pneg %p472
        %p1376 = pneg %p469
        %p1377 = pneg %p493
        %p1378 = pneg %p490
        %p1379 = scmp.lt.s32.totalorder %s98, 1
        %s1380 = scalar_select %p1379, %s98, 1
        %s1381 = smul.addr %s1380, 4
        %s1382 = smul.addr %s1381, 4
        %s1383 = scalar_lea.vmem %s37, %s1382
        %p1384 = pneg %p519
        %p1385 = pneg %p516
        %p1386 = scmp.lt.s32.totalorder %s98, 1
        %s1387 = scalar_select %p1386, %s98, 1
        %s1388 = scalar_lea.vmem %s39, %s1387
        %p1389 = pneg %p545
        %p1390 = pneg %p542
        %p1391 = scmp.lt.s32.totalorder %s98, 1
        %s1392 = scalar_select %p1391, %s98, 1
        %s1393 = smul.addr %s1392, 4
        %s1394 = smul.addr %s1393, 4
        %s1395 = scalar_lea.vmem %s41, %s1394
        %p1396 = pneg %p571
        %p1397 = pneg %p568
        %p1398 = scmp.lt.s32.totalorder %s98, 1
        %s1399 = scalar_select %p1398, %s98, 1
        %s1400 = scalar_lea.vmem %s43, %s1399
        %p1401 = pneg %p597
        %p1402 = pneg %p594
        %p1403 = scmp.lt.s32.totalorder %s98, 1
        %s1404 = scalar_select %p1403, %s98, 1
        %s1405 = smul.addr %s1404, 4
        %s1406 = smul.addr %s1405, 4
        %s1407 = scalar_lea.vmem %s45, %s1406
        %p1408 = pneg %p623
        %p1409 = pneg %p620
        %p1410 = scmp.lt.s32.totalorder %s98, 1
        %s1411 = scalar_select %p1410, %s98, 1
        %s1412 = scalar_lea.vmem %s47, %s1411
        %p1413 = pneg %p649
        %p1414 = pneg %p646
        %p1415 = scmp.lt.s32.totalorder %s98, 1
        %s1416 = scalar_select %p1415, %s98, 1
        %s1417 = smul.addr %s1416, 4
        %s1418 = smul.addr %s1417, 4
        %s1419 = scalar_lea.vmem %s49, %s1418
        %p1420 = pneg %p675
        %p1421 = pneg %p672
        %p1422 = scmp.lt.s32.totalorder %s98, 1
        %s1423 = scalar_select %p1422, %s98, 1
        %s1424 = scalar_lea.vmem %s51, %s1423
        %p1425 = pneg %p701
        %p1426 = pneg %p698
        %p1427 = scmp.lt.s32.totalorder %s98, 1
        %s1428 = scalar_select %p1427, %s98, 1
        %s1429 = smul.addr %s1428, 4
        %s1430 = smul.addr %s1429, 4
        %s1431 = scalar_lea.vmem %s53, %s1430
        %p1432 = pneg %p727
        %p1433 = pneg %p724
        %p1434 = scmp.lt.s32.totalorder %s98, 1
        %s1435 = scalar_select %p1434, %s98, 1
        %s1436 = scalar_lea.vmem %s55, %s1435
        %p1437 = pneg %p753
        %p1438 = pneg %p750
        %p1439 = scmp.lt.s32.totalorder %s98, 1
        %s1440 = scalar_select %p1439, %s98, 1
        %s1441 = smul.addr %s1440, 4
        %s1442 = smul.addr %s1441, 4
        %s1443 = scalar_lea.vmem %s57, %s1442
        %p1444 = pneg %p779
        %p1445 = pneg %p776
        %p1446 = scmp.lt.s32.totalorder %s98, 1
        %s1447 = scalar_select %p1446, %s98, 1
        %s1448 = scalar_lea.vmem %s59, %s1447
        %p1449 = pneg %p805
        %p1450 = pneg %p802
        %p1451 = scmp.lt.s32.totalorder %s98, 1
        %s1452 = scalar_select %p1451, %s98, 1
        %s1453 = smul.addr %s1452, 8
        %s1454 = smul.addr %s1453, 4
        %s1455 = scalar_lea.vmem %s61, %s1454
        %p1456 = pneg %p831
        %p1457 = pneg %p828
        %p1458 = scmp.lt.s32.totalorder %s98, 1
        %s1459 = scalar_select %p1458, %s98, 1
        %s1460 = scalar_lea.vmem %s63, %s1459
        %p1461 = pneg %p857
        %p1462 = pneg %p854
        %p1463 = scmp.lt.s32.totalorder %s98, 1
        %s1464 = scalar_select %p1463, %s98, 1
        %s1465 = scalar_lea.vmem %s65, %s1464
        %p1466 = pneg %p883
        %p1467 = pneg %p880
        %p1468 = scmp.lt.s32.totalorder %s98, 1
        %s1469 = scalar_select %p1468, %s98, 1
        %s1470 = scalar_lea.vmem %s67, %s1469
        %p1471 = pneg %p909
        %p1472 = pneg %p906
        %p1473 = scmp.lt.s32.totalorder %s98, 1
        %s1474 = scalar_select %p1473, %s98, 1
        %s1475 = scalar_lea.vmem %s69, %s1474
        %p1476 = pneg %p935
        %p1477 = pneg %p932
        %p1478 = scmp.lt.s32.totalorder %s98, 1
        %s1479 = scalar_select %p1478, %s98, 1
        %s1480 = scalar_lea.vmem %s71, %s1479
        %p1481 = pneg %p961
        %p1482 = pneg %p958
        %p1483 = scmp.lt.s32.totalorder %s98, 1
        %s1484 = scalar_select %p1483, %s98, 1
        %s1485 = scalar_lea.vmem %s73, %s1484
        %p1486 = pneg %p987
        %p1487 = pneg %p984
        %p1488 = scmp.lt.s32.totalorder %s98, 1
        %s1489 = scalar_select %p1488, %s98, 1
        %s1490 = scalar_lea.vmem %s75, %s1489
        %p1491 = pneg %p1013
        %p1492 = pneg %p1010
        %p1493 = pneg %p1039
        %p1494 = pneg %p1036
        %p1495 = scmp.lt.s32.totalorder %s97, 1
        %s1496 = scalar_select %p1495, %s97, 1
        %s1497 = smul.addr %s1496, 4
        %s1498 = scalar_lea.vmem %s77, %s1497
        %p1499 = scmp.lt.s32.totalorder %s97, 1
        %s1500 = scalar_select %p1499, %s97, 1
        %s1501 = smul.addr %s1500, 4
        %s1502 = scalar_lea.vmem %s1, %s1501
        %p1503 = scmp.lt.s32.totalorder %s97, 1
        %s1504 = scalar_select %p1503, %s97, 1
        %s1505 = smul.addr %s1504, 8
        %s1506 = scalar_lea.vmem %s3, %s1505
        %p1507 = scmp.lt.s32.totalorder %s98, 1
        %s1508 = scalar_select %p1507, %s98, 1
        %s1509 = smul.addr %s1508, 4
        %s1510 = smul.addr %s1509, 4
        %s1511 = scalar_lea.vmem %s37, %s1510
        %p1512 = scmp.lt.s32.totalorder %s98, 1
        %s1513 = scalar_select %p1512, %s98, 1
        %s1514 = scalar_lea.vmem %s39, %s1513
        %p1515 = scmp.lt.s32.totalorder %s98, 1
        %s1516 = scalar_select %p1515, %s98, 1
        %s1517 = smul.addr %s1516, 4
        %s1518 = smul.addr %s1517, 4
        %s1519 = scalar_lea.vmem %s41, %s1518
        %p1520 = scmp.lt.s32.totalorder %s98, 1
        %s1521 = scalar_select %p1520, %s98, 1
        %s1522 = scalar_lea.vmem %s43, %s1521
        %p1523 = scmp.lt.s32.totalorder %s98, 1
        %s1524 = scalar_select %p1523, %s98, 1
        %s1525 = smul.addr %s1524, 4
        %s1526 = smul.addr %s1525, 4
        %s1527 = scalar_lea.vmem %s45, %s1526
        %p1528 = scmp.lt.s32.totalorder %s98, 1
        %s1529 = scalar_select %p1528, %s98, 1
        %s1530 = scalar_lea.vmem %s47, %s1529
        %p1531 = scmp.lt.s32.totalorder %s98, 1
        %s1532 = scalar_select %p1531, %s98, 1
        %s1533 = smul.addr %s1532, 4
        %s1534 = smul.addr %s1533, 4
        %s1535 = scalar_lea.vmem %s49, %s1534
        %p1536 = scmp.lt.s32.totalorder %s98, 1
        %s1537 = scalar_select %p1536, %s98, 1
        %s1538 = scalar_lea.vmem %s51, %s1537
        %p1539 = scmp.lt.s32.totalorder %s98, 1
        %s1540 = scalar_select %p1539, %s98, 1
        %s1541 = smul.addr %s1540, 4
        %s1542 = smul.addr %s1541, 4
        %s1543 = scalar_lea.vmem %s53, %s1542
        %p1544 = scmp.lt.s32.totalorder %s98, 1
        %s1545 = scalar_select %p1544, %s98, 1
        %s1546 = scalar_lea.vmem %s55, %s1545
        %p1547 = scmp.lt.s32.totalorder %s98, 1
        %s1548 = scalar_select %p1547, %s98, 1
        %s1549 = smul.addr %s1548, 4
        %s1550 = smul.addr %s1549, 4
        %s1551 = scalar_lea.vmem %s57, %s1550
        %p1552 = scmp.lt.s32.totalorder %s98, 1
        %s1553 = scalar_select %p1552, %s98, 1
        %s1554 = scalar_lea.vmem %s59, %s1553
        %p1555 = scmp.lt.s32.totalorder %s98, 1
        %s1556 = scalar_select %p1555, %s98, 1
        %s1557 = smul.addr %s1556, 8
        %s1558 = smul.addr %s1557, 4
        %s1559 = scalar_lea.vmem %s61, %s1558
        %p1560 = scmp.lt.s32.totalorder %s98, 1
        %s1561 = scalar_select %p1560, %s98, 1
        %s1562 = scalar_lea.vmem %s63, %s1561
        %p1563 = scmp.lt.s32.totalorder %s98, 1
        %s1564 = scalar_select %p1563, %s98, 1
        %s1565 = scalar_lea.vmem %s65, %s1564
        %p1566 = scmp.lt.s32.totalorder %s98, 1
        %s1567 = scalar_select %p1566, %s98, 1
        %s1568 = scalar_lea.vmem %s67, %s1567
        %p1569 = scmp.lt.s32.totalorder %s98, 1
        %s1570 = scalar_select %p1569, %s98, 1
        %s1571 = scalar_lea.vmem %s69, %s1570
        %p1572 = scmp.lt.s32.totalorder %s98, 1
        %s1573 = scalar_select %p1572, %s98, 1
        %s1574 = scalar_lea.vmem %s71, %s1573
        %p1575 = scmp.lt.s32.totalorder %s98, 1
        %s1576 = scalar_select %p1575, %s98, 1
        %s1577 = scalar_lea.vmem %s73, %s1576
        %p1578 = scmp.lt.s32.totalorder %s98, 1
        %s1579 = scalar_select %p1578, %s98, 1
        %s1580 = scalar_lea.vmem %s75, %s1579
        %p1581 = scmp.lt.s32.totalorder %s97, 1
        %s1582 = scalar_select %p1581, %s97, 1
        %s1583 = smul.addr %s1582, 4
        %s1584 = scalar_lea.vmem %s77, %s1583
        %p1586 = scmp.eq.s32.totalorder %s98, 0
        // Predicated region
        $region193: #{tpu_custom_call.1} parent=171 // pred_check
          %p1587 = pneg %p1586
        $region194: #{tpu_custom_call.1} parent=171 // pred_check_branch
          %1589 = sbr.rel (%p1587) target = $region196
        $region195: #{tpu_custom_call.1} parent=171 // pred_region
          %v1590 = vld [vmem:[%s1502] sm:$0x7]
          %v1591 = vpack.c.bf16 %v1590, %v1590
          %v1592 = vld [vmem:[#allocation7] sm:$0x3]
          %v1593 = vld [vmem:[#allocation8] sm:$0x1]
          %v1595 = vlaneseq
          %v1596 = vshrl.u32 %v1595, 7
          %v1597 = vsub.s32 0, %v1596
          %v1598 = vrot.slane %v1593, %v1597
          %vm1600 = vcmask 31744
          %v1602 = vsel %vm1600, %v1591, 0
          %vm1604 = vcmask 1041408
          %v1606 = vsel %vm1604, %v1592, 0
          %1608 = vmatprep.subr.bf16.mxu0 0
          %1609 = vmatpush1.bf16.msra.mxu0 %v1606
          %1610 = vmatprep.subr.bf16.mxu0 0
          %1611 = vmatpush1.bf16.msra.mxu0 0
          %1612 = vmatprep.subr.bf16.mxu0 0
          %1613 = vmatpush1.bf16.msra.mxu0 0
          %1614 = vmatprep.subr.bf16.mxu0 0
          %1615 = vmatpush1.bf16.msra.mxu0 0
          %1616 = vmatprep.subr.bf16.mxu0 0
          %1617 = vmatpush1.bf16.msra.mxu0 0
          %1618 = vmatprep.subr.bf16.mxu0 0
          %1619 = vmatpush1.bf16.msra.mxu0 0
          %1620 = vmatprep.subr.bf16.mxu0 0
          %1621 = vmatpush1.bf16.msra.mxu0 0
          %1622 = vmatprep.subr.bf16.mxu0 0
          %1623 = vmatpush1.bf16.msra.mxu0 0
          %1624 = vmatprep.subr.bf16.mxu0 0
          %1625 = vmatpush1.bf16.msra.mxu0 0
          %1626 = vmatprep.subr.bf16.mxu0 0
          %1627 = vmatpush1.bf16.msra.mxu0 0
          %1628 = vmatprep.subr.bf16.mxu0 0
          %1629 = vmatpush1.bf16.msra.mxu0 0
          %1630 = vmatprep.subr.bf16.mxu0 0
          %1631 = vmatpush1.bf16.msra.mxu0 0
          %1632 = vmatprep.subr.bf16.mxu0 0
          %1633 = vmatpush1.bf16.msra.mxu0 0
          %1634 = vmatprep.subr.bf16.mxu0 0
          %1635 = vmatpush1.bf16.msra.mxu0 0
          %1636 = vmatprep.subr.bf16.mxu0 0
          %1637 = vmatpush1.bf16.msra.mxu0 0
          %1638 = vmatprep.subr.bf16.mxu0 0
          %1639 = vmatpush1.bf16.msra.mxu0 0
          %1640 = vmatprep.mubr.bf16.mxu0 0
          %1641 = vmatmul.mubr.bf16.gmra.mrb[0].mxu0 %v1602
          %v1642 = vpop.f32.mrb[0].mxu0
          %v1643 = vadd.f32 %v1598, %v1642
          %v1644 = vpop.f32.mrb[0].mxu0
          %v1645 = vpop.f32.mrb[0].mxu0
          %v1646 = vpop.f32.mrb[0].mxu0
          %1647 = vdwg.mxu0
          %v1648 = vld [vmem:[#allocation5] sm:$0x7]
          %v1649 = vadd.f32 %v1643, %v1648
          %v1650 = vpack.c.bf16 %v1649, %v1649
          %v1651 = vld [vmem:[%s13] sm:$0xf]
          %v1652 = vld [vmem:[%s13 + $0x4] sm:$0xf]
          %v1653 = vld [vmem:[#allocation10] sm:$0x1]
          %v1655 = vlaneseq
          %v1656 = vshrl.u32 %v1655, 7
          %v1657 = vsub.s32 0, %v1656
          %v1658 = vrot.slane %v1653, %v1657
          %v1662 = vunpack.c.l.b16 %v1651
          %v1663 = vunpack.c.l.b16 %v1652
          %v1664 = vpack.c.b16 %v1663, %v1662
          %vm1666 = vcmask 130048
          %v1668 = vsel %vm1666, %v1650, 0
          %1670 = vmatprep.subr.bf16.mxu0 0
          %1671 = vmatpush1.bf16.msra.mxu0 %v1664
          %1672 = vmatprep.subr.bf16.mxu0 0
          %1673 = vmatpush1.bf16.msra.mxu0 0
          %1674 = vmatprep.subr.bf16.mxu0 0
          %1675 = vmatpush1.bf16.msra.mxu0 0
          %1676 = vmatprep.subr.bf16.mxu0 0
          %1677 = vmatpush1.bf16.msra.mxu0 0
          %1678 = vmatprep.subr.bf16.mxu0 0
          %1679 = vmatpush1.bf16.msra.mxu0 0
          %1680 = vmatprep.subr.bf16.mxu0 0
          %1681 = vmatpush1.bf16.msra.mxu0 0
          %1682 = vmatprep.subr.bf16.mxu0 0
          %1683 = vmatpush1.bf16.msra.mxu0 0
          %1684 = vmatprep.subr.bf16.mxu0 0
          %1685 = vmatpush1.bf16.msra.mxu0 0
          %1686 = vmatprep.subr.bf16.mxu0 0
          %1687 = vmatpush1.bf16.msra.mxu0 0
          %1688 = vmatprep.subr.bf16.mxu0 0
          %1689 = vmatpush1.bf16.msra.mxu0 0
          %1690 = vmatprep.subr.bf16.mxu0 0
          %1691 = vmatpush1.bf16.msra.mxu0 0
          %1692 = vmatprep.subr.bf16.mxu0 0
          %1693 = vmatpush1.bf16.msra.mxu0 0
          %1694 = vmatprep.subr.bf16.mxu0 0
          %1695 = vmatpush1.bf16.msra.mxu0 0
          %1696 = vmatprep.subr.bf16.mxu0 0
          %1697 = vmatpush1.bf16.msra.mxu0 0
          %1698 = vmatprep.subr.bf16.mxu0 0
          %1699 = vmatpush1.bf16.msra.mxu0 0
          %1700 = vmatprep.subr.bf16.mxu0 0
          %1701 = vmatpush1.bf16.msra.mxu0 0
          %1702 = vmatprep.mubr.bf16.mxu0 0
          %1703 = vmatmul.mubr.bf16.gmra.mrb[0].mxu0 %v1668
          %v1704 = vpop.f32.mrb[0].mxu0
          %v1705 = vadd.f32 %v1658, %v1704
          %v1706 = vpop.f32.mrb[0].mxu0
          %v1707 = vpop.f32.mrb[0].mxu0
          %v1708 = vpop.f32.mrb[0].mxu0
          %1709 = vdwg.mxu0
          %v1710 = vmax.f32 %v1705, 0.0
          %v1711 = vpack.c.bf16 %v1710, %v1710
          %v1712 = vld [vmem:[%s17] sm:$0xf]
          %v1713 = vld [vmem:[%s17 + $0x4] sm:$0xf]
          %v1714 = vld [vmem:[%s17 + $0x8] sm:$0xf]
          %v1715 = vld [vmem:[%s17 + $0xc] sm:$0xf]
          %v1716 = vld [vmem:[%s19] sm:$0x1]
          %v1718 = vlaneseq
          %v1719 = vshrl.u32 %v1718, 7
          %v1720 = vsub.s32 0, %v1719
          %v1721 = vrot.slane %v1716, %v1720
          %v1727 = vunpack.c.l.b16 %v1712
          %v1728 = vunpack.c.l.b16 %v1713
          %v1729 = vunpack.c.l.b16 %v1714
          %v1730 = vunpack.c.l.b16 %v1715
          %v1731 = vpack.c.b16 %v1728, %v1727
          %v1732 = vpack.c.b16 %v1730, %v1729
          %vm1735 = vcmask 261120
          %v1737 = vsel %vm1735, %v1711, 0
          %1739 = vmatprep.subr.bf16.mxu0 0
          %1740 = vmatpush1.bf16.msra.mxu0 %v1731
          %1741 = vmatprep.subr.bf16.mxu0 0
          %1742 = vmatpush1.bf16.msra.mxu0 %v1732
          %1743 = vmatprep.subr.bf16.mxu0 0
          %1744 = vmatpush1.bf16.msra.mxu0 0
          %1745 = vmatprep.subr.bf16.mxu0 0
          %1746 = vmatpush1.bf16.msra.mxu0 0
          %1747 = vmatprep.subr.bf16.mxu0 0
          %1748 = vmatpush1.bf16.msra.mxu0 0
          %1749 = vmatprep.subr.bf16.mxu0 0
          %1750 = vmatpush1.bf16.msra.mxu0 0
          %1751 = vmatprep.subr.bf16.mxu0 0
          %1752 = vmatpush1.bf16.msra.mxu0 0
          %1753 = vmatprep.subr.bf16.mxu0 0
          %1754 = vmatpush1.bf16.msra.mxu0 0
          %1755 = vmatprep.subr.bf16.mxu0 0
          %1756 = vmatpush1.bf16.msra.mxu0 0
          %1757 = vmatprep.subr.bf16.mxu0 0
          %1758 = vmatpush1.bf16.msra.mxu0 0
          %1759 = vmatprep.subr.bf16.mxu0 0
          %1760 = vmatpush1.bf16.msra.mxu0 0
          %1761 = vmatprep.subr.bf16.mxu0 0
          %1762 = vmatpush1.bf16.msra.mxu0 0
          %1763 = vmatprep.subr.bf16.mxu0 0
          %1764 = vmatpush1.bf16.msra.mxu0 0
          %1765 = vmatprep.subr.bf16.mxu0 0
          %1766 = vmatpush1.bf16.msra.mxu0 0
          %1767 = vmatprep.subr.bf16.mxu0 0
          %1768 = vmatpush1.bf16.msra.mxu0 0
          %1769 = vmatprep.subr.bf16.mxu0 0
          %1770 = vmatpush1.bf16.msra.mxu0 0
          %1771 = vmatprep.mubr.bf16.mxu0 0
          %1772 = vmatmul.mubr.bf16.gmra.mrb[0].mxu0 %v1737
          %v1773 = vpop.f32.mrb[0].mxu0
          %v1774 = vadd.f32 %v1721, %v1773
          %v1775 = vpop.f32.mrb[0].mxu0
          %v1776 = vpop.f32.mrb[0].mxu0
          %v1777 = vpop.f32.mrb[0].mxu0
          %1778 = vdwg.mxu0
          %v1779 = vmax.f32 %v1774, 0.0
          %v1780 = vpack.c.bf16 %v1779, %v1779
          %v1781 = vld [vmem:[%s21] sm:$0xf]
          %v1782 = vld [vmem:[%s21 + $0x4] sm:$0xf]
          %v1783 = vld [vmem:[%s21 + $0x8] sm:$0xf]
          %v1784 = vld [vmem:[%s21 + $0xc] sm:$0xf]
          %v1785 = vld [vmem:[%s21 + $0x10] sm:$0xf]
          %v1786 = vld [vmem:[%s21 + $0x14] sm:$0xf]
          %v1787 = vld [vmem:[%s21 + $0x18] sm:$0xf]
          %v1788 = vld [vmem:[%s21 + $0x1c] sm:$0xf]
          %v1789 = vld [vmem:[%s21 + $0x20] sm:$0xf]
          %v1790 = vld [vmem:[%s21 + $0x24] sm:$0xf]
          %v1791 = vld [vmem:[%s21 + $0x28] sm:$0xf]
          %v1792 = vld [vmem:[%s21 + $0x2c] sm:$0xf]
          %v1793 = vld [vmem:[%s21 + $0x30] sm:$0xf]
          %v1794 = vld [vmem:[%s21 + $0x34] sm:$0xf]
          %v1795 = vld [vmem:[%s21 + $0x38] sm:$0xf]
          %v1796 = vld [vmem:[%s21 + $0x3c] sm:$0xf]
          %v1797 = vld [vmem:[%s23] sm:$0x1]
          %v1799 = vlaneseq
          %v1800 = vshrl.u32 %v1799, 7
          %v1801 = vsub.s32 0, %v1800
          %v1802 = vrot.slane %v1797, %v1801
          %v1820 = vunpack.c.l.b16 %v1781
          %v1821 = vunpack.c.l.b16 %v1782
          %v1822 = vunpack.c.l.b16 %v1783
          %v1823 = vunpack.c.l.b16 %v1784
          %v1824 = vunpack.c.l.b16 %v1785
          %v1825 = vunpack.c.l.b16 %v1786
          %v1826 = vunpack.c.l.b16 %v1787
          %v1827 = vunpack.c.l.b16 %v1788
          %v1828 = vunpack.c.l.b16 %v1789
          %v1829 = vunpack.c.l.b16 %v1790
          %v1830 = vunpack.c.l.b16 %v1791
          %v1831 = vunpack.c.l.b16 %v1792
          %v1832 = vunpack.c.l.b16 %v1793
          %v1833 = vunpack.c.l.b16 %v1794
          %v1834 = vunpack.c.l.b16 %v1795
          %v1835 = vunpack.c.l.b16 %v1796
          %v1836 = vpack.c.b16 %v1821, %v1820
          %v1837 = vpack.c.b16 %v1823, %v1822
          %v1838 = vpack.c.b16 %v1825, %v1824
          %v1839 = vpack.c.b16 %v1827, %v1826
          %v1840 = vpack.c.b16 %v1829, %v1828
          %v1841 = vpack.c.b16 %v1831, %v1830
          %v1842 = vpack.c.b16 %v1833, %v1832
          %v1843 = vpack.c.b16 %v1835, %v1834
          %1852 = vmatprep.subr.bf16.mxu0 0
          %1853 = vmatpush1.bf16.msra.mxu0 %v1836
          %1854 = vmatprep.subr.bf16.mxu0 0
          %1855 = vmatpush1.bf16.msra.mxu0 %v1837
          %1856 = vmatprep.subr.bf16.mxu0 0
          %1857 = vmatpush1.bf16.msra.mxu0 %v1838
          %1858 = vmatprep.subr.bf16.mxu0 0
          %1859 = vmatpush1.bf16.msra.mxu0 %v1839
          %1860 = vmatprep.subr.bf16.mxu0 0
          %1861 = vmatpush1.bf16.msra.mxu0 %v1840
          %1862 = vmatprep.subr.bf16.mxu0 0
          %1863 = vmatpush1.bf16.msra.mxu0 %v1841
          %1864 = vmatprep.subr.bf16.mxu0 0
          %1865 = vmatpush1.bf16.msra.mxu0 %v1842
          %1866 = vmatprep.subr.bf16.mxu0 0
          %1867 = vmatpush1.bf16.msra.mxu0 %v1843
          %1868 = vmatprep.subr.bf16.mxu0 0
          %1869 = vmatpush1.bf16.msra.mxu0 0
          %1870 = vmatprep.subr.bf16.mxu0 0
          %1871 = vmatpush1.bf16.msra.mxu0 0
          %1872 = vmatprep.subr.bf16.mxu0 0
          %1873 = vmatpush1.bf16.msra.mxu0 0
          %1874 = vmatprep.subr.bf16.mxu0 0
          %1875 = vmatpush1.bf16.msra.mxu0 0
          %1876 = vmatprep.subr.bf16.mxu0 0
          %1877 = vmatpush1.bf16.msra.mxu0 0
          %1878 = vmatprep.subr.bf16.mxu0 0
          %1879 = vmatpush1.bf16.msra.mxu0 0
          %1880 = vmatprep.subr.bf16.mxu0 0
          %1881 = vmatpush1.bf16.msra.mxu0 0
          %1882 = vmatprep.subr.bf16.mxu0 0
          %1883 = vmatpush1.bf16.msra.mxu0 0
          %1884 = vmatprep.mubr.bf16.mxu0 0
          %1885 = vmatmul.mubr.bf16.gmra.mrb[0].mxu0 %v1780
          %v1886 = vpop.f32.mrb[0].mxu0
          %v1887 = vadd.f32 %v1802, %v1886
          %v1888 = vpop.f32.mrb[0].mxu0
          %v1889 = vpop.f32.mrb[0].mxu0
          %v1890 = vpop.f32.mrb[0].mxu0
          %1891 = vdwg.mxu0
          %v1892 = vld [vmem:[%s1310] sm:$0x1]
          %v1893 = vpack.c.bf16 %v1892, %v1892
          %v1894 = vld [vmem:[%s25] sm:$0x7]
          %v1895 = vld [vmem:[%s27] sm:$0x1]
          %vm1896 = vcmask 48128
          %v1898 = vsel %vm1896, %v1893, 0
          %vm1900 = vcmask 1042432
          %v1902 = vsel %vm1900, %v1894, 0
          %1904 = vmatprep.subr.bf16.mxu0 0
          %1905 = vmatpush1.bf16.msra.mxu0 %v1902
          %1906 = vmatprep.subr.bf16.mxu0 0
          %1907 = vmatpush1.bf16.msra.mxu0 0
          %1908 = vmatprep.subr.bf16.mxu0 0
          %1909 = vmatpush1.bf16.msra.mxu0 0
          %1910 = vmatprep.subr.bf16.mxu0 0
          %1911 = vmatpush1.bf16.msra.mxu0 0
          %1912 = vmatprep.subr.bf16.mxu0 0
          %1913 = vmatpush1.bf16.msra.mxu0 0
          %1914 = vmatprep.subr.bf16.mxu0 0
          %1915 = vmatpush1.bf16.msra.mxu0 0
          %1916 = vmatprep.subr.bf16.mxu0 0
          %1917 = vmatpush1.bf16.msra.mxu0 0
          %1918 = vmatprep.subr.bf16.mxu0 0
          %1919 = vmatpush1.bf16.msra.mxu0 0
          %1920 = vmatprep.subr.bf16.mxu0 0
          %1921 = vmatpush1.bf16.msra.mxu0 0
          %1922 = vmatprep.subr.bf16.mxu0 0
          %1923 = vmatpush1.bf16.msra.mxu0 0
          %1924 = vmatprep.subr.bf16.mxu0 0
          %1925 = vmatpush1.bf16.msra.mxu0 0
          %1926 = vmatprep.subr.bf16.mxu0 0
          %1927 = vmatpush1.bf16.msra.mxu0 0
          %1928 = vmatprep.subr.bf16.mxu0 0
          %1929 = vmatpush1.bf16.msra.mxu0 0
          %1930 = vmatprep.subr.bf16.mxu0 0
          %1931 = vmatpush1.bf16.msra.mxu0 0
          %1932 = vmatprep.subr.bf16.mxu0 0
          %1933 = vmatpush1.bf16.msra.mxu0 0
          %1934 = vmatprep.subr.bf16.mxu0 0
          %1935 = vmatpush1.bf16.msra.mxu0 0
          %1936 = vmatprep.mubr.bf16.mxu0 0
          %1937 = vmatmul.mubr.bf16.gmra.mrb[0].mxu0 %v1898
          %v1938 = vpop.f32.mrb[0].mxu0
          %v1939 = vadd.f32 %v1895, %v1938
          %v1940 = vpop.f32.mrb[0].mxu0
          %v1941 = vpop.f32.mrb[0].mxu0
          %v1942 = vpop.f32.mrb[0].mxu0
          %1943 = vdwg.mxu0
          %v1944 = vmax.f32 %v1939, 0.0
          %v1945 = vpack.c.bf16 %v1944, %v1944
          %v1946 = vld [vmem:[%s29] sm:$0xf]
          %v1947 = vld [vmem:[%s29 + $0x4] sm:$0xf]
          %v1948 = vld [vmem:[%s29 + $0x8] sm:$0xf]
          %v1949 = vld [vmem:[%s29 + $0xc] sm:$0xf]
          %v1950 = vld [vmem:[%s31] sm:$0x1]
          %v1955 = vunpack.c.l.b16 %v1946
          %v1956 = vunpack.c.l.b16 %v1947
          %v1957 = vunpack.c.l.b16 %v1948
          %v1958 = vunpack.c.l.b16 %v1949
          %v1959 = vpack.c.b16 %v1956, %v1955
          %v1960 = vpack.c.b16 %v1958, %v1957
          %v1964 = vsel %vm1735, %v1945, 0
          %1966 = vmatprep.subr.bf16.mxu0 0
          %1967 = vmatpush1.bf16.msra.mxu0 %v1959
          %1968 = vmatprep.subr.bf16.mxu0 0
          %1969 = vmatpush1.bf16.msra.mxu0 %v1960
          %1970 = vmatprep.subr.bf16.mxu0 0
          %1971 = vmatpush1.bf16.msra.mxu0 0
          %1972 = vmatprep.subr.bf16.mxu0 0
          %1973 = vmatpush1.bf16.msra.mxu0 0
          %1974 = vmatprep.subr.bf16.mxu0 0
          %1975 = vmatpush1.bf16.msra.mxu0 0
          %1976 = vmatprep.subr.bf16.mxu0 0
          %1977 = vmatpush1.bf16.msra.mxu0 0
          %1978 = vmatprep.subr.bf16.mxu0 0
          %1979 = vmatpush1.bf16.msra.mxu0 0
          %1980 = vmatprep.subr.bf16.mxu0 0
          %1981 = vmatpush1.bf16.msra.mxu0 0
          %1982 = vmatprep.subr.bf16.mxu0 0
          %1983 = vmatpush1.bf16.msra.mxu0 0
          %1984 = vmatprep.subr.bf16.mxu0 0
          %1985 = vmatpush1.bf16.msra.mxu0 0
          %1986 = vmatprep.subr.bf16.mxu0 0
          %1987 = vmatpush1.bf16.msra.mxu0 0
          %1988 = vmatprep.subr.bf16.mxu0 0
          %1989 = vmatpush1.bf16.msra.mxu0 0
          %1990 = vmatprep.subr.bf16.mxu0 0
          %1991 = vmatpush1.bf16.msra.mxu0 0
          %1992 = vmatprep.subr.bf16.mxu0 0
          %1993 = vmatpush1.bf16.msra.mxu0 0
          %1994 = vmatprep.subr.bf16.mxu0 0
          %1995 = vmatpush1.bf16.msra.mxu0 0
          %1996 = vmatprep.subr.bf16.mxu0 0
          %1997 = vmatpush1.bf16.msra.mxu0 0
          %1998 = vmatprep.mubr.bf16.mxu0 0
          %1999 = vmatmul.mubr.bf16.gmra.mrb[0].mxu0 %v1964
          %v2000 = vpop.f32.mrb[0].mxu0
          %v2001 = vadd.f32 %v1950, %v2000
          %v2002 = vpop.f32.mrb[0].mxu0
          %v2003 = vpop.f32.mrb[0].mxu0
          %v2004 = vpop.f32.mrb[0].mxu0
          %2005 = vdwg.mxu0
          %v2006 = vmax.f32 %v2001, 0.0
          %v2007 = vpack.c.bf16 %v2006, %v2006
          %v2008 = vld [vmem:[%s33] sm:$0xf]
          %v2009 = vld [vmem:[%s33 + $0x4] sm:$0xf]
          %v2010 = vld [vmem:[%s33 + $0x8] sm:$0xf]
          %v2011 = vld [vmem:[%s33 + $0xc] sm:$0xf]
          %v2012 = vld [vmem:[%s33 + $0x10] sm:$0xf]
          %v2013 = vld [vmem:[%s33 + $0x14] sm:$0xf]
          %v2014 = vld [vmem:[%s33 + $0x18] sm:$0xf]
          %v2015 = vld [vmem:[%s33 + $0x1c] sm:$0xf]
          %v2016 = vld [vmem:[%s33 + $0x20] sm:$0xf]
          %v2017 = vld [vmem:[%s33 + $0x24] sm:$0xf]
          %v2018 = vld [vmem:[%s33 + $0x28] sm:$0xf]
          %v2019 = vld [vmem:[%s33 + $0x2c] sm:$0xf]
          %v2020 = vld [vmem:[%s33 + $0x30] sm:$0xf]
          %v2021 = vld [vmem:[%s33 + $0x34] sm:$0xf]
          %v2022 = vld [vmem:[%s33 + $0x38] sm:$0xf]
          %v2023 = vld [vmem:[%s33 + $0x3c] sm:$0xf]
          %v2024 = vld [vmem:[%s35] sm:$0x1]
          %v2041 = vunpack.c.l.b16 %v2008
          %v2042 = vunpack.c.l.b16 %v2009
          %v2043 = vunpack.c.l.b16 %v2010
          %v2044 = vunpack.c.l.b16 %v2011
          %v2045 = vunpack.c.l.b16 %v2012
          %v2046 = vunpack.c.l.b16 %v2013
          %v2047 = vunpack.c.l.b16 %v2014
          %v2048 = vunpack.c.l.b16 %v2015
          %v2049 = vunpack.c.l.b16 %v2016
          %v2050 = vunpack.c.l.b16 %v2017
          %v2051 = vunpack.c.l.b16 %v2018
          %v2052 = vunpack.c.l.b16 %v2019
          %v2053 = vunpack.c.l.b16 %v2020
          %v2054 = vunpack.c.l.b16 %v2021
          %v2055 = vunpack.c.l.b16 %v2022
          %v2056 = vunpack.c.l.b16 %v2023
          %v2057 = vpack.c.b16 %v2042, %v2041
          %v2058 = vpack.c.b16 %v2044, %v2043
          %v2059 = vpack.c.b16 %v2046, %v2045
          %v2060 = vpack.c.b16 %v2048, %v2047
          %v2061 = vpack.c.b16 %v2050, %v2049
          %v2062 = vpack.c.b16 %v2052, %v2051
          %v2063 = vpack.c.b16 %v2054, %v2053
          %v2064 = vpack.c.b16 %v2056, %v2055
          %2073 = vmatprep.subr.bf16.mxu0 0
          %2074 = vmatpush1.bf16.msra.mxu0 %v2057
          %2075 = vmatprep.subr.bf16.mxu0 0
          %2076 = vmatpush1.bf16.msra.mxu0 %v2058
          %2077 = vmatprep.subr.bf16.mxu0 0
          %2078 = vmatpush1.bf16.msra.mxu0 %v2059
          %2079 = vmatprep.subr.bf16.mxu0 0
          %2080 = vmatpush1.bf16.msra.mxu0 %v2060
          %2081 = vmatprep.subr.bf16.mxu0 0
          %2082 = vmatpush1.bf16.msra.mxu0 %v2061
          %2083 = vmatprep.subr.bf16.mxu0 0
          %2084 = vmatpush1.bf16.msra.mxu0 %v2062
          %2085 = vmatprep.subr.bf16.mxu0 0
          %2086 = vmatpush1.bf16.msra.mxu0 %v2063
          %2087 = vmatprep.subr.bf16.mxu0 0
          %2088 = vmatpush1.bf16.msra.mxu0 %v2064
          %2089 = vmatprep.subr.bf16.mxu0 0
          %2090 = vmatpush1.bf16.msra.mxu0 0
          %2091 = vmatprep.subr.bf16.mxu0 0
          %2092 = vmatpush1.bf16.msra.mxu0 0
          %2093 = vmatprep.subr.bf16.mxu0 0
          %2094 = vmatpush1.bf16.msra.mxu0 0
          %2095 = vmatprep.subr.bf16.mxu0 0
          %2096 = vmatpush1.bf16.msra.mxu0 0
          %2097 = vmatprep.subr.bf16.mxu0 0
          %2098 = vmatpush1.bf16.msra.mxu0 0
          %2099 = vmatprep.subr.bf16.mxu0 0
          %2100 = vmatpush1.bf16.msra.mxu0 0
          %2101 = vmatprep.subr.bf16.mxu0 0
          %2102 = vmatpush1.bf16.msra.mxu0 0
          %2103 = vmatprep.subr.bf16.mxu0 0
          %2104 = vmatpush1.bf16.msra.mxu0 0
          %2105 = vmatprep.mubr.bf16.mxu0 0
          %2106 = vmatmul.mubr.bf16.gmra.mrb[0].mxu0 %v2007
          %v2107 = vpop.f32.mrb[0].mxu0
          %v2108 = vadd.f32 %v2024, %v2107
          %v2109 = vpop.f32.mrb[0].mxu0
          %v2110 = vpop.f32.mrb[0].mxu0
          %v2111 = vpop.f32.mrb[0].mxu0
          %2112 = vdwg.mxu0
          %v2113 = vlaneseq
          %v2114 = vshrl.u32 %v2113, 7
          %v2115 = vsub.s32 0, %v2114
          %v2116 = vrot.slane %v2108, %v2115
          %v2117 = vadd.f32 %v1887, %v2116
          %vm2118 = vcmask 256000
          %2119 = vst.msk [vmem:[#allocation2] sm:$0x7] %vm2118, %v2117
        $region196: #{tpu_custom_call.1} parent=171 // pred_fallthru
          _
        %v2120 = vlaneseq
        %v2121 = vshrl.u32 %v2120, 7
        %v2122 = vlaneseq
        %v2123 = vand.u32 %v2122, 127
        %vm2124 = vcmp.gt.s32.totalorder %v2123, %v2121
        %v2125 = vsel %vm2124, -1e+30, 0.0
        %v2126 = vld [vmem:[#allocation2] sm:$0x7]
        %v2127 = vpack.c.bf16 %v2126, %v2126
        %v2128 = vld [vmem:[%s1511] sm:$0xf]
        %v2129 = vld [vmem:[%s1511 + $0x4] sm:$0xf]
        %v2130 = vld [vmem:[%s1511 + $0x8] sm:$0xf]
        %v2131 = vld [vmem:[%s1511 + $0xc] sm:$0xf]
        %v2132 = vld [vmem:[%s1514] sm:$0x1]
        %v2134 = vlaneseq
        %v2135 = vshrl.u32 %v2134, 7
        %v2136 = vsub.s32 0, %v2135
        %v2137 = vrot.slane %v2132, %v2136
        %v2143 = vunpack.c.l.b16 %v2128
        %v2144 = vunpack.c.l.b16 %v2129
        %v2145 = vunpack.c.l.b16 %v2130
        %v2146 = vunpack.c.l.b16 %v2131
        %v2147 = vpack.c.b16 %v2144, %v2143
        %v2148 = vpack.c.b16 %v2146, %v2145
        %vm2151 = vcmask 261120
        %v2153 = vsel %vm2151, %v2127, 0
        %2155 = vmatprep.subr.bf16.mxu0 0
        %2156 = vmatpush1.bf16.msra.mxu0 %v2147
        %2157 = vmatprep.subr.bf16.mxu0 0
        %2158 = vmatpush1.bf16.msra.mxu0 %v2148
        %2159 = vmatprep.subr.bf16.mxu0 0
        %2160 = vmatpush1.bf16.msra.mxu0 0
        %2161 = vmatprep.subr.bf16.mxu0 0
        %2162 = vmatpush1.bf16.msra.mxu0 0
        %2163 = vmatprep.subr.bf16.mxu0 0
        %2164 = vmatpush1.bf16.msra.mxu0 0
        %2165 = vmatprep.subr.bf16.mxu0 0
        %2166 = vmatpush1.bf16.msra.mxu0 0
        %2167 = vmatprep.subr.bf16.mxu0 0
        %2168 = vmatpush1.bf16.msra.mxu0 0
        %2169 = vmatprep.subr.bf16.mxu0 0
        %2170 = vmatpush1.bf16.msra.mxu0 0
        %2171 = vmatprep.subr.bf16.mxu0 0
        %2172 = vmatpush1.bf16.msra.mxu0 0
        %2173 = vmatprep.subr.bf16.mxu0 0
        %2174 = vmatpush1.bf16.msra.mxu0 0
        %2175 = vmatprep.subr.bf16.mxu0 0
        %2176 = vmatpush1.bf16.msra.mxu0 0
        %2177 = vmatprep.subr.bf16.mxu0 0
        %2178 = vmatpush1.bf16.msra.mxu0 0
        %2179 = vmatprep.subr.bf16.mxu0 0
        %2180 = vmatpush1.bf16.msra.mxu0 0
        %2181 = vmatprep.subr.bf16.mxu0 0
        %2182 = vmatpush1.bf16.msra.mxu0 0
        %2183 = vmatprep.subr.bf16.mxu0 0
        %2184 = vmatpush1.bf16.msra.mxu0 0
        %2185 = vmatprep.subr.bf16.mxu0 0
        %2186 = vmatpush1.bf16.msra.mxu0 0
        %2187 = vmatprep.mubr.bf16.mxu0 0
        %2188 = vmatmul.mubr.bf16.gmra.mrb[0].mxu0 %v2153
        %v2189 = vpop.f32.mrb[0].mxu0
        %v2190 = vadd.f32 %v2137, %v2189
        %v2191 = vpop.f32.mrb[0].mxu0
        %v2192 = vpop.f32.mrb[0].mxu0
        %v2193 = vpop.f32.mrb[0].mxu0
        %2194 = vdwg.mxu0
        %2196 = vrot.lane.b32.xlu0 %v2190, 112
        %v2197 = vpop.permute.xlu0 %2196
        %v2199 = vunpack.c.l.s4 1983009808
        %v2200 = vunpack.c.0.s8 %v2199
        %v2201 = vlaneseq
        %v2202 = vshrl.u32 %v2201, 7
        %v2203 = vsub.s32 %v2200, %v2202
        %v2204 = vrot.slane %v2190, %v2203
        %v2207 = vunpack.c.l.s4 1983009808
        %v2208 = vunpack.c.0.s8 %v2207
        %v2209 = vlaneseq
        %v2210 = vshrl.u32 %v2209, 7
        %v2211 = vsub.s32 %v2208, %v2210
        %v2212 = vrot.slane %v2197, %v2211
        %v2213 = vcombine.low %v2204, %v2212
        %v2214 = vcombine.high %v2204, %v2212
        %v2216 = vunpack.c.l.s4 1934713408
        %v2217 = vunpack.c.0.s8 %v2216
        %v2218 = vlaneseq
        %v2219 = vshrl.u32 %v2218, 7
        %v2220 = vsub.s32 %v2217, %v2219
        %v2221 = vrot.slane %v2213, %v2220
        %v2223 = vunpack.c.l.s4 1934713408
        %v2224 = vunpack.c.0.s8 %v2223
        %v2225 = vlaneseq
        %v2226 = vshrl.u32 %v2225, 7
        %v2227 = vsub.s32 %v2224, %v2226
        %v2228 = vrot.slane %v2214, %v2227
        %v2229 = vcombine.low %v2221, %v2228
        %v2231 = vunpack.c.l.s4 1983009808
        %v2232 = vunpack.c.0.s8 %v2231
        %v2233 = vlaneseq
        %v2234 = vshrl.u32 %v2233, 7
        %v2235 = vsub.s32 %v2232, %v2234
        %v2236 = vrot.slane %v2229, %v2235
        %v2237 = vcombine.high %v2221, 0.0
        %v2238 = vcombine.low %v2236, %v2237
        %v2240 = vunpack.c.l.s4 1934713408
        %v2241 = vunpack.c.0.s8 %v2240
        %v2242 = vlaneseq
        %v2243 = vshrl.u32 %v2242, 7
        %v2244 = vsub.s32 %v2241, %v2243
        %v2245 = vrot.slane %v2238, %v2244
        %v2246 = vcombine.high %v2245, 0.0
        %2247 = vrot.lane.b32.xlu0 %v2190, 96
        %v2248 = vpop.permute.xlu0 %2247
        %2249 = vrot.lane.b32.xlu0 %v2197, 96
        %v2250 = vpop.permute.xlu0 %2249
        %v2253 = vunpack.c.l.s4 1983009808
        %v2254 = vunpack.c.0.s8 %v2253
        %v2255 = vlaneseq
        %v2256 = vshrl.u32 %v2255, 7
        %v2257 = vsub.s32 %v2254, %v2256
        %v2258 = vrot.slane %v2248, %v2257
        %v2261 = vunpack.c.l.s4 1983009808
        %v2262 = vunpack.c.0.s8 %v2261
        %v2263 = vlaneseq
        %v2264 = vshrl.u32 %v2263, 7
        %v2265 = vsub.s32 %v2262, %v2264
        %v2266 = vrot.slane %v2250, %v2265
        %v2267 = vcombine.low %v2258, %v2266
        %v2268 = vcombine.high %v2258, %v2266
        %v2270 = vunpack.c.l.s4 1934713408
        %v2271 = vunpack.c.0.s8 %v2270
        %v2272 = vlaneseq
        %v2273 = vshrl.u32 %v2272, 7
        %v2274 = vsub.s32 %v2271, %v2273
        %v2275 = vrot.slane %v2267, %v2274
        %v2277 = vunpack.c.l.s4 1934713408
        %v2278 = vunpack.c.0.s8 %v2277
        %v2279 = vlaneseq
        %v2280 = vshrl.u32 %v2279, 7
        %v2281 = vsub.s32 %v2278, %v2280
        %v2282 = vrot.slane %v2268, %v2281
        %v2283 = vcombine.low %v2275, %v2282
        %v2285 = vunpack.c.l.s4 1983009808
        %v2286 = vunpack.c.0.s8 %v2285
        %v2287 = vlaneseq
        %v2288 = vshrl.u32 %v2287, 7
        %v2289 = vsub.s32 %v2286, %v2288
        %v2290 = vrot.slane %v2283, %v2289
        %v2291 = vcombine.high %v2275, 0.0
        %v2292 = vcombine.low %v2290, %v2291
        %v2294 = vunpack.c.l.s4 1934713408
        %v2295 = vunpack.c.0.s8 %v2294
        %v2296 = vlaneseq
        %v2297 = vshrl.u32 %v2296, 7
        %v2298 = vsub.s32 %v2295, %v2297
        %v2299 = vrot.slane %v2292, %v2298
        %v2300 = vcombine.high %v2299, 0.0
        %2301 = vrot.lane.b32.xlu0 %v2190, 64
        %v2302 = vpop.permute.xlu0 %2301
        %2303 = vrot.lane.b32.xlu0 %v2197, 64
        %v2304 = vpop.permute.xlu0 %2303
        %v2307 = vunpack.c.l.s4 1983009808
        %v2308 = vunpack.c.0.s8 %v2307
        %v2309 = vlaneseq
        %v2310 = vshrl.u32 %v2309, 7
        %v2311 = vsub.s32 %v2308, %v2310
        %v2312 = vrot.slane %v2302, %v2311
        %v2315 = vunpack.c.l.s4 1983009808
        %v2316 = vunpack.c.0.s8 %v2315
        %v2317 = vlaneseq
        %v2318 = vshrl.u32 %v2317, 7
        %v2319 = vsub.s32 %v2316, %v2318
        %v2320 = vrot.slane %v2304, %v2319
        %v2321 = vcombine.low %v2312, %v2320
        %v2322 = vcombine.high %v2312, %v2320
        %v2324 = vunpack.c.l.s4 1934713408
        %v2325 = vunpack.c.0.s8 %v2324
        %v2326 = vlaneseq
        %v2327 = vshrl.u32 %v2326, 7
        %v2328 = vsub.s32 %v2325, %v2327
        %v2329 = vrot.slane %v2321, %v2328
        %v2331 = vunpack.c.l.s4 1934713408
        %v2332 = vunpack.c.0.s8 %v2331
        %v2333 = vlaneseq
        %v2334 = vshrl.u32 %v2333, 7
        %v2335 = vsub.s32 %v2332, %v2334
        %v2336 = vrot.slane %v2322, %v2335
        %v2337 = vcombine.low %v2329, %v2336
        %v2339 = vunpack.c.l.s4 1983009808
        %v2340 = vunpack.c.0.s8 %v2339
        %v2341 = vlaneseq
        %v2342 = vshrl.u32 %v2341, 7
        %v2343 = vsub.s32 %v2340, %v2342
        %v2344 = vrot.slane %v2337, %v2343
        %v2345 = vcombine.high %v2329, 0.0
        %v2346 = vcombine.low %v2344, %v2345
        %v2348 = vunpack.c.l.s4 1934713408
        %v2349 = vunpack.c.0.s8 %v2348
        %v2350 = vlaneseq
        %v2351 = vshrl.u32 %v2350, 7
        %v2352 = vsub.s32 %v2349, %v2351
        %v2353 = vrot.slane %v2346, %v2352
        %v2354 = vcombine.high %v2353, 0.0
        %v2355 = vpack.c.bf16 %v2245, %v2245
        %v2356 = vpack.c.bf16 %v2246, %v2246
        %v2357 = vpack.c.bf16 %v2299, %v2299
        %v2358 = vpack.c.bf16 %v2300, %v2300
        %v2359 = vpack.c.bf16 %v2353, %v2353
        %v2360 = vpack.c.bf16 %v2354, %v2354
        %vm2361 = vcmask 130048
        %v2363 = vsel %vm2361, %v2355, 0
        %v2366 = vsel %vm2361, %v2357, 0
        %2368 = vmatprep.subr.bf16.mxu0 0
        %2369 = vmatpush1.bf16.xpose.msra.mxu0 %v2366
        %2370 = vmatprep.subr.bf16.mxu0 0
        %2371 = vmatpush1.bf16.xpose.msra.mxu0 0
        %2372 = vmatprep.subr.bf16.mxu0 0
        %2373 = vmatpush1.bf16.xpose.msra.mxu0 0
        %2374 = vmatprep.subr.bf16.mxu0 0
        %2375 = vmatpush1.bf16.xpose.msra.mxu0 0
        %2376 = vmatprep.subr.bf16.mxu0 0
        %2377 = vmatpush1.bf16.xpose.msra.mxu0 0
        %2378 = vmatprep.subr.bf16.mxu0 0
        %2379 = vmatpush1.bf16.xpose.msra.mxu0 0
        %2380 = vmatprep.subr.bf16.mxu0 0
        %2381 = vmatpush1.bf16.xpose.msra.mxu0 0
        %2382 = vmatprep.subr.bf16.mxu0 0
        %2383 = vmatpush1.bf16.xpose.msra.mxu0 0
        %2384 = vmatprep.subr.bf16.mxu0 0
        %2385 = vmatpush1.bf16.xpose.msra.mxu0 0
        %2386 = vmatprep.subr.bf16.mxu0 0
        %2387 = vmatpush1.bf16.xpose.msra.mxu0 0
        %2388 = vmatprep.subr.bf16.mxu0 0
        %2389 = vmatpush1.bf16.xpose.msra.mxu0 0
        %2390 = vmatprep.subr.bf16.mxu0 0
        %2391 = vmatpush1.bf16.xpose.msra.mxu0 0
        %2392 = vmatprep.subr.bf16.mxu0 0
        %2393 = vmatpush1.bf16.xpose.msra.mxu0 0
        %2394 = vmatprep.subr.bf16.mxu0 0
        %2395 = vmatpush1.bf16.xpose.msra.mxu0 0
        %2396 = vmatprep.subr.bf16.mxu0 0
        %2397 = vmatpush1.bf16.xpose.msra.mxu0 0
        %2398 = vmatprep.subr.bf16.mxu0 0
        %2399 = vmatpush1.bf16.xpose.msra.mxu0 0
        %2400 = vmatprep.mubr.bf16.mxu0 0
        %2401 = vmatmul.mubr.bf16.gmra.mrb[0].mxu0 %v2363
        %v2402 = vpop.f32.mrb[0].mxu0
        %v2403 = vadd.f32 0.0, %v2402
        %v2404 = vpop.f32.mrb[0].mxu0
        %v2405 = vpop.f32.mrb[0].mxu0
        %v2406 = vpop.f32.mrb[0].mxu0
        %2407 = vdwg.mxu0
        %v2409 = vsel %vm2361, %v2356, 0
        %v2412 = vsel %vm2361, %v2358, 0
        %2414 = vmatprep.subr.bf16.mxu0 0
        %2415 = vmatpush1.bf16.xpose.msra.mxu0 %v2412
        %2416 = vmatprep.subr.bf16.mxu0 0
        %2417 = vmatpush1.bf16.xpose.msra.mxu0 0
        %2418 = vmatprep.subr.bf16.mxu0 0
        %2419 = vmatpush1.bf16.xpose.msra.mxu0 0
        %2420 = vmatprep.subr.bf16.mxu0 0
        %2421 = vmatpush1.bf16.xpose.msra.mxu0 0
        %2422 = vmatprep.subr.bf16.mxu0 0
        %2423 = vmatpush1.bf16.xpose.msra.mxu0 0
        %2424 = vmatprep.subr.bf16.mxu0 0
        %2425 = vmatpush1.bf16.xpose.msra.mxu0 0
        %2426 = vmatprep.subr.bf16.mxu0 0
        %2427 = vmatpush1.bf16.xpose.msra.mxu0 0
        %2428 = vmatprep.subr.bf16.mxu0 0
        %2429 = vmatpush1.bf16.xpose.msra.mxu0 0
        %2430 = vmatprep.subr.bf16.mxu0 0
        %2431 = vmatpush1.bf16.xpose.msra.mxu0 0
        %2432 = vmatprep.subr.bf16.mxu0 0
        %2433 = vmatpush1.bf16.xpose.msra.mxu0 0
        %2434 = vmatprep.subr.bf16.mxu0 0
        %2435 = vmatpush1.bf16.xpose.msra.mxu0 0
        %2436 = vmatprep.subr.bf16.mxu0 0
        %2437 = vmatpush1.bf16.xpose.msra.mxu0 0
        %2438 = vmatprep.subr.bf16.mxu0 0
        %2439 = vmatpush1.bf16.xpose.msra.mxu0 0
        %2440 = vmatprep.subr.bf16.mxu0 0
        %2441 = vmatpush1.bf16.xpose.msra.mxu0 0
        %2442 = vmatprep.subr.bf16.mxu0 0
        %2443 = vmatpush1.bf16.xpose.msra.mxu0 0
        %2444 = vmatprep.subr.bf16.mxu0 0
        %2445 = vmatpush1.bf16.xpose.msra.mxu0 0
        %2446 = vmatprep.mubr.bf16.mxu0 0
        %2447 = vmatmul.mubr.bf16.gmra.mrb[0].mxu0 %v2409
        %v2448 = vpop.f32.mrb[0].mxu0
        %v2449 = vadd.f32 0.0, %v2448
        %v2450 = vpop.f32.mrb[0].mxu0
        %v2451 = vpop.f32.mrb[0].mxu0
        %v2452 = vpop.f32.mrb[0].mxu0
        %2453 = vdwg.mxu0
        %v2454 = vmul.f32 %v2403, 0.25
        %v2455 = vmul.f32 %v2449, 0.25
        %v2456 = vadd.f32 %v2454, %v2125
        %v2457 = vadd.f32 %v2455, %v2125
        %vm2458 = vcmask 18432
        %v2459 = vsel %vm2458, %v2456, -inf
        %2460 = vmax.xlane.f32.xlu0 %v2459
        %v2461 = vpop.xlane.xlu0 %2460
        %v2462 = vsel %vm2458, %v2457, -inf
        %2463 = vmax.xlane.f32.xlu0 %v2462
        %v2464 = vpop.xlane.xlu0 %2463
        %v2465 = vsub.f32 %v2456, %v2461
        %v2466 = vsub.f32 %v2457, %v2464
        %v2467 = vmul.f32 %v2465, 1.442695
        %v2468 = vpow.pop %v2467
        %v2469 = vmul.f32 %v2466, 1.442695
        %v2470 = vpow.pop %v2469
        %v2471 = vsel %vm2458, %v2468, 0.0
        %2472 = vadd.xlane.f32.xlu0 %v2471
        %v2473 = vpop.xlane.xlu0 %2472
        %v2474 = vsel %vm2458, %v2470, 0.0
        %2475 = vadd.xlane.f32.xlu0 %v2474
        %v2476 = vpop.xlane.xlu0 %2475
        %v2477 = vrcp.pop %v2473
        %v2478 = vrcp.pop %v2476
        %v2479 = vmul.f32 %v2468, %v2477
        %v2480 = vmul.f32 %v2470, %v2478
        %v2481 = vpack.c.bf16 %v2479, %v2479
        %v2482 = vpack.c.bf16 %v2480, %v2480
        %vm2483 = vcmask 23552
        %v2485 = vsel %vm2483, %v2481, 0
        %vm2487 = vcmask 1040384
        %vm2488 = vcmask 1041408
        %v2489 = vsel %vm2487, 4294967295, 65535
        %v2490 = vsel %vm2488, %v2489, 0
        %v2492 = vand.u32 %v2359, %v2490
        %2494 = vmatprep.subr.bf16.mxu0 0
        %2495 = vmatpush1.bf16.msra.mxu0 %v2492
        %2496 = vmatprep.subr.bf16.mxu0 0
        %2497 = vmatpush1.bf16.msra.mxu0 0
        %2498 = vmatprep.subr.bf16.mxu0 0
        %2499 = vmatpush1.bf16.msra.mxu0 0
        %2500 = vmatprep.subr.bf16.mxu0 0
        %2501 = vmatpush1.bf16.msra.mxu0 0
        %2502 = vmatprep.subr.bf16.mxu0 0
        %2503 = vmatpush1.bf16.msra.mxu0 0
        %2504 = vmatprep.subr.bf16.mxu0 0
        %2505 = vmatpush1.bf16.msra.mxu0 0
        %2506 = vmatprep.subr.bf16.mxu0 0
        %2507 = vmatpush1.bf16.msra.mxu0 0
        %2508 = vmatprep.subr.bf16.mxu0 0
        %2509 = vmatpush1.bf16.msra.mxu0 0
        %2510 = vmatprep.subr.bf16.mxu0 0
        %2511 = vmatpush1.bf16.msra.mxu0 0
        %2512 = vmatprep.subr.bf16.mxu0 0
        %2513 = vmatpush1.bf16.msra.mxu0 0
        %2514 = vmatprep.subr.bf16.mxu0 0
        %2515 = vmatpush1.bf16.msra.mxu0 0
        %2516 = vmatprep.subr.bf16.mxu0 0
        %2517 = vmatpush1.bf16.msra.mxu0 0
        %2518 = vmatprep.subr.bf16.mxu0 0
        %2519 = vmatpush1.bf16.msra.mxu0 0
        %2520 = vmatprep.subr.bf16.mxu0 0
        %2521 = vmatpush1.bf16.msra.mxu0 0
        %2522 = vmatprep.subr.bf16.mxu0 0
        %2523 = vmatpush1.bf16.msra.mxu0 0
        %2524 = vmatprep.subr.bf16.mxu0 0
        %2525 = vmatpush1.bf16.msra.mxu0 0
        %2526 = vmatprep.mubr.bf16.mxu0 0
        %2527 = vmatmul.mubr.bf16.gmra.mrb[0].mxu0 %v2485
        %v2528 = vpop.f32.mrb[0].mxu0
        %v2529 = vadd.f32 0.0, %v2528
        %v2530 = vpop.f32.mrb[0].mxu0
        %v2531 = vpop.f32.mrb[0].mxu0
        %v2532 = vpop.f32.mrb[0].mxu0
        %2533 = vdwg.mxu0
        %v2535 = vsel %vm2483, %v2482, 0
        %v2538 = vand.u32 %v2360, %v2490
        %2540 = vmatprep.subr.bf16.mxu0 0
        %2541 = vmatpush1.bf16.msra.mxu0 %v2538
        %2542 = vmatprep.subr.bf16.mxu0 0
        %2543 = vmatpush1.bf16.msra.mxu0 0
        %2544 = vmatprep.subr.bf16.mxu0 0
        %2545 = vmatpush1.bf16.msra.mxu0 0
        %2546 = vmatprep.subr.bf16.mxu0 0
        %2547 = vmatpush1.bf16.msra.mxu0 0
        %2548 = vmatprep.subr.bf16.mxu0 0
        %2549 = vmatpush1.bf16.msra.mxu0 0
        %2550 = vmatprep.subr.bf16.mxu0 0
        %2551 = vmatpush1.bf16.msra.mxu0 0
        %2552 = vmatprep.subr.bf16.mxu0 0
        %2553 = vmatpush1.bf16.msra.mxu0 0
        %2554 = vmatprep.subr.bf16.mxu0 0
        %2555 = vmatpush1.bf16.msra.mxu0 0
        %2556 = vmatprep.subr.bf16.mxu0 0
        %2557 = vmatpush1.bf16.msra.mxu0 0
        %2558 = vmatprep.subr.bf16.mxu0 0
        %2559 = vmatpush1.bf16.msra.mxu0 0
        %2560 = vmatprep.subr.bf16.mxu0 0
        %2561 = vmatpush1.bf16.msra.mxu0 0
        %2562 = vmatprep.subr.bf16.mxu0 0
        %2563 = vmatpush1.bf16.msra.mxu0 0
        %2564 = vmatprep.subr.bf16.mxu0 0
        %2565 = vmatpush1.bf16.msra.mxu0 0
        %2566 = vmatprep.subr.bf16.mxu0 0
        %2567 = vmatpush1.bf16.msra.mxu0 0
        %2568 = vmatprep.subr.bf16.mxu0 0
        %2569 = vmatpush1.bf16.msra.mxu0 0
        %2570 = vmatprep.subr.bf16.mxu0 0
        %2571 = vmatpush1.bf16.msra.mxu0 0
        %2572 = vmatprep.mubr.bf16.mxu0 0
        %2573 = vmatmul.mubr.bf16.gmra.mrb[0].mxu0 %v2535
        %v2574 = vpop.f32.mrb[0].mxu0
        %v2575 = vadd.f32 0.0, %v2574
        %v2576 = vpop.f32.mrb[0].mxu0
        %v2577 = vpop.f32.mrb[0].mxu0
        %v2578 = vpop.f32.mrb[0].mxu0
        %2579 = vdwg.mxu0
        %v2581 = vunpack.c.l.s4 1983009808
        %v2582 = vunpack.c.0.s8 %v2581
        %v2583 = vlaneseq
        %v2584 = vshrl.u32 %v2583, 7
        %v2585 = vsub.s32 %v2582, %v2584
        %v2586 = vrot.slane %v2529, %v2585
        %v2588 = vunpack.c.l.s4 1983009808
        %v2589 = vunpack.c.0.s8 %v2588
        %v2590 = vlaneseq
        %v2591 = vshrl.u32 %v2590, 7
        %v2592 = vsub.s32 %v2589, %v2591
        %v2593 = vrot.slane %v2575, %v2592
        %v2594 = vcombine.low %v2586, %v2593
        %v2595 = vcombine.high %v2586, %v2593
        %v2597 = vunpack.c.l.s4 1934713408
        %v2598 = vunpack.c.0.s8 %v2597
        %v2599 = vlaneseq
        %v2600 = vshrl.u32 %v2599, 7
        %v2601 = vsub.s32 %v2598, %v2600
        %v2602 = vrot.slane %v2594, %v2601
        %v2604 = vunpack.c.l.s4 1934713408
        %v2605 = vunpack.c.0.s8 %v2604
        %v2606 = vlaneseq
        %v2607 = vshrl.u32 %v2606, 7
        %v2608 = vsub.s32 %v2605, %v2607
        %v2609 = vrot.slane %v2595, %v2608
        %v2610 = vcombine.low %v2602, %v2609
        %v2612 = vunpack.c.l.s4 1983009808
        %v2613 = vunpack.c.0.s8 %v2612
        %v2614 = vlaneseq
        %v2615 = vshrl.u32 %v2614, 7
        %v2616 = vsub.s32 %v2613, %v2615
        %v2617 = vrot.slane %v2610, %v2616
        %v2618 = vcombine.high %v2602, 0.0
        %v2619 = vcombine.low %v2617, %v2618
        %v2621 = vunpack.c.l.s4 1934713408
        %v2622 = vunpack.c.0.s8 %v2621
        %v2623 = vlaneseq
        %v2624 = vshrl.u32 %v2623, 7
        %v2625 = vsub.s32 %v2622, %v2624
        %v2626 = vrot.slane %v2619, %v2625
        %v2627 = vcombine.high %v2626, 0.0
        %2629 = vrot.lane.b32.xlu0 %v2627, 16
        %v2630 = vpop.permute.xlu0 %2629
        %v2632 = vsel %vm2361, %v2626, %v2630
        %v2633 = vpack.c.bf16 %v2632, %v2632
        %v2634 = vld [vmem:[%s1519] sm:$0xf]
        %v2635 = vld [vmem:[%s1519 + $0x4] sm:$0xf]
        %v2636 = vld [vmem:[%s1519 + $0x8] sm:$0xf]
        %v2637 = vld [vmem:[%s1519 + $0xc] sm:$0xf]
        %v2638 = vld [vmem:[%s1522] sm:$0x1]
        %v2640 = vlaneseq
        %v2641 = vshrl.u32 %v2640, 7
        %v2642 = vsub.s32 0, %v2641
        %v2643 = vrot.slane %v2638, %v2642
        %v2649 = vunpack.c.l.b16 %v2634
        %v2650 = vunpack.c.l.b16 %v2635
        %v2651 = vunpack.c.l.b16 %v2636
        %v2652 = vunpack.c.l.b16 %v2637
        %v2653 = vpack.c.b16 %v2650, %v2649
        %v2654 = vpack.c.b16 %v2652, %v2651
        %v2658 = vsel %vm2151, %v2633, 0
        %2660 = vmatprep.subr.bf16.mxu0 0
        %2661 = vmatpush1.bf16.msra.mxu0 %v2653
        %2662 = vmatprep.subr.bf16.mxu0 0
        %2663 = vmatpush1.bf16.msra.mxu0 %v2654
        %2664 = vmatprep.subr.bf16.mxu0 0
        %2665 = vmatpush1.bf16.msra.mxu0 0
        %2666 = vmatprep.subr.bf16.mxu0 0
        %2667 = vmatpush1.bf16.msra.mxu0 0
        %2668 = vmatprep.subr.bf16.mxu0 0
        %2669 = vmatpush1.bf16.msra.mxu0 0
        %2670 = vmatprep.subr.bf16.mxu0 0
        %2671 = vmatpush1.bf16.msra.mxu0 0
        %2672 = vmatprep.subr.bf16.mxu0 0
        %2673 = vmatpush1.bf16.msra.mxu0 0
        %2674 = vmatprep.subr.bf16.mxu0 0
        %2675 = vmatpush1.bf16.msra.mxu0 0
        %2676 = vmatprep.subr.bf16.mxu0 0
        %2677 = vmatpush1.bf16.msra.mxu0 0
        %2678 = vmatprep.subr.bf16.mxu0 0
        %2679 = vmatpush1.bf16.msra.mxu0 0
        %2680 = vmatprep.subr.bf16.mxu0 0
        %2681 = vmatpush1.bf16.msra.mxu0 0
        %2682 = vmatprep.subr.bf16.mxu0 0
        %2683 = vmatpush1.bf16.msra.mxu0 0
        %2684 = vmatprep.subr.bf16.mxu0 0
        %2685 = vmatpush1.bf16.msra.mxu0 0
        %2686 = vmatprep.subr.bf16.mxu0 0
        %2687 = vmatpush1.bf16.msra.mxu0 0
        %2688 = vmatprep.subr.bf16.mxu0 0
        %2689 = vmatpush1.bf16.msra.mxu0 0
        %2690 = vmatprep.subr.bf16.mxu0 0
        %2691 = vmatpush1.bf16.msra.mxu0 0
        %2692 = vmatprep.mubr.bf16.mxu0 0
        %2693 = vmatmul.mubr.bf16.gmra.mrb[0].mxu0 %v2658
        %v2694 = vpop.f32.mrb[0].mxu0
        %v2695 = vadd.f32 %v2643, %v2694
        %v2696 = vpop.f32.mrb[0].mxu0
        %v2697 = vpop.f32.mrb[0].mxu0
        %v2698 = vpop.f32.mrb[0].mxu0
        %2699 = vdwg.mxu0
        %v2700 = vadd.f32 %v2126, %v2695
        %vm2701 = vcmask 256000
        %v2702 = vsel %vm2701, %v2700, 0.0
        %2703 = vadd.xlane.f32.xlu0 %v2702
        %v2704 = vpop.xlane.xlu0 %2703
        %v2705 = vrcp.pop 32.0
        %v2706 = vmul.f32 %v2704, %v2705
        %v2707 = vsub.f32 %v2700, %v2706
        %v2708 = vmul.f32 %v2707, %v2707
        %v2709 = vsel %vm2701, %v2708, 0.0
        %2710 = vadd.xlane.f32.xlu0 %v2709
        %v2711 = vpop.xlane.xlu0 %2710
        %v2712 = vmul.f32 %v2711, %v2705
        %v2713 = vadd.f32 %v2712, 1e-05
        %v2714 = vrsqrt.pop %v2713
        %v2715 = vmul.f32 %v2707, %v2714
        %v2716 = vld [vmem:[%s1565] sm:$0x1]
        %v2718 = vlaneseq
        %v2719 = vshrl.u32 %v2718, 7
        %v2720 = vsub.s32 0, %v2719
        %v2721 = vrot.slane %v2716, %v2720
        %v2723 = vmul.f32 %v2715, %v2721
        %v2724 = vld [vmem:[%s1568] sm:$0x1]
        %v2726 = vlaneseq
        %v2727 = vshrl.u32 %v2726, 7
        %v2728 = vsub.s32 0, %v2727
        %v2729 = vrot.slane %v2724, %v2728
        %v2731 = vadd.f32 %v2723, %v2729
        %v2732 = vpack.c.bf16 %v2731, %v2731
        %v2733 = vld [vmem:[%s1527] sm:$0xf]
        %v2734 = vld [vmem:[%s1527 + $0x4] sm:$0xf]
        %v2735 = vld [vmem:[%s1527 + $0x8] sm:$0xf]
        %v2736 = vld [vmem:[%s1527 + $0xc] sm:$0xf]
        %v2737 = vld [vmem:[%s1530] sm:$0x1]
        %v2739 = vlaneseq
        %v2740 = vshrl.u32 %v2739, 7
        %v2741 = vsub.s32 0, %v2740
        %v2742 = vrot.slane %v2737, %v2741
        %v2748 = vunpack.c.l.b16 %v2733
        %v2749 = vunpack.c.l.b16 %v2734
        %v2750 = vunpack.c.l.b16 %v2735
        %v2751 = vunpack.c.l.b16 %v2736
        %v2752 = vpack.c.b16 %v2749, %v2748
        %v2753 = vpack.c.b16 %v2751, %v2750
        %v2757 = vsel %vm2151, %v2732, 0
        %2759 = vmatprep.subr.bf16.mxu0 0
        %2760 = vmatpush1.bf16.msra.mxu0 %v2752
        %2761 = vmatprep.subr.bf16.mxu0 0
        %2762 = vmatpush1.bf16.msra.mxu0 %v2753
        %2763 = vmatprep.subr.bf16.mxu0 0
        %2764 = vmatpush1.bf16.msra.mxu0 0
        %2765 = vmatprep.subr.bf16.mxu0 0
        %2766 = vmatpush1.bf16.msra.mxu0 0
        %2767 = vmatprep.subr.bf16.mxu0 0
        %2768 = vmatpush1.bf16.msra.mxu0 0
        %2769 = vmatprep.subr.bf16.mxu0 0
        %2770 = vmatpush1.bf16.msra.mxu0 0
        %2771 = vmatprep.subr.bf16.mxu0 0
        %2772 = vmatpush1.bf16.msra.mxu0 0
        %2773 = vmatprep.subr.bf16.mxu0 0
        %2774 = vmatpush1.bf16.msra.mxu0 0
        %2775 = vmatprep.subr.bf16.mxu0 0
        %2776 = vmatpush1.bf16.msra.mxu0 0
        %2777 = vmatprep.subr.bf16.mxu0 0
        %2778 = vmatpush1.bf16.msra.mxu0 0
        %2779 = vmatprep.subr.bf16.mxu0 0
        %2780 = vmatpush1.bf16.msra.mxu0 0
        %2781 = vmatprep.subr.bf16.mxu0 0
        %2782 = vmatpush1.bf16.msra.mxu0 0
        %2783 = vmatprep.subr.bf16.mxu0 0
        %2784 = vmatpush1.bf16.msra.mxu0 0
        %2785 = vmatprep.subr.bf16.mxu0 0
        %2786 = vmatpush1.bf16.msra.mxu0 0
        %2787 = vmatprep.subr.bf16.mxu0 0
        %2788 = vmatpush1.bf16.msra.mxu0 0
        %2789 = vmatprep.subr.bf16.mxu0 0
        %2790 = vmatpush1.bf16.msra.mxu0 0
        %2791 = vmatprep.mubr.bf16.mxu0 0
        %2792 = vmatmul.mubr.bf16.gmra.mrb[0].mxu0 %v2757
        %v2793 = vpop.f32.mrb[0].mxu0
        %v2794 = vadd.f32 %v2742, %v2793
        %v2795 = vpop.f32.mrb[0].mxu0
        %v2796 = vpop.f32.mrb[0].mxu0
        %v2797 = vpop.f32.mrb[0].mxu0
        %2798 = vdwg.mxu0
        %v2799 = vld [vmem:[%s1506] sm:$0x1f]
        %v2800 = vpack.c.bf16 %v2799, %v2799
        %v2801 = vld [vmem:[%s1535] sm:$0xf]
        %v2802 = vld [vmem:[%s1535 + $0x4] sm:$0xf]
        %v2803 = vld [vmem:[%s1535 + $0x8] sm:$0xf]
        %v2804 = vld [vmem:[%s1535 + $0xc] sm:$0xf]
        %v2805 = vld [vmem:[%s1538] sm:$0x1]
        %v2807 = vlaneseq
        %v2808 = vshrl.u32 %v2807, 7
        %v2809 = vsub.s32 0, %v2808
        %v2810 = vrot.slane %v2805, %v2809
        %v2816 = vunpack.c.l.b16 %v2801
        %v2817 = vunpack.c.l.b16 %v2802
        %v2818 = vunpack.c.l.b16 %v2803
        %v2819 = vunpack.c.l.b16 %v2804
        %v2820 = vpack.c.b16 %v2817, %v2816
        %v2821 = vpack.c.b16 %v2819, %v2818
        %v2825 = vsel %vm2151, %v2800, 0
        %2827 = vmatprep.subr.bf16.mxu0 0
        %2828 = vmatpush1.bf16.msra.mxu0 %v2820
        %2829 = vmatprep.subr.bf16.mxu0 0
        %2830 = vmatpush1.bf16.msra.mxu0 %v2821
        %2831 = vmatprep.subr.bf16.mxu0 0
        %2832 = vmatpush1.bf16.msra.mxu0 0
        %2833 = vmatprep.subr.bf16.mxu0 0
        %2834 = vmatpush1.bf16.msra.mxu0 0
        %2835 = vmatprep.subr.bf16.mxu0 0
        %2836 = vmatpush1.bf16.msra.mxu0 0
        %2837 = vmatprep.subr.bf16.mxu0 0
        %2838 = vmatpush1.bf16.msra.mxu0 0
        %2839 = vmatprep.subr.bf16.mxu0 0
        %2840 = vmatpush1.bf16.msra.mxu0 0
        %2841 = vmatprep.subr.bf16.mxu0 0
        %2842 = vmatpush1.bf16.msra.mxu0 0
        %2843 = vmatprep.subr.bf16.mxu0 0
        %2844 = vmatpush1.bf16.msra.mxu0 0
        %2845 = vmatprep.subr.bf16.mxu0 0
        %2846 = vmatpush1.bf16.msra.mxu0 0
        %2847 = vmatprep.subr.bf16.mxu0 0
        %2848 = vmatpush1.bf16.msra.mxu0 0
        %2849 = vmatprep.subr.bf16.mxu0 0
        %2850 = vmatpush1.bf16.msra.mxu0 0
        %2851 = vmatprep.subr.bf16.mxu0 0
        %2852 = vmatpush1.bf16.msra.mxu0 0
        %2853 = vmatprep.subr.bf16.mxu0 0
        %2854 = vmatpush1.bf16.msra.mxu0 0
        %2855 = vmatprep.subr.bf16.mxu0 0
        %2856 = vmatpush1.bf16.msra.mxu0 0
        %2857 = vmatprep.subr.bf16.mxu0 0
        %2858 = vmatpush1.bf16.msra.mxu0 0
        %2859 = vmatprep.mubr.bf16.mxu0 0
        %2860 = vmatmul.mubr.bf16.gmra.mrb[0].mxu0 %v2825
        %v2861 = vpop.f32.mrb[0].mxu0
        %v2862 = vadd.f32 %v2810, %v2861
        %v2863 = vpop.f32.mrb[0].mxu0
        %v2864 = vpop.f32.mrb[0].mxu0
        %v2865 = vpop.f32.mrb[0].mxu0
        %2866 = vdwg.mxu0
        %2868 = vrot.lane.b32.xlu0 %v2794, 112
        %v2869 = vpop.permute.xlu0 %2868
        %v2871 = vunpack.c.l.s4 1983009808
        %v2872 = vunpack.c.0.s8 %v2871
        %v2873 = vlaneseq
        %v2874 = vshrl.u32 %v2873, 7
        %v2875 = vsub.s32 %v2872, %v2874
        %v2876 = vrot.slane %v2794, %v2875
        %v2879 = vunpack.c.l.s4 1983009808
        %v2880 = vunpack.c.0.s8 %v2879
        %v2881 = vlaneseq
        %v2882 = vshrl.u32 %v2881, 7
        %v2883 = vsub.s32 %v2880, %v2882
        %v2884 = vrot.slane %v2869, %v2883
        %v2885 = vcombine.low %v2876, %v2884
        %v2886 = vcombine.high %v2876, %v2884
        %v2888 = vunpack.c.l.s4 1934713408
        %v2889 = vunpack.c.0.s8 %v2888
        %v2890 = vlaneseq
        %v2891 = vshrl.u32 %v2890, 7
        %v2892 = vsub.s32 %v2889, %v2891
        %v2893 = vrot.slane %v2885, %v2892
        %v2895 = vunpack.c.l.s4 1934713408
        %v2896 = vunpack.c.0.s8 %v2895
        %v2897 = vlaneseq
        %v2898 = vshrl.u32 %v2897, 7
        %v2899 = vsub.s32 %v2896, %v2898
        %v2900 = vrot.slane %v2886, %v2899
        %v2901 = vcombine.low %v2893, %v2900
        %v2903 = vunpack.c.l.s4 1983009808
        %v2904 = vunpack.c.0.s8 %v2903
        %v2905 = vlaneseq
        %v2906 = vshrl.u32 %v2905, 7
        %v2907 = vsub.s32 %v2904, %v2906
        %v2908 = vrot.slane %v2901, %v2907
        %v2909 = vcombine.high %v2893, 0.0
        %v2910 = vcombine.low %v2908, %v2909
        %v2912 = vunpack.c.l.s4 1934713408
        %v2913 = vunpack.c.0.s8 %v2912
        %v2914 = vlaneseq
        %v2915 = vshrl.u32 %v2914, 7
        %v2916 = vsub.s32 %v2913, %v2915
        %v2917 = vrot.slane %v2910, %v2916
        %v2918 = vcombine.high %v2917, 0.0
        %2920 = vrot.lane.b32.xlu0 %v2862, 112
        %v2921 = vpop.permute.xlu0 %2920
        %v2924 = vunpack.c.l.s4 1983009808
        %v2925 = vunpack.c.0.s8 %v2924
        %v2926 = vlaneseq
        %v2927 = vshrl.u32 %v2926, 7
        %v2928 = vsub.s32 %v2925, %v2927
        %v2929 = vrot.slane %v2862, %v2928
        %v2930 = vcombine.high %v2862, 0.0
        %v2932 = vunpack.c.l.s4 1983009808
        %v2933 = vunpack.c.0.s8 %v2932
        %v2934 = vlaneseq
        %v2935 = vshrl.u32 %v2934, 7
        %v2936 = vsub.s32 %v2933, %v2935
        %v2937 = vrot.slane %v2921, %v2936
        %v2938 = vcombine.high %v2921, 0.0
        %v2939 = vcombine.low %v2929, %v2937
        %v2940 = vcombine.high %v2929, %v2937
        %v2942 = vunpack.c.l.s4 1934713408
        %v2943 = vunpack.c.0.s8 %v2942
        %v2944 = vlaneseq
        %v2945 = vshrl.u32 %v2944, 7
        %v2946 = vsub.s32 %v2943, %v2945
        %v2947 = vrot.slane %v2939, %v2946
        %v2949 = vunpack.c.l.s4 1934713408
        %v2950 = vunpack.c.0.s8 %v2949
        %v2951 = vlaneseq
        %v2952 = vshrl.u32 %v2951, 7
        %v2953 = vsub.s32 %v2950, %v2952
        %v2954 = vrot.slane %v2940, %v2953
        %v2955 = vcombine.low %v2930, %v2938
        %v2956 = vcombine.high %v2947, 0.0
        %v2957 = vcombine.high %v2954, 0.0
        %v2958 = vcombine.low %v2947, %v2954
        %v2960 = vunpack.c.l.s4 1983009808
        %v2961 = vunpack.c.0.s8 %v2960
        %v2962 = vlaneseq
        %v2963 = vshrl.u32 %v2962, 7
        %v2964 = vsub.s32 %v2961, %v2963
        %v2965 = vrot.slane %v2958, %v2964
        %v2966 = vcombine.low %v2956, %v2957
        %v2968 = vunpack.c.l.s4 1983009808
        %v2969 = vunpack.c.0.s8 %v2968
        %v2970 = vlaneseq
        %v2971 = vshrl.u32 %v2970, 7
        %v2972 = vsub.s32 %v2969, %v2971
        %v2973 = vrot.slane %v2966, %v2972
        %v2974 = vcombine.low %v2965, %v2973
        %v2976 = vunpack.c.l.s4 1934713408
        %v2977 = vunpack.c.0.s8 %v2976
        %v2978 = vlaneseq
        %v2979 = vshrl.u32 %v2978, 7
        %v2980 = vsub.s32 %v2977, %v2979
        %v2981 = vrot.slane %v2974, %v2980
        %v2983 = vunpack.c.l.s4 1934713408
        %v2984 = vunpack.c.0.s8 %v2983
        %v2985 = vlaneseq
        %v2986 = vshrl.u32 %v2985, 7
        %v2987 = vsub.s32 %v2984, %v2986
        %v2988 = vrot.slane %v2955, %v2987
        %v2990 = vunpack.c.l.s4 1934713408
        %v2991 = vunpack.c.0.s8 %v2990
        %v2992 = vlaneseq
        %v2993 = vshrl.u32 %v2992, 7
        %v2994 = vsub.s32 %v2991, %v2993
        %v2995 = vrot.slane %v2988, %v2994
        %v2996 = vcombine.low %v2981, %v2995
        %v2997 = vcombine.high %v2981, %v2995
        %2998 = vrot.lane.b32.xlu0 %v2862, 96
        %v2999 = vpop.permute.xlu0 %2998
        %3000 = vrot.lane.b32.xlu0 %v2921, 96
        %v3001 = vpop.permute.xlu0 %3000
        %v3005 = vunpack.c.l.s4 1983009808
        %v3006 = vunpack.c.0.s8 %v3005
        %v3007 = vlaneseq
        %v3008 = vshrl.u32 %v3007, 7
        %v3009 = vsub.s32 %v3006, %v3008
        %v3010 = vrot.slane %v2999, %v3009
        %v3011 = vcombine.high %v2999, 0.0
        %v3013 = vunpack.c.l.s4 1983009808
        %v3014 = vunpack.c.0.s8 %v3013
        %v3015 = vlaneseq
        %v3016 = vshrl.u32 %v3015, 7
        %v3017 = vsub.s32 %v3014, %v3016
        %v3018 = vrot.slane %v3001, %v3017
        %v3019 = vcombine.high %v3001, 0.0
        %v3020 = vcombine.low %v3010, %v3018
        %v3021 = vcombine.high %v3010, %v3018
        %v3023 = vunpack.c.l.s4 1934713408
        %v3024 = vunpack.c.0.s8 %v3023
        %v3025 = vlaneseq
        %v3026 = vshrl.u32 %v3025, 7
        %v3027 = vsub.s32 %v3024, %v3026
        %v3028 = vrot.slane %v3020, %v3027
        %v3030 = vunpack.c.l.s4 1934713408
        %v3031 = vunpack.c.0.s8 %v3030
        %v3032 = vlaneseq
        %v3033 = vshrl.u32 %v3032, 7
        %v3034 = vsub.s32 %v3031, %v3033
        %v3035 = vrot.slane %v3021, %v3034
        %v3036 = vcombine.low %v3011, %v3019
        %v3037 = vcombine.high %v3028, 0.0
        %v3038 = vcombine.high %v3035, 0.0
        %v3039 = vcombine.low %v3028, %v3035
        %v3041 = vunpack.c.l.s4 1983009808
        %v3042 = vunpack.c.0.s8 %v3041
        %v3043 = vlaneseq
        %v3044 = vshrl.u32 %v3043, 7
        %v3045 = vsub.s32 %v3042, %v3044
        %v3046 = vrot.slane %v3039, %v3045
        %v3047 = vcombine.low %v3037, %v3038
        %v3049 = vunpack.c.l.s4 1983009808
        %v3050 = vunpack.c.0.s8 %v3049
        %v3051 = vlaneseq
        %v3052 = vshrl.u32 %v3051, 7
        %v3053 = vsub.s32 %v3050, %v3052
        %v3054 = vrot.slane %v3047, %v3053
        %v3055 = vcombine.low %v3046, %v3054
        %v3057 = vunpack.c.l.s4 1934713408
        %v3058 = vunpack.c.0.s8 %v3057
        %v3059 = vlaneseq
        %v3060 = vshrl.u32 %v3059, 7
        %v3061 = vsub.s32 %v3058, %v3060
        %v3062 = vrot.slane %v3055, %v3061
        %v3064 = vunpack.c.l.s4 1934713408
        %v3065 = vunpack.c.0.s8 %v3064
        %v3066 = vlaneseq
        %v3067 = vshrl.u32 %v3066, 7
        %v3068 = vsub.s32 %v3065, %v3067
        %v3069 = vrot.slane %v3036, %v3068
        %v3071 = vunpack.c.l.s4 1934713408
        %v3072 = vunpack.c.0.s8 %v3071
        %v3073 = vlaneseq
        %v3074 = vshrl.u32 %v3073, 7
        %v3075 = vsub.s32 %v3072, %v3074
        %v3076 = vrot.slane %v3069, %v3075
        %v3077 = vcombine.low %v3062, %v3076
        %v3078 = vcombine.high %v3062, %v3076
        %v3079 = vpack.c.bf16 %v2917, %v2917
        %v3080 = vpack.c.bf16 %v2918, %v2918
        %v3081 = vpack.c.bf16 %v2996, %v2996
        %v3082 = vpack.c.bf16 %v2997, %v2997
        %v3083 = vpack.c.bf16 %v3077, %v3077
        %v3084 = vpack.c.bf16 %v3078, %v3078
        %v3086 = vsel %vm2361, %v3079, 0
        %v3089 = vsel %vm2361, %v3081, 0
        %3091 = vmatprep.subr.bf16.mxu0 0
        %3092 = vmatpush1.bf16.xpose.msra.mxu0 %v3089
        %3093 = vmatprep.subr.bf16.mxu0 0
        %3094 = vmatpush1.bf16.xpose.msra.mxu0 0
        %3095 = vmatprep.subr.bf16.mxu0 0
        %3096 = vmatpush1.bf16.xpose.msra.mxu0 0
        %3097 = vmatprep.subr.bf16.mxu0 0
        %3098 = vmatpush1.bf16.xpose.msra.mxu0 0
        %3099 = vmatprep.subr.bf16.mxu0 0
        %3100 = vmatpush1.bf16.xpose.msra.mxu0 0
        %3101 = vmatprep.subr.bf16.mxu0 0
        %3102 = vmatpush1.bf16.xpose.msra.mxu0 0
        %3103 = vmatprep.subr.bf16.mxu0 0
        %3104 = vmatpush1.bf16.xpose.msra.mxu0 0
        %3105 = vmatprep.subr.bf16.mxu0 0
        %3106 = vmatpush1.bf16.xpose.msra.mxu0 0
        %3107 = vmatprep.subr.bf16.mxu0 0
        %3108 = vmatpush1.bf16.xpose.msra.mxu0 0
        %3109 = vmatprep.subr.bf16.mxu0 0
        %3110 = vmatpush1.bf16.xpose.msra.mxu0 0
        %3111 = vmatprep.subr.bf16.mxu0 0
        %3112 = vmatpush1.bf16.xpose.msra.mxu0 0
        %3113 = vmatprep.subr.bf16.mxu0 0
        %3114 = vmatpush1.bf16.xpose.msra.mxu0 0
        %3115 = vmatprep.subr.bf16.mxu0 0
        %3116 = vmatpush1.bf16.xpose.msra.mxu0 0
        %3117 = vmatprep.subr.bf16.mxu0 0
        %3118 = vmatpush1.bf16.xpose.msra.mxu0 0
        %3119 = vmatprep.subr.bf16.mxu0 0
        %3120 = vmatpush1.bf16.xpose.msra.mxu0 0
        %3121 = vmatprep.subr.bf16.mxu0 0
        %3122 = vmatpush1.bf16.xpose.msra.mxu0 0
        %3123 = vmatprep.mubr.bf16.mxu0 0
        %3124 = vmatmul.mubr.bf16.gmra.mrb[0].mxu0 %v3086
        %v3125 = vpop.f32.mrb[0].mxu0
        %v3126 = vadd.f32 0.0, %v3125
        %v3127 = vpop.f32.mrb[0].mxu0
        %v3128 = vpop.f32.mrb[0].mxu0
        %v3129 = vpop.f32.mrb[0].mxu0
        %3130 = vdwg.mxu0
        %v3132 = vsel %vm2361, %v3080, 0
        %v3135 = vsel %vm2361, %v3082, 0
        %3137 = vmatprep.subr.bf16.mxu0 0
        %3138 = vmatpush1.bf16.xpose.msra.mxu0 %v3135
        %3139 = vmatprep.subr.bf16.mxu0 0
        %3140 = vmatpush1.bf16.xpose.msra.mxu0 0
        %3141 = vmatprep.subr.bf16.mxu0 0
        %3142 = vmatpush1.bf16.xpose.msra.mxu0 0
        %3143 = vmatprep.subr.bf16.mxu0 0
        %3144 = vmatpush1.bf16.xpose.msra.mxu0 0
        %3145 = vmatprep.subr.bf16.mxu0 0
        %3146 = vmatpush1.bf16.xpose.msra.mxu0 0
        %3147 = vmatprep.subr.bf16.mxu0 0
        %3148 = vmatpush1.bf16.xpose.msra.mxu0 0
        %3149 = vmatprep.subr.bf16.mxu0 0
        %3150 = vmatpush1.bf16.xpose.msra.mxu0 0
        %3151 = vmatprep.subr.bf16.mxu0 0
        %3152 = vmatpush1.bf16.xpose.msra.mxu0 0
        %3153 = vmatprep.subr.bf16.mxu0 0
        %3154 = vmatpush1.bf16.xpose.msra.mxu0 0
        %3155 = vmatprep.subr.bf16.mxu0 0
        %3156 = vmatpush1.bf16.xpose.msra.mxu0 0
        %3157 = vmatprep.subr.bf16.mxu0 0
        %3158 = vmatpush1.bf16.xpose.msra.mxu0 0
        %3159 = vmatprep.subr.bf16.mxu0 0
        %3160 = vmatpush1.bf16.xpose.msra.mxu0 0
        %3161 = vmatprep.subr.bf16.mxu0 0
        %3162 = vmatpush1.bf16.xpose.msra.mxu0 0
        %3163 = vmatprep.subr.bf16.mxu0 0
        %3164 = vmatpush1.bf16.xpose.msra.mxu0 0
        %3165 = vmatprep.subr.bf16.mxu0 0
        %3166 = vmatpush1.bf16.xpose.msra.mxu0 0
        %3167 = vmatprep.subr.bf16.mxu0 0
        %3168 = vmatpush1.bf16.xpose.msra.mxu0 0
        %3169 = vmatprep.mubr.bf16.mxu0 0
        %3170 = vmatmul.mubr.bf16.gmra.mrb[0].mxu0 %v3132
        %v3171 = vpop.f32.mrb[0].mxu0
        %v3172 = vadd.f32 0.0, %v3171
        %v3173 = vpop.f32.mrb[0].mxu0
        %v3174 = vpop.f32.mrb[0].mxu0
        %v3175 = vpop.f32.mrb[0].mxu0
        %3176 = vdwg.mxu0
        %v3177 = vmul.f32 %v3126, 0.25
        %v3178 = vmul.f32 %v3172, 0.25
        %vm3179 = vcmask 34816
        %v3180 = vsel %vm3179, %v3177, -inf
        %3181 = vmax.xlane.f32.xlu0 %v3180
        %v3182 = vpop.xlane.xlu0 %3181
        %v3183 = vsel %vm3179, %v3178, -inf
        %3184 = vmax.xlane.f32.xlu0 %v3183
        %v3185 = vpop.xlane.xlu0 %3184
        %v3186 = vsub.f32 %v3177, %v3182
        %v3187 = vsub.f32 %v3178, %v3185
        %v3188 = vmul.f32 %v3186, 1.442695
        %v3189 = vpow.pop %v3188
        %v3190 = vmul.f32 %v3187, 1.442695
        %v3191 = vpow.pop %v3190
        %v3192 = vsel %vm3179, %v3189, 0.0
        %3193 = vadd.xlane.f32.xlu0 %v3192
        %v3194 = vpop.xlane.xlu0 %3193
        %v3195 = vsel %vm3179, %v3191, 0.0
        %3196 = vadd.xlane.f32.xlu0 %v3195
        %v3197 = vpop.xlane.xlu0 %3196
        %v3198 = vrcp.pop %v3194
        %v3199 = vrcp.pop %v3197
        %v3200 = vmul.f32 %v3189, %v3198
        %v3201 = vmul.f32 %v3191, %v3199
        %v3202 = vpack.c.bf16 %v3200, %v3200
        %v3203 = vpack.c.bf16 %v3201, %v3201
        %vm3204 = vcmask 39936
        %v3206 = vsel %vm3204, %v3202, 0
        %vm3208 = vcmask 1042432
        %v3209 = vsel %vm2488, 4294967295, 65535
        %v3210 = vsel %vm3208, %v3209, 0
        %v3212 = vand.u32 %v3083, %v3210
        %3214 = vmatprep.subr.bf16.mxu0 0
        %3215 = vmatpush1.bf16.msra.mxu0 %v3212
        %3216 = vmatprep.subr.bf16.mxu0 0
        %3217 = vmatpush1.bf16.msra.mxu0 0
        %3218 = vmatprep.subr.bf16.mxu0 0
        %3219 = vmatpush1.bf16.msra.mxu0 0
        %3220 = vmatprep.subr.bf16.mxu0 0
        %3221 = vmatpush1.bf16.msra.mxu0 0
        %3222 = vmatprep.subr.bf16.mxu0 0
        %3223 = vmatpush1.bf16.msra.mxu0 0
        %3224 = vmatprep.subr.bf16.mxu0 0
        %3225 = vmatpush1.bf16.msra.mxu0 0
        %3226 = vmatprep.subr.bf16.mxu0 0
        %3227 = vmatpush1.bf16.msra.mxu0 0
        %3228 = vmatprep.subr.bf16.mxu0 0
        %3229 = vmatpush1.bf16.msra.mxu0 0
        %3230 = vmatprep.subr.bf16.mxu0 0
        %3231 = vmatpush1.bf16.msra.mxu0 0
        %3232 = vmatprep.subr.bf16.mxu0 0
        %3233 = vmatpush1.bf16.msra.mxu0 0
        %3234 = vmatprep.subr.bf16.mxu0 0
        %3235 = vmatpush1.bf16.msra.mxu0 0
        %3236 = vmatprep.subr.bf16.mxu0 0
        %3237 = vmatpush1.bf16.msra.mxu0 0
        %3238 = vmatprep.subr.bf16.mxu0 0
        %3239 = vmatpush1.bf16.msra.mxu0 0
        %3240 = vmatprep.subr.bf16.mxu0 0
        %3241 = vmatpush1.bf16.msra.mxu0 0
        %3242 = vmatprep.subr.bf16.mxu0 0
        %3243 = vmatpush1.bf16.msra.mxu0 0
        %3244 = vmatprep.subr.bf16.mxu0 0
        %3245 = vmatpush1.bf16.msra.mxu0 0
        %3246 = vmatprep.mubr.bf16.mxu0 0
        %3247 = vmatmul.mubr.bf16.gmra.mrb[0].mxu0 %v3206
        %v3248 = vpop.f32.mrb[0].mxu0
        %v3249 = vadd.f32 0.0, %v3248
        %v3250 = vpop.f32.mrb[0].mxu0
        %v3251 = vpop.f32.mrb[0].mxu0
        %v3252 = vpop.f32.mrb[0].mxu0
        %3253 = vdwg.mxu0
        %v3255 = vsel %vm3204, %v3203, 0
        %v3258 = vand.u32 %v3084, %v3210
        %3260 = vmatprep.subr.bf16.mxu0 0
        %3261 = vmatpush1.bf16.msra.mxu0 %v3258
        %3262 = vmatprep.subr.bf16.mxu0 0
        %3263 = vmatpush1.bf16.msra.mxu0 0
        %3264 = vmatprep.subr.bf16.mxu0 0
        %3265 = vmatpush1.bf16.msra.mxu0 0
        %3266 = vmatprep.subr.bf16.mxu0 0
        %3267 = vmatpush1.bf16.msra.mxu0 0
        %3268 = vmatprep.subr.bf16.mxu0 0
        %3269 = vmatpush1.bf16.msra.mxu0 0
        %3270 = vmatprep.subr.bf16.mxu0 0
        %3271 = vmatpush1.bf16.msra.mxu0 0
        %3272 = vmatprep.subr.bf16.mxu0 0
        %3273 = vmatpush1.bf16.msra.mxu0 0
        %3274 = vmatprep.subr.bf16.mxu0 0
        %3275 = vmatpush1.bf16.msra.mxu0 0
        %3276 = vmatprep.subr.bf16.mxu0 0
        %3277 = vmatpush1.bf16.msra.mxu0 0
        %3278 = vmatprep.subr.bf16.mxu0 0
        %3279 = vmatpush1.bf16.msra.mxu0 0
        %3280 = vmatprep.subr.bf16.mxu0 0
        %3281 = vmatpush1.bf16.msra.mxu0 0
        %3282 = vmatprep.subr.bf16.mxu0 0
        %3283 = vmatpush1.bf16.msra.mxu0 0
        %3284 = vmatprep.subr.bf16.mxu0 0
        %3285 = vmatpush1.bf16.msra.mxu0 0
        %3286 = vmatprep.subr.bf16.mxu0 0
        %3287 = vmatpush1.bf16.msra.mxu0 0
        %3288 = vmatprep.subr.bf16.mxu0 0
        %3289 = vmatpush1.bf16.msra.mxu0 0
        %3290 = vmatprep.subr.bf16.mxu0 0
        %3291 = vmatpush1.bf16.msra.mxu0 0
        %3292 = vmatprep.mubr.bf16.mxu0 0
        %3293 = vmatmul.mubr.bf16.gmra.mrb[0].mxu0 %v3255
        %v3294 = vpop.f32.mrb[0].mxu0
        %v3295 = vadd.f32 0.0, %v3294
        %v3296 = vpop.f32.mrb[0].mxu0
        %v3297 = vpop.f32.mrb[0].mxu0
        %v3298 = vpop.f32.mrb[0].mxu0
        %3299 = vdwg.mxu0
        %v3301 = vunpack.c.l.s4 1983009808
        %v3302 = vunpack.c.0.s8 %v3301
        %v3303 = vlaneseq
        %v3304 = vshrl.u32 %v3303, 7
        %v3305 = vsub.s32 %v3302, %v3304
        %v3306 = vrot.slane %v3249, %v3305
        %v3308 = vunpack.c.l.s4 1983009808
        %v3309 = vunpack.c.0.s8 %v3308
        %v3310 = vlaneseq
        %v3311 = vshrl.u32 %v3310, 7
        %v3312 = vsub.s32 %v3309, %v3311
        %v3313 = vrot.slane %v3295, %v3312
        %v3314 = vcombine.low %v3306, %v3313
        %v3315 = vcombine.high %v3306, %v3313
        %v3317 = vunpack.c.l.s4 1934713408
        %v3318 = vunpack.c.0.s8 %v3317
        %v3319 = vlaneseq
        %v3320 = vshrl.u32 %v3319, 7
        %v3321 = vsub.s32 %v3318, %v3320
        %v3322 = vrot.slane %v3314, %v3321
        %v3324 = vunpack.c.l.s4 1934713408
        %v3325 = vunpack.c.0.s8 %v3324
        %v3326 = vlaneseq
        %v3327 = vshrl.u32 %v3326, 7
        %v3328 = vsub.s32 %v3325, %v3327
        %v3329 = vrot.slane %v3315, %v3328
        %v3330 = vcombine.low %v3322, %v3329
        %v3332 = vunpack.c.l.s4 1983009808
        %v3333 = vunpack.c.0.s8 %v3332
        %v3334 = vlaneseq
        %v3335 = vshrl.u32 %v3334, 7
        %v3336 = vsub.s32 %v3333, %v3335
        %v3337 = vrot.slane %v3330, %v3336
        %v3338 = vcombine.high %v3322, 0.0
        %v3339 = vcombine.low %v3337, %v3338
        %v3341 = vunpack.c.l.s4 1934713408
        %v3342 = vunpack.c.0.s8 %v3341
        %v3343 = vlaneseq
        %v3344 = vshrl.u32 %v3343, 7
        %v3345 = vsub.s32 %v3342, %v3344
        %v3346 = vrot.slane %v3339, %v3345
        %v3347 = vcombine.high %v3346, 0.0
        %3349 = vrot.lane.b32.xlu0 %v3347, 16
        %v3350 = vpop.permute.xlu0 %3349
        %v3352 = vsel %vm2361, %v3346, %v3350
        %v3353 = vpack.c.bf16 %v3352, %v3352
        %v3354 = vld [vmem:[%s1543] sm:$0xf]
        %v3355 = vld [vmem:[%s1543 + $0x4] sm:$0xf]
        %v3356 = vld [vmem:[%s1543 + $0x8] sm:$0xf]
        %v3357 = vld [vmem:[%s1543 + $0xc] sm:$0xf]
        %v3358 = vld [vmem:[%s1546] sm:$0x1]
        %v3360 = vlaneseq
        %v3361 = vshrl.u32 %v3360, 7
        %v3362 = vsub.s32 0, %v3361
        %v3363 = vrot.slane %v3358, %v3362
        %v3369 = vunpack.c.l.b16 %v3354
        %v3370 = vunpack.c.l.b16 %v3355
        %v3371 = vunpack.c.l.b16 %v3356
        %v3372 = vunpack.c.l.b16 %v3357
        %v3373 = vpack.c.b16 %v3370, %v3369
        %v3374 = vpack.c.b16 %v3372, %v3371
        %v3378 = vsel %vm2151, %v3353, 0
        %3380 = vmatprep.subr.bf16.mxu0 0
        %3381 = vmatpush1.bf16.msra.mxu0 %v3373
        %3382 = vmatprep.subr.bf16.mxu0 0
        %3383 = vmatpush1.bf16.msra.mxu0 %v3374
        %3384 = vmatprep.subr.bf16.mxu0 0
        %3385 = vmatpush1.bf16.msra.mxu0 0
        %3386 = vmatprep.subr.bf16.mxu0 0
        %3387 = vmatpush1.bf16.msra.mxu0 0
        %3388 = vmatprep.subr.bf16.mxu0 0
        %3389 = vmatpush1.bf16.msra.mxu0 0
        %3390 = vmatprep.subr.bf16.mxu0 0
        %3391 = vmatpush1.bf16.msra.mxu0 0
        %3392 = vmatprep.subr.bf16.mxu0 0
        %3393 = vmatpush1.bf16.msra.mxu0 0
        %3394 = vmatprep.subr.bf16.mxu0 0
        %3395 = vmatpush1.bf16.msra.mxu0 0
        %3396 = vmatprep.subr.bf16.mxu0 0
        %3397 = vmatpush1.bf16.msra.mxu0 0
        %3398 = vmatprep.subr.bf16.mxu0 0
        %3399 = vmatpush1.bf16.msra.mxu0 0
        %3400 = vmatprep.subr.bf16.mxu0 0
        %3401 = vmatpush1.bf16.msra.mxu0 0
        %3402 = vmatprep.subr.bf16.mxu0 0
        %3403 = vmatpush1.bf16.msra.mxu0 0
        %3404 = vmatprep.subr.bf16.mxu0 0
        %3405 = vmatpush1.bf16.msra.mxu0 0
        %3406 = vmatprep.subr.bf16.mxu0 0
        %3407 = vmatpush1.bf16.msra.mxu0 0
        %3408 = vmatprep.subr.bf16.mxu0 0
        %3409 = vmatpush1.bf16.msra.mxu0 0
        %3410 = vmatprep.subr.bf16.mxu0 0
        %3411 = vmatpush1.bf16.msra.mxu0 0
        %3412 = vmatprep.mubr.bf16.mxu0 0
        %3413 = vmatmul.mubr.bf16.gmra.mrb[0].mxu0 %v3378
        %v3414 = vpop.f32.mrb[0].mxu0
        %v3415 = vadd.f32 %v3363, %v3414
        %v3416 = vpop.f32.mrb[0].mxu0
        %v3417 = vpop.f32.mrb[0].mxu0
        %v3418 = vpop.f32.mrb[0].mxu0
        %3419 = vdwg.mxu0
        %v3420 = vadd.f32 %v2731, %v3415
        %v3421 = vsel %vm2701, %v3420, 0.0
        %3422 = vadd.xlane.f32.xlu0 %v3421
        %v3423 = vpop.xlane.xlu0 %3422
        %v3424 = vmul.f32 %v3423, %v2705
        %v3425 = vsub.f32 %v3420, %v3424
        %v3426 = vmul.f32 %v3425, %v3425
        %v3427 = vsel %vm2701, %v3426, 0.0
        %3428 = vadd.xlane.f32.xlu0 %v3427
        %v3429 = vpop.xlane.xlu0 %3428
        %v3430 = vmul.f32 %v3429, %v2705
        %v3431 = vadd.f32 %v3430, 1e-05
        %v3432 = vrsqrt.pop %v3431
        %v3433 = vmul.f32 %v3425, %v3432
        %v3434 = vld [vmem:[%s1571] sm:$0x1]
        %v3436 = vlaneseq
        %v3437 = vshrl.u32 %v3436, 7
        %v3438 = vsub.s32 0, %v3437
        %v3439 = vrot.slane %v3434, %v3438
        %v3441 = vmul.f32 %v3433, %v3439
        %v3442 = vld [vmem:[%s1574] sm:$0x1]
        %v3444 = vlaneseq
        %v3445 = vshrl.u32 %v3444, 7
        %v3446 = vsub.s32 0, %v3445
        %v3447 = vrot.slane %v3442, %v3446
        %v3449 = vadd.f32 %v3441, %v3447
        %v3450 = vpack.c.bf16 %v3449, %v3449
        %v3451 = vld [vmem:[%s1551] sm:$0xf]
        %v3452 = vld [vmem:[%s1551 + $0x4] sm:$0xf]
        %v3453 = vld [vmem:[%s1551 + $0x8] sm:$0xf]
        %v3454 = vld [vmem:[%s1551 + $0xc] sm:$0xf]
        %v3455 = vld [vmem:[%s1554] sm:$0x1]
        %v3457 = vlaneseq
        %v3458 = vshrl.u32 %v3457, 7
        %v3459 = vsub.s32 0, %v3458
        %v3460 = vrot.slane %v3455, %v3459
        %v3466 = vunpack.c.l.b16 %v3451
        %v3467 = vunpack.c.l.b16 %v3452
        %v3468 = vunpack.c.l.b16 %v3453
        %v3469 = vunpack.c.l.b16 %v3454
        %v3470 = vpack.c.b16 %v3467, %v3466
        %v3471 = vpack.c.b16 %v3469, %v3468
        %v3475 = vsel %vm2151, %v3450, 0
        %3477 = vmatprep.subr.bf16.mxu0 0
        %3478 = vmatpush1.bf16.msra.mxu0 %v3470
        %3479 = vmatprep.subr.bf16.mxu0 0
        %3480 = vmatpush1.bf16.msra.mxu0 %v3471
        %3481 = vmatprep.subr.bf16.mxu0 0
        %3482 = vmatpush1.bf16.msra.mxu0 0
        %3483 = vmatprep.subr.bf16.mxu0 0
        %3484 = vmatpush1.bf16.msra.mxu0 0
        %3485 = vmatprep.subr.bf16.mxu0 0
        %3486 = vmatpush1.bf16.msra.mxu0 0
        %3487 = vmatprep.subr.bf16.mxu0 0
        %3488 = vmatpush1.bf16.msra.mxu0 0
        %3489 = vmatprep.subr.bf16.mxu0 0
        %3490 = vmatpush1.bf16.msra.mxu0 0
        %3491 = vmatprep.subr.bf16.mxu0 0
        %3492 = vmatpush1.bf16.msra.mxu0 0
        %3493 = vmatprep.subr.bf16.mxu0 0
        %3494 = vmatpush1.bf16.msra.mxu0 0
        %3495 = vmatprep.subr.bf16.mxu0 0
        %3496 = vmatpush1.bf16.msra.mxu0 0
        %3497 = vmatprep.subr.bf16.mxu0 0
        %3498 = vmatpush1.bf16.msra.mxu0 0
        %3499 = vmatprep.subr.bf16.mxu0 0
        %3500 = vmatpush1.bf16.msra.mxu0 0
        %3501 = vmatprep.subr.bf16.mxu0 0
        %3502 = vmatpush1.bf16.msra.mxu0 0
        %3503 = vmatprep.subr.bf16.mxu0 0
        %3504 = vmatpush1.bf16.msra.mxu0 0
        %3505 = vmatprep.subr.bf16.mxu0 0
        %3506 = vmatpush1.bf16.msra.mxu0 0
        %3507 = vmatprep.subr.bf16.mxu0 0
        %3508 = vmatpush1.bf16.msra.mxu0 0
        %3509 = vmatprep.mubr.bf16.mxu0 0
        %3510 = vmatmul.mubr.bf16.gmra.mrb[0].mxu0 %v3475
        %v3511 = vpop.f32.mrb[0].mxu0
        %v3512 = vadd.f32 %v3460, %v3511
        %v3513 = vpop.f32.mrb[0].mxu0
        %v3514 = vpop.f32.mrb[0].mxu0
        %v3515 = vpop.f32.mrb[0].mxu0
        %3516 = vdwg.mxu0
        %v3517 = vmax.f32 %v3512, 0.0
        %v3518 = vpack.c.bf16 %v3517, %v3517
        %v3519 = vld [vmem:[%s1559] sm:$0xf]
        %v3520 = vld [vmem:[%s1559 + $0x4] sm:$0xf]
        %v3521 = vld [vmem:[%s1559 + $0x8] sm:$0xf]
        %v3522 = vld [vmem:[%s1559 + $0xc] sm:$0xf]
        %v3523 = vld [vmem:[%s1559 + $0x10] sm:$0xf]
        %v3524 = vld [vmem:[%s1559 + $0x14] sm:$0xf]
        %v3525 = vld [vmem:[%s1559 + $0x18] sm:$0xf]
        %v3526 = vld [vmem:[%s1559 + $0x1c] sm:$0xf]
        %v3527 = vld [vmem:[%s1562] sm:$0x1]
        %v3529 = vlaneseq
        %v3530 = vshrl.u32 %v3529, 7
        %v3531 = vsub.s32 0, %v3530
        %v3532 = vrot.slane %v3527, %v3531
        %v3542 = vunpack.c.l.b16 %v3519
        %v3543 = vunpack.c.l.b16 %v3520
        %v3544 = vunpack.c.l.b16 %v3521
        %v3545 = vunpack.c.l.b16 %v3522
        %v3546 = vunpack.c.l.b16 %v3523
        %v3547 = vunpack.c.l.b16 %v3524
        %v3548 = vunpack.c.l.b16 %v3525
        %v3549 = vunpack.c.l.b16 %v3526
        %v3550 = vpack.c.b16 %v3543, %v3542
        %v3551 = vpack.c.b16 %v3545, %v3544
        %v3552 = vpack.c.b16 %v3547, %v3546
        %v3553 = vpack.c.b16 %v3549, %v3548
        %vm3558 = vcmask 523264
        %v3560 = vsel %vm3558, %v3518, 0
        %3562 = vmatprep.subr.bf16.mxu0 0
        %3563 = vmatpush1.bf16.msra.mxu0 %v3550
        %3564 = vmatprep.subr.bf16.mxu0 0
        %3565 = vmatpush1.bf16.msra.mxu0 %v3551
        %3566 = vmatprep.subr.bf16.mxu0 0
        %3567 = vmatpush1.bf16.msra.mxu0 %v3552
        %3568 = vmatprep.subr.bf16.mxu0 0
        %3569 = vmatpush1.bf16.msra.mxu0 %v3553
        %3570 = vmatprep.subr.bf16.mxu0 0
        %3571 = vmatpush1.bf16.msra.mxu0 0
        %3572 = vmatprep.subr.bf16.mxu0 0
        %3573 = vmatpush1.bf16.msra.mxu0 0
        %3574 = vmatprep.subr.bf16.mxu0 0
        %3575 = vmatpush1.bf16.msra.mxu0 0
        %3576 = vmatprep.subr.bf16.mxu0 0
        %3577 = vmatpush1.bf16.msra.mxu0 0
        %3578 = vmatprep.subr.bf16.mxu0 0
        %3579 = vmatpush1.bf16.msra.mxu0 0
        %3580 = vmatprep.subr.bf16.mxu0 0
        %3581 = vmatpush1.bf16.msra.mxu0 0
        %3582 = vmatprep.subr.bf16.mxu0 0
        %3583 = vmatpush1.bf16.msra.mxu0 0
        %3584 = vmatprep.subr.bf16.mxu0 0
        %3585 = vmatpush1.bf16.msra.mxu0 0
        %3586 = vmatprep.subr.bf16.mxu0 0
        %3587 = vmatpush1.bf16.msra.mxu0 0
        %3588 = vmatprep.subr.bf16.mxu0 0
        %3589 = vmatpush1.bf16.msra.mxu0 0
        %3590 = vmatprep.subr.bf16.mxu0 0
        %3591 = vmatpush1.bf16.msra.mxu0 0
        %3592 = vmatprep.subr.bf16.mxu0 0
        %3593 = vmatpush1.bf16.msra.mxu0 0
        %3594 = vmatprep.mubr.bf16.mxu0 0
        %3595 = vmatmul.mubr.bf16.gmra.mrb[0].mxu0 %v3560
        %v3596 = vpop.f32.mrb[0].mxu0
        %v3597 = vadd.f32 %v3532, %v3596
        %v3598 = vpop.f32.mrb[0].mxu0
        %v3599 = vpop.f32.mrb[0].mxu0
        %v3600 = vpop.f32.mrb[0].mxu0
        %3601 = vdwg.mxu0
        %v3602 = vadd.f32 %v3449, %v3597
        %v3603 = vsel %vm2701, %v3602, 0.0
        %3604 = vadd.xlane.f32.xlu0 %v3603
        %v3605 = vpop.xlane.xlu0 %3604
        %v3606 = vmul.f32 %v3605, %v2705
        %v3607 = vsub.f32 %v3602, %v3606
        %v3608 = vmul.f32 %v3607, %v3607
        %v3609 = vsel %vm2701, %v3608, 0.0
        %3610 = vadd.xlane.f32.xlu0 %v3609
        %v3611 = vpop.xlane.xlu0 %3610
        %v3612 = vmul.f32 %v3611, %v2705
        %v3613 = vadd.f32 %v3612, 1e-05
        %v3614 = vrsqrt.pop %v3613
        %v3615 = vmul.f32 %v3607, %v3614
        %v3616 = vld [vmem:[%s1577] sm:$0x1]
        %v3618 = vlaneseq
        %v3619 = vshrl.u32 %v3618, 7
        %v3620 = vsub.s32 0, %v3619
        %v3621 = vrot.slane %v3616, %v3620
        %v3623 = vmul.f32 %v3615, %v3621
        %v3624 = vld [vmem:[%s1580] sm:$0x1]
        %v3626 = vlaneseq
        %v3627 = vshrl.u32 %v3626, 7
        %v3628 = vsub.s32 0, %v3627
        %v3629 = vrot.slane %v3624, %v3628
        %v3631 = vadd.f32 %v3623, %v3629
        %3632 = vst.msk [vmem:[#allocation2] sm:$0x7] %vm2701, %v3631
        %p3633 = scmp.eq.s32.totalorder %s98, 1
        // Predicated region
        $region197: #{tpu_custom_call.1} parent=171 // pred_check
          %p3634 = pneg %p3633
        $region198: #{tpu_custom_call.1} parent=171 // pred_check_branch
          %3636 = sbr.rel (%p3634) target = $region200
        $region199: #{tpu_custom_call.1} parent=171 // pred_region
          %3637 = vst.msk [vmem:[%s1584] sm:$0x7] %vm2701, %v3631
        $region200: #{tpu_custom_call.1} parent=171 // pred_fallthru
          _
        %p3638 = scmp.lt.s32.totalorder %s97, 1
        %s3639 = scalar_select %p3638, %s97, 1
        %s3640 = smul.addr %s3639, 4
        %s3641 = scalar_lea.vmem %s77, %s3640
        // Predicated region
        $region201: #{tpu_custom_call.1} parent=171 // pred_check
          %p3642 = pneg %p1036
        $region202: #{tpu_custom_call.1} parent=171 // pred_check_branch
          %3644 = sbr.rel (%p3642) target = $region204
        $region203: #{tpu_custom_call.1} parent=171 // pred_region
          _
        $region204: #{tpu_custom_call.1} parent=171 // pred_fallthru
          _
      $region172: #{tpu_custom_call.1} parent=5 // pred_fallthru
        _
      %p3645 = scmp.le.s32.totalorder 2, %s88
      // Predicated region
      $region205: #{tpu_custom_call.1} parent=5 // pred_check
        %p3646 = pneg %p3645
      $region206: #{tpu_custom_call.1} parent=5 // pred_check_branch
        %3648 = sbr.rel (%p3646) target = $region208
      $region207: #{tpu_custom_call.1} parent=5 // pred_region
        %s3649 = ssub.s32 %s88, 2
        // Predicated region
        $region209: #{tpu_custom_call.1} parent=207 // pred_check
          %p3650 = pneg %p1042
        $region210: #{tpu_custom_call.1} parent=207 // pred_check_branch
          %3652 = sbr.rel (%p3650) target = $region212
        $region211: #{tpu_custom_call.1} parent=207 // pred_region
          %p3653 = scmp.lt.s32.totalorder %s99, 1
          %s3654 = scalar_select %p3653, %s99, 1
          %s3655 = smul.addr %s3654, 4
          %s3656 = scalar_lea.vmem %s77, %s3655
        $region212: #{tpu_custom_call.1} parent=207 // pred_fallthru
          _
      $region208: #{tpu_custom_call.1} parent=5 // pred_fallthru
        _
    $region6: #{tpu_custom_call.1} parent=1 // loop_footer
      %s92 = sadd.s32 1, %s88
    $region7: #{tpu_custom_call.1} parent=1 // loop_footer_branch
      %87 = sbr.rel target = $region3
    $region8: #{tpu_custom_call.1} parent=1 // loop_exit
      _
    %3657 = vsyncpa [#allocation4], 1
    %s3658 = scalar_lea.sflag [#allocation4], 1
    %3659 = vsyncpa %s3658, 1
    %3660 = vsyncpa [#allocation6], 1
    %3661 = vsyncpa [#allocation9], 1

</llo_original>
